<compile_context>
chip_gen: v7x
topology: tpu7x:2x2x1
jax: 0.10.0
libtpu: 0.0.40
codegen_flags: <defaults>
</compile_context>

<pallas_src>
import numpy as np
import jax
import jax.numpy as jnp
from jax.experimental import pallas as pl
from jax.experimental.pallas import tpu as pltpu

KH = KW = 4      # conv kernel size (from weight.shape[2:])
C_OUT = 4        # conv output channels
POOL = 4         # MaxPool2d(4, 4)
BT_MAX = 256     # images per grid step; ~5-6 MB live VMEM -> safe on v5e/v6e/v7x


def _make_net_kernel(H, W, Bt):
    Ho, Wo = H - KH + 1, W - KW + 1       # valid conv, stride 1
    Ph, Pw = Ho // POOL, Wo // POOL       # MaxPool2d floor behavior

    def kernel(w_ref, x_ref, conv_ref, relu_ref, pool_ref):
        # x: (H, W, Bt) -- W on sublanes, batch on lanes (lane-dense).
        x = x_ref[...]

        # ---- conv: (kw, kh) outermost; one shifted slice feeds all 4 channels ----
        accs = [jnp.zeros((Ho, Wo, Bt), jnp.float32) for _ in range(C_OUT)]
        for kw in range(KW):
            xs = x[:, kw:kw + Wo, :]                 # (H, Wo, Bt): one sublane shift per kw
            for kh in range(KH):
                sl = xs[kh:kh + Ho]                  # (Ho, Wo, Bt): cheap major-axis slice
                for c in range(C_OUT):
                    wv = w_ref[c * KH * KW + kh * KW + kw]   # scalar from SMEM
                    accs[c] = accs[c] + wv * sl
        conv = jnp.stack(accs, axis=0)               # (C_OUT, Ho, Wo, Bt)
        conv_ref[...] = conv                         # single lane-dense store

        # ---- ReLU ----
        r = jnp.maximum(conv, 0.0)
        relu_ref[...] = r

        # ---- 4x4 / 4 max pool (floor): row max via major-axis picks, column max
        #      via small sublane-window reductions ----
        row_slabs = []
        for pi in range(Ph):
            m = r[:, POOL * pi, :, :]                # (C_OUT, Wo, Bt)
            for i in range(1, POOL):
                m = jnp.maximum(m, r[:, POOL * pi + i, :, :])
            row_slabs.append(m)
        rowstage = jnp.stack(row_slabs, axis=1)      # (C_OUT, Ph, Wo, Bt)
        for pj in range(Pw):
            colmax = jnp.max(
                rowstage[:, :, POOL * pj:POOL * pj + POOL, :], axis=2)  # (C_OUT, Ph, Bt)
            pool_ref[:, :, pj, :] = colmax

    return kernel, Ho, Wo, Ph, Pw


def net_forward(x, weight):
    """x: (N, 1, H, W) f32; weight: (4, 1, 4, 4) f32 -> (conv_x, activated_x, pooled_x)."""
    N, C, H, W = x.shape
    assert C == 1, "Net.conv expects 1 input channel"

    if N <= BT_MAX:
        Bt, Np = N, N                                # single step, block == full batch
    else:
        Bt = BT_MAX
        Np = ((N + Bt - 1) // Bt) * Bt               # pad batch to a multiple of Bt

    kernel, Ho, Wo, Ph, Pw = _make_net_kernel(H, W, Bt)
    w_flat = weight.reshape(-1).astype(jnp.float32)  # (64,) for SMEM scalar reads

    # Layout plumbing: batch -> last (lane) axis; pad to the block size.
    xt = jnp.transpose(x.astype(jnp.float32)[:, 0], (1, 2, 0))      # (H, W, N)
    if Np != N:
        xt = jnp.pad(xt, ((0, 0), (0, 0), (0, Np - N)))

    conv_t, relu_t, pool_t = pl.pallas_call(
        kernel,
        grid=(Np // Bt,),
        in_specs=[
            pl.BlockSpec(memory_space=pltpu.MemorySpace.SMEM),          # weights (whole array)
            pl.BlockSpec((H, W, Bt), lambda n: (0, 0, n)),              # Bt images per step
        ],
        out_specs=[
            pl.BlockSpec((C_OUT, Ho, Wo, Bt), lambda n: (0, 0, 0, n)),
            pl.BlockSpec((C_OUT, Ho, Wo, Bt), lambda n: (0, 0, 0, n)),
            pl.BlockSpec((C_OUT, Ph, Pw, Bt), lambda n: (0, 0, 0, n)),
        ],
        out_shape=(
            jax.ShapeDtypeStruct((C_OUT, Ho, Wo, Np), jnp.float32),
            jax.ShapeDtypeStruct((C_OUT, Ho, Wo, Np), jnp.float32),
            jax.ShapeDtypeStruct((C_OUT, Ph, Pw, Np), jnp.float32),
        ),
        compiler_params=pltpu.CompilerParams(
            dimension_semantics=("parallel",)),      # batch steps are independent (v7x: 2 TCs)
    )(w_flat, xt)

    # Back to NCHW and drop batch padding.
    conv_o = jnp.transpose(conv_t, (3, 0, 1, 2))[:N]
    relu_o = jnp.transpose(relu_t, (3, 0, 1, 2))[:N]
    pool_o = jnp.transpose(pool_t, (3, 0, 1, 2))[:N]
    return conv_o, relu_o, pool_o


def _reference(x, weight):
    conv_r = jax.lax.conv_general_dilated(
        x, weight, window_strides=(1, 1), padding="VALID",
        dimension_numbers=("NCHW", "OIHW", "NCHW"))
    relu_r = jnp.maximum(conv_r, 0.0)
    pooled_r = jax.lax.reduce_window(
        relu_r, -jnp.inf, jax.lax.max,
        window_dimensions=(1, 1, POOL, POOL),
        window_strides=(1, 1, POOL, POOL), padding="VALID")
    return conv_r, relu_r, pooled_r


if __name__ == "__main__":
    # Deterministic weights, exactly as in the PyTorch module __init__.
    filter_vals = np.array([[-1, -1, 1, 1],
                            [-1, -1, 1, 1],
                            [-1, -1, 1, 1],
                            [-1, -1, 1, 1]], dtype=np.float32)
    filters = np.stack([filter_vals, -filter_vals, filter_vals.T, -(filter_vals.T)])
    weight = jnp.asarray(filters)[:, None, :, :]             # (4, 1, 4, 4) OIHW

    key = jax.random.PRNGKey(0)

    # Small test (matches the module's expected usage): N=2, 1x16x16 images.
    x = jax.random.normal(key, (2, 1, 16, 16), dtype=jnp.float32)
    conv_out, relu_out, pooled_out = jax.block_until_ready(net_forward(x, weight))
    conv_r, relu_r, pooled_r = _reference(x, weight)
    assert conv_out.shape == (2, 4, 13, 13) and pooled_out.shape == (2, 4, 3, 3)
    assert np.allclose(np.asarray(conv_out), np.asarray(conv_r), atol=1e-5)
    assert np.allclose(np.asarray(relu_out), np.asarray(relu_r), atol=1e-5)
    assert np.allclose(np.asarray(pooled_out), np.asarray(pooled_r), atol=1e-5)

    # Larger batch exercising the multi-block (Bt=256) + padding path.
    x2 = jax.random.normal(jax.random.PRNGKey(1), (300, 1, 16, 16), dtype=jnp.float32)
    conv2, relu2, pool2 = jax.block_until_ready(net_forward(x2, weight))
    conv2_r, relu2_r, pool2_r = _reference(x2, weight)
    assert np.allclose(np.asarray(conv2), np.asarray(conv2_r), atol=1e-5)
    assert np.allclose(np.asarray(relu2), np.asarray(relu2_r), atol=1e-5)
    assert np.allclose(np.asarray(pool2), np.asarray(pool2_r), atol=1e-5)

    print("KERNEL_OK")
</pallas_src>

<mosaic_0001>
module attributes {stable_mosaic.version = 11 : i64} {
  func.func @kernel(%arg0: i32, %arg1: memref<64xf32, #tpu.memory_space<smem>>, %arg2: memref<16x16x2xf32, #tpu.memory_space<vmem>>, %arg3: memref<4x13x13x2xf32, #tpu.memory_space<vmem>>, %arg4: memref<4x13x13x2xf32, #tpu.memory_space<vmem>>, %arg5: memref<4x3x3x2xf32, #tpu.memory_space<vmem>>) attributes {dimension_semantics = [#tpu.dimension_semantics<parallel>], iteration_bounds = array<i64: 1>, scalar_prefetch = 0 : i64, scratch_operands = 0 : i64, tpu.core_type = #tpu.core_type<tc>, window_params = [{transform_indices = @transform_0, window_bounds = array<i64: 64>}, {transform_indices = @transform_1, window_bounds = array<i64: 16, 16, 2>}, {transform_indices = @transform_2, window_bounds = array<i64: 4, 13, 13, 2>}, {transform_indices = @transform_3, window_bounds = array<i64: 4, 13, 13, 2>}, {transform_indices = @transform_4, window_bounds = array<i64: 4, 3, 3, 2>}]} {
    %c0 = arith.constant 0 : index
    %c0_0 = arith.constant 0 : index
    %c0_1 = arith.constant 0 : index
    %0 = vector.load %arg2[%c0, %c0_0, %c0_1] : memref<16x16x2xf32, #tpu.memory_space<vmem>>, vector<16x16x2xf32>
    %cst = arith.constant 0.000000e+00 : f32
    %1 = vector.broadcast %cst : f32 to vector<13x13x2xf32>
    %cst_2 = arith.constant 0.000000e+00 : f32
    %2 = vector.broadcast %cst_2 : f32 to vector<13x13x2xf32>
    %cst_3 = arith.constant 0.000000e+00 : f32
    %3 = vector.broadcast %cst_3 : f32 to vector<13x13x2xf32>
    %cst_4 = arith.constant 0.000000e+00 : f32
    %4 = vector.broadcast %cst_4 : f32 to vector<13x13x2xf32>
    %5 = vector.extract_strided_slice %0 {offsets = [0, 0, 0], sizes = [16, 13, 2], strides = [1, 1, 1]} : vector<16x16x2xf32> to vector<16x13x2xf32>
    %6 = vector.extract_strided_slice %5 {offsets = [0, 0, 0], sizes = [13, 13, 2], strides = [1, 1, 1]} : vector<16x13x2xf32> to vector<13x13x2xf32>
    %c0_5 = arith.constant 0 : index
    %7 = memref.load %arg1[%c0_5] : memref<64xf32, #tpu.memory_space<smem>>
    %8 = vector.broadcast %7 : f32 to vector<13x13x2xf32>
    %9 = arith.mulf %8, %6 : vector<13x13x2xf32>
    %10 = arith.addf %1, %9 : vector<13x13x2xf32>
    %c16 = arith.constant 16 : index
    %11 = memref.load %arg1[%c16] : memref<64xf32, #tpu.memory_space<smem>>
    %12 = vector.broadcast %11 : f32 to vector<13x13x2xf32>
    %13 = arith.mulf %12, %6 : vector<13x13x2xf32>
    %14 = arith.addf %2, %13 : vector<13x13x2xf32>
    %c32 = arith.constant 32 : index
    %15 = memref.load %arg1[%c32] : memref<64xf32, #tpu.memory_space<smem>>
    %16 = vector.broadcast %15 : f32 to vector<13x13x2xf32>
    %17 = arith.mulf %16, %6 : vector<13x13x2xf32>
    %18 = arith.addf %3, %17 : vector<13x13x2xf32>
    %c48 = arith.constant 48 : index
    %19 = memref.load %arg1[%c48] : memref<64xf32, #tpu.memory_space<smem>>
    %20 = vector.broadcast %19 : f32 to vector<13x13x2xf32>
    %21 = arith.mulf %20, %6 : vector<13x13x2xf32>
    %22 = arith.addf %4, %21 : vector<13x13x2xf32>
    %23 = vector.extract_strided_slice %5 {offsets = [1, 0, 0], sizes = [13, 13, 2], strides = [1, 1, 1]} : vector<16x13x2xf32> to vector<13x13x2xf32>
    %c4 = arith.constant 4 : index
    %24 = memref.load %arg1[%c4] : memref<64xf32, #tpu.memory_space<smem>>
    %25 = vector.broadcast %24 : f32 to vector<13x13x2xf32>
    %26 = arith.mulf %25, %23 : vector<13x13x2xf32>
    %27 = arith.addf %10, %26 : vector<13x13x2xf32>
    %c20 = arith.constant 20 : index
    %28 = memref.load %arg1[%c20] : memref<64xf32, #tpu.memory_space<smem>>
    %29 = vector.broadcast %28 : f32 to vector<13x13x2xf32>
    %30 = arith.mulf %29, %23 : vector<13x13x2xf32>
    %31 = arith.addf %14, %30 : vector<13x13x2xf32>
    %c36 = arith.constant 36 : index
    %32 = memref.load %arg1[%c36] : memref<64xf32, #tpu.memory_space<smem>>
    %33 = vector.broadcast %32 : f32 to vector<13x13x2xf32>
    %34 = arith.mulf %33, %23 : vector<13x13x2xf32>
    %35 = arith.addf %18, %34 : vector<13x13x2xf32>
    %c52 = arith.constant 52 : index
    %36 = memref.load %arg1[%c52] : memref<64xf32, #tpu.memory_space<smem>>
    %37 = vector.broadcast %36 : f32 to vector<13x13x2xf32>
    %38 = arith.mulf %37, %23 : vector<13x13x2xf32>
    %39 = arith.addf %22, %38 : vector<13x13x2xf32>
    %40 = vector.extract_strided_slice %5 {offsets = [2, 0, 0], sizes = [13, 13, 2], strides = [1, 1, 1]} : vector<16x13x2xf32> to vector<13x13x2xf32>
    %c8 = arith.constant 8 : index
    %41 = memref.load %arg1[%c8] : memref<64xf32, #tpu.memory_space<smem>>
    %42 = vector.broadcast %41 : f32 to vector<13x13x2xf32>
    %43 = arith.mulf %42, %40 : vector<13x13x2xf32>
    %44 = arith.addf %27, %43 : vector<13x13x2xf32>
    %c24 = arith.constant 24 : index
    %45 = memref.load %arg1[%c24] : memref<64xf32, #tpu.memory_space<smem>>
    %46 = vector.broadcast %45 : f32 to vector<13x13x2xf32>
    %47 = arith.mulf %46, %40 : vector<13x13x2xf32>
    %48 = arith.addf %31, %47 : vector<13x13x2xf32>
    %c40 = arith.constant 40 : index
    %49 = memref.load %arg1[%c40] : memref<64xf32, #tpu.memory_space<smem>>
    %50 = vector.broadcast %49 : f32 to vector<13x13x2xf32>
    %51 = arith.mulf %50, %40 : vector<13x13x2xf32>
    %52 = arith.addf %35, %51 : vector<13x13x2xf32>
    %c56 = arith.constant 56 : index
    %53 = memref.load %arg1[%c56] : memref<64xf32, #tpu.memory_space<smem>>
    %54 = vector.broadcast %53 : f32 to vector<13x13x2xf32>
    %55 = arith.mulf %54, %40 : vector<13x13x2xf32>
    %56 = arith.addf %39, %55 : vector<13x13x2xf32>
    %57 = vector.extract_strided_slice %5 {offsets = [3, 0, 0], sizes = [13, 13, 2], strides = [1, 1, 1]} : vector<16x13x2xf32> to vector<13x13x2xf32>
    %c12 = arith.constant 12 : index
    %58 = memref.load %arg1[%c12] : memref<64xf32, #tpu.memory_space<smem>>
    %59 = vector.broadcast %58 : f32 to vector<13x13x2xf32>
    %60 = arith.mulf %59, %57 : vector<13x13x2xf32>
    %61 = arith.addf %44, %60 : vector<13x13x2xf32>
    %c28 = arith.constant 28 : index
    %62 = memref.load %arg1[%c28] : memref<64xf32, #tpu.memory_space<smem>>
    %63 = vector.broadcast %62 : f32 to vector<13x13x2xf32>
    %64 = arith.mulf %63, %57 : vector<13x13x2xf32>
    %65 = arith.addf %48, %64 : vector<13x13x2xf32>
    %c44 = arith.constant 44 : index
    %66 = memref.load %arg1[%c44] : memref<64xf32, #tpu.memory_space<smem>>
    %67 = vector.broadcast %66 : f32 to vector<13x13x2xf32>
    %68 = arith.mulf %67, %57 : vector<13x13x2xf32>
    %69 = arith.addf %52, %68 : vector<13x13x2xf32>
    %c60 = arith.constant 60 : index
    %70 = memref.load %arg1[%c60] : memref<64xf32, #tpu.memory_space<smem>>
    %71 = vector.broadcast %70 : f32 to vector<13x13x2xf32>
    %72 = arith.mulf %71, %57 : vector<13x13x2xf32>
    %73 = arith.addf %56, %72 : vector<13x13x2xf32>
    %74 = vector.extract_strided_slice %0 {offsets = [0, 1, 0], sizes = [16, 13, 2], strides = [1, 1, 1]} : vector<16x16x2xf32> to vector<16x13x2xf32>
    %75 = vector.extract_strided_slice %74 {offsets = [0, 0, 0], sizes = [13, 13, 2], strides = [1, 1, 1]} : vector<16x13x2xf32> to vector<13x13x2xf32>
    %c1 = arith.constant 1 : index
    %76 = memref.load %arg1[%c1] : memref<64xf32, #tpu.memory_space<smem>>
    %77 = vector.broadcast %76 : f32 to vector<13x13x2xf32>
    %78 = arith.mulf %77, %75 : vector<13x13x2xf32>
    %79 = arith.addf %61, %78 : vector<13x13x2xf32>
    %c17 = arith.constant 17 : index
    %80 = memref.load %arg1[%c17] : memref<64xf32, #tpu.memory_space<smem>>
    %81 = vector.broadcast %80 : f32 to vector<13x13x2xf32>
    %82 = arith.mulf %81, %75 : vector<13x13x2xf32>
    %83 = arith.addf %65, %82 : vector<13x13x2xf32>
    %c33 = arith.constant 33 : index
    %84 = memref.load %arg1[%c33] : memref<64xf32, #tpu.memory_space<smem>>
    %85 = vector.broadcast %84 : f32 to vector<13x13x2xf32>
    %86 = arith.mulf %85, %75 : vector<13x13x2xf32>
    %87 = arith.addf %69, %86 : vector<13x13x2xf32>
    %c49 = arith.constant 49 : index
    %88 = memref.load %arg1[%c49] : memref<64xf32, #tpu.memory_space<smem>>
    %89 = vector.broadcast %88 : f32 to vector<13x13x2xf32>
    %90 = arith.mulf %89, %75 : vector<13x13x2xf32>
    %91 = arith.addf %73, %90 : vector<13x13x2xf32>
    %92 = vector.extract_strided_slice %74 {offsets = [1, 0, 0], sizes = [13, 13, 2], strides = [1, 1, 1]} : vector<16x13x2xf32> to vector<13x13x2xf32>
    %c5 = arith.constant 5 : index
    %93 = memref.load %arg1[%c5] : memref<64xf32, #tpu.memory_space<smem>>
    %94 = vector.broadcast %93 : f32 to vector<13x13x2xf32>
    %95 = arith.mulf %94, %92 : vector<13x13x2xf32>
    %96 = arith.addf %79, %95 : vector<13x13x2xf32>
    %c21 = arith.constant 21 : index
    %97 = memref.load %arg1[%c21] : memref<64xf32, #tpu.memory_space<smem>>
    %98 = vector.broadcast %97 : f32 to vector<13x13x2xf32>
    %99 = arith.mulf %98, %92 : vector<13x13x2xf32>
    %100 = arith.addf %83, %99 : vector<13x13x2xf32>
    %c37 = arith.constant 37 : index
    %101 = memref.load %arg1[%c37] : memref<64xf32, #tpu.memory_space<smem>>
    %102 = vector.broadcast %101 : f32 to vector<13x13x2xf32>
    %103 = arith.mulf %102, %92 : vector<13x13x2xf32>
    %104 = arith.addf %87, %103 : vector<13x13x2xf32>
    %c53 = arith.constant 53 : index
    %105 = memref.load %arg1[%c53] : memref<64xf32, #tpu.memory_space<smem>>
    %106 = vector.broadcast %105 : f32 to vector<13x13x2xf32>
    %107 = arith.mulf %106, %92 : vector<13x13x2xf32>
    %108 = arith.addf %91, %107 : vector<13x13x2xf32>
    %109 = vector.extract_strided_slice %74 {offsets = [2, 0, 0], sizes = [13, 13, 2], strides = [1, 1, 1]} : vector<16x13x2xf32> to vector<13x13x2xf32>
    %c9 = arith.constant 9 : index
    %110 = memref.load %arg1[%c9] : memref<64xf32, #tpu.memory_space<smem>>
    %111 = vector.broadcast %110 : f32 to vector<13x13x2xf32>
    %112 = arith.mulf %111, %109 : vector<13x13x2xf32>
    %113 = arith.addf %96, %112 : vector<13x13x2xf32>
    %c25 = arith.constant 25 : index
    %114 = memref.load %arg1[%c25] : memref<64xf32, #tpu.memory_space<smem>>
    %115 = vector.broadcast %114 : f32 to vector<13x13x2xf32>
    %116 = arith.mulf %115, %109 : vector<13x13x2xf32>
    %117 = arith.addf %100, %116 : vector<13x13x2xf32>
    %c41 = arith.constant 41 : index
    %118 = memref.load %arg1[%c41] : memref<64xf32, #tpu.memory_space<smem>>
    %119 = vector.broadcast %118 : f32 to vector<13x13x2xf32>
    %120 = arith.mulf %119, %109 : vector<13x13x2xf32>
    %121 = arith.addf %104, %120 : vector<13x13x2xf32>
    %c57 = arith.constant 57 : index
    %122 = memref.load %arg1[%c57] : memref<64xf32, #tpu.memory_space<smem>>
    %123 = vector.broadcast %122 : f32 to vector<13x13x2xf32>
    %124 = arith.mulf %123, %109 : vector<13x13x2xf32>
    %125 = arith.addf %108, %124 : vector<13x13x2xf32>
    %126 = vector.extract_strided_slice %74 {offsets = [3, 0, 0], sizes = [13, 13, 2], strides = [1, 1, 1]} : vector<16x13x2xf32> to vector<13x13x2xf32>
    %c13 = arith.constant 13 : index
    %127 = memref.load %arg1[%c13] : memref<64xf32, #tpu.memory_space<smem>>
    %128 = vector.broadcast %127 : f32 to vector<13x13x2xf32>
    %129 = arith.mulf %128, %126 : vector<13x13x2xf32>
    %130 = arith.addf %113, %129 : vector<13x13x2xf32>
    %c29 = arith.constant 29 : index
    %131 = memref.load %arg1[%c29] : memref<64xf32, #tpu.memory_space<smem>>
    %132 = vector.broadcast %131 : f32 to vector<13x13x2xf32>
    %133 = arith.mulf %132, %126 : vector<13x13x2xf32>
    %134 = arith.addf %117, %133 : vector<13x13x2xf32>
    %c45 = arith.constant 45 : index
    %135 = memref.load %arg1[%c45] : memref<64xf32, #tpu.memory_space<smem>>
    %136 = vector.broadcast %135 : f32 to vector<13x13x2xf32>
    %137 = arith.mulf %136, %126 : vector<13x13x2xf32>
    %138 = arith.addf %121, %137 : vector<13x13x2xf32>
    %c61 = arith.constant 61 : index
    %139 = memref.load %arg1[%c61] : memref<64xf32, #tpu.memory_space<smem>>
    %140 = vector.broadcast %139 : f32 to vector<13x13x2xf32>
    %141 = arith.mulf %140, %126 : vector<13x13x2xf32>
    %142 = arith.addf %125, %141 : vector<13x13x2xf32>
    %143 = vector.extract_strided_slice %0 {offsets = [0, 2, 0], sizes = [16, 13, 2], strides = [1, 1, 1]} : vector<16x16x2xf32> to vector<16x13x2xf32>
    %144 = vector.extract_strided_slice %143 {offsets = [0, 0, 0], sizes = [13, 13, 2], strides = [1, 1, 1]} : vector<16x13x2xf32> to vector<13x13x2xf32>
    %c2 = arith.constant 2 : index
    %145 = memref.load %arg1[%c2] : memref<64xf32, #tpu.memory_space<smem>>
    %146 = vector.broadcast %145 : f32 to vector<13x13x2xf32>
    %147 = arith.mulf %146, %144 : vector<13x13x2xf32>
    %148 = arith.addf %130, %147 : vector<13x13x2xf32>
    %c18 = arith.constant 18 : index
    %149 = memref.load %arg1[%c18] : memref<64xf32, #tpu.memory_space<smem>>
    %150 = vector.broadcast %149 : f32 to vector<13x13x2xf32>
    %151 = arith.mulf %150, %144 : vector<13x13x2xf32>
    %152 = arith.addf %134, %151 : vector<13x13x2xf32>
    %c34 = arith.constant 34 : index
    %153 = memref.load %arg1[%c34] : memref<64xf32, #tpu.memory_space<smem>>
    %154 = vector.broadcast %153 : f32 to vector<13x13x2xf32>
    %155 = arith.mulf %154, %144 : vector<13x13x2xf32>
    %156 = arith.addf %138, %155 : vector<13x13x2xf32>
    %c50 = arith.constant 50 : index
    %157 = memref.load %arg1[%c50] : memref<64xf32, #tpu.memory_space<smem>>
    %158 = vector.broadcast %157 : f32 to vector<13x13x2xf32>
    %159 = arith.mulf %158, %144 : vector<13x13x2xf32>
    %160 = arith.addf %142, %159 : vector<13x13x2xf32>
    %161 = vector.extract_strided_slice %143 {offsets = [1, 0, 0], sizes = [13, 13, 2], strides = [1, 1, 1]} : vector<16x13x2xf32> to vector<13x13x2xf32>
    %c6 = arith.constant 6 : index
    %162 = memref.load %arg1[%c6] : memref<64xf32, #tpu.memory_space<smem>>
    %163 = vector.broadcast %162 : f32 to vector<13x13x2xf32>
    %164 = arith.mulf %163, %161 : vector<13x13x2xf32>
    %165 = arith.addf %148, %164 : vector<13x13x2xf32>
    %c22 = arith.constant 22 : index
    %166 = memref.load %arg1[%c22] : memref<64xf32, #tpu.memory_space<smem>>
    %167 = vector.broadcast %166 : f32 to vector<13x13x2xf32>
    %168 = arith.mulf %167, %161 : vector<13x13x2xf32>
    %169 = arith.addf %152, %168 : vector<13x13x2xf32>
    %c38 = arith.constant 38 : index
    %170 = memref.load %arg1[%c38] : memref<64xf32, #tpu.memory_space<smem>>
    %171 = vector.broadcast %170 : f32 to vector<13x13x2xf32>
    %172 = arith.mulf %171, %161 : vector<13x13x2xf32>
    %173 = arith.addf %156, %172 : vector<13x13x2xf32>
    %c54 = arith.constant 54 : index
    %174 = memref.load %arg1[%c54] : memref<64xf32, #tpu.memory_space<smem>>
    %175 = vector.broadcast %174 : f32 to vector<13x13x2xf32>
    %176 = arith.mulf %175, %161 : vector<13x13x2xf32>
    %177 = arith.addf %160, %176 : vector<13x13x2xf32>
    %178 = vector.extract_strided_slice %143 {offsets = [2, 0, 0], sizes = [13, 13, 2], strides = [1, 1, 1]} : vector<16x13x2xf32> to vector<13x13x2xf32>
    %c10 = arith.constant 10 : index
    %179 = memref.load %arg1[%c10] : memref<64xf32, #tpu.memory_space<smem>>
    %180 = vector.broadcast %179 : f32 to vector<13x13x2xf32>
    %181 = arith.mulf %180, %178 : vector<13x13x2xf32>
    %182 = arith.addf %165, %181 : vector<13x13x2xf32>
    %c26 = arith.constant 26 : index
    %183 = memref.load %arg1[%c26] : memref<64xf32, #tpu.memory_space<smem>>
    %184 = vector.broadcast %183 : f32 to vector<13x13x2xf32>
    %185 = arith.mulf %184, %178 : vector<13x13x2xf32>
    %186 = arith.addf %169, %185 : vector<13x13x2xf32>
    %c42 = arith.constant 42 : index
    %187 = memref.load %arg1[%c42] : memref<64xf32, #tpu.memory_space<smem>>
    %188 = vector.broadcast %187 : f32 to vector<13x13x2xf32>
    %189 = arith.mulf %188, %178 : vector<13x13x2xf32>
    %190 = arith.addf %173, %189 : vector<13x13x2xf32>
    %c58 = arith.constant 58 : index
    %191 = memref.load %arg1[%c58] : memref<64xf32, #tpu.memory_space<smem>>
    %192 = vector.broadcast %191 : f32 to vector<13x13x2xf32>
    %193 = arith.mulf %192, %178 : vector<13x13x2xf32>
    %194 = arith.addf %177, %193 : vector<13x13x2xf32>
    %195 = vector.extract_strided_slice %143 {offsets = [3, 0, 0], sizes = [13, 13, 2], strides = [1, 1, 1]} : vector<16x13x2xf32> to vector<13x13x2xf32>
    %c14 = arith.constant 14 : index
    %196 = memref.load %arg1[%c14] : memref<64xf32, #tpu.memory_space<smem>>
    %197 = vector.broadcast %196 : f32 to vector<13x13x2xf32>
    %198 = arith.mulf %197, %195 : vector<13x13x2xf32>
    %199 = arith.addf %182, %198 : vector<13x13x2xf32>
    %c30 = arith.constant 30 : index
    %200 = memref.load %arg1[%c30] : memref<64xf32, #tpu.memory_space<smem>>
    %201 = vector.broadcast %200 : f32 to vector<13x13x2xf32>
    %202 = arith.mulf %201, %195 : vector<13x13x2xf32>
    %203 = arith.addf %186, %202 : vector<13x13x2xf32>
    %c46 = arith.constant 46 : index
    %204 = memref.load %arg1[%c46] : memref<64xf32, #tpu.memory_space<smem>>
    %205 = vector.broadcast %204 : f32 to vector<13x13x2xf32>
    %206 = arith.mulf %205, %195 : vector<13x13x2xf32>
    %207 = arith.addf %190, %206 : vector<13x13x2xf32>
    %c62 = arith.constant 62 : index
    %208 = memref.load %arg1[%c62] : memref<64xf32, #tpu.memory_space<smem>>
    %209 = vector.broadcast %208 : f32 to vector<13x13x2xf32>
    %210 = arith.mulf %209, %195 : vector<13x13x2xf32>
    %211 = arith.addf %194, %210 : vector<13x13x2xf32>
    %212 = vector.extract_strided_slice %0 {offsets = [0, 3, 0], sizes = [16, 13, 2], strides = [1, 1, 1]} : vector<16x16x2xf32> to vector<16x13x2xf32>
    %213 = vector.extract_strided_slice %212 {offsets = [0, 0, 0], sizes = [13, 13, 2], strides = [1, 1, 1]} : vector<16x13x2xf32> to vector<13x13x2xf32>
    %c3 = arith.constant 3 : index
    %214 = memref.load %arg1[%c3] : memref<64xf32, #tpu.memory_space<smem>>
    %215 = vector.broadcast %214 : f32 to vector<13x13x2xf32>
    %216 = arith.mulf %215, %213 : vector<13x13x2xf32>
    %217 = arith.addf %199, %216 : vector<13x13x2xf32>
    %c19 = arith.constant 19 : index
    %218 = memref.load %arg1[%c19] : memref<64xf32, #tpu.memory_space<smem>>
    %219 = vector.broadcast %218 : f32 to vector<13x13x2xf32>
    %220 = arith.mulf %219, %213 : vector<13x13x2xf32>
    %221 = arith.addf %203, %220 : vector<13x13x2xf32>
    %c35 = arith.constant 35 : index
    %222 = memref.load %arg1[%c35] : memref<64xf32, #tpu.memory_space<smem>>
    %223 = vector.broadcast %222 : f32 to vector<13x13x2xf32>
    %224 = arith.mulf %223, %213 : vector<13x13x2xf32>
    %225 = arith.addf %207, %224 : vector<13x13x2xf32>
    %c51 = arith.constant 51 : index
    %226 = memref.load %arg1[%c51] : memref<64xf32, #tpu.memory_space<smem>>
    %227 = vector.broadcast %226 : f32 to vector<13x13x2xf32>
    %228 = arith.mulf %227, %213 : vector<13x13x2xf32>
    %229 = arith.addf %211, %228 : vector<13x13x2xf32>
    %230 = vector.extract_strided_slice %212 {offsets = [1, 0, 0], sizes = [13, 13, 2], strides = [1, 1, 1]} : vector<16x13x2xf32> to vector<13x13x2xf32>
    %c7 = arith.constant 7 : index
    %231 = memref.load %arg1[%c7] : memref<64xf32, #tpu.memory_space<smem>>
    %232 = vector.broadcast %231 : f32 to vector<13x13x2xf32>
    %233 = arith.mulf %232, %230 : vector<13x13x2xf32>
    %234 = arith.addf %217, %233 : vector<13x13x2xf32>
    %c23 = arith.constant 23 : index
    %235 = memref.load %arg1[%c23] : memref<64xf32, #tpu.memory_space<smem>>
    %236 = vector.broadcast %235 : f32 to vector<13x13x2xf32>
    %237 = arith.mulf %236, %230 : vector<13x13x2xf32>
    %238 = arith.addf %221, %237 : vector<13x13x2xf32>
    %c39 = arith.constant 39 : index
    %239 = memref.load %arg1[%c39] : memref<64xf32, #tpu.memory_space<smem>>
    %240 = vector.broadcast %239 : f32 to vector<13x13x2xf32>
    %241 = arith.mulf %240, %230 : vector<13x13x2xf32>
    %242 = arith.addf %225, %241 : vector<13x13x2xf32>
    %c55 = arith.constant 55 : index
    %243 = memref.load %arg1[%c55] : memref<64xf32, #tpu.memory_space<smem>>
    %244 = vector.broadcast %243 : f32 to vector<13x13x2xf32>
    %245 = arith.mulf %244, %230 : vector<13x13x2xf32>
    %246 = arith.addf %229, %245 : vector<13x13x2xf32>
    %247 = vector.extract_strided_slice %212 {offsets = [2, 0, 0], sizes = [13, 13, 2], strides = [1, 1, 1]} : vector<16x13x2xf32> to vector<13x13x2xf32>
    %c11 = arith.constant 11 : index
    %248 = memref.load %arg1[%c11] : memref<64xf32, #tpu.memory_space<smem>>
    %249 = vector.broadcast %248 : f32 to vector<13x13x2xf32>
    %250 = arith.mulf %249, %247 : vector<13x13x2xf32>
    %251 = arith.addf %234, %250 : vector<13x13x2xf32>
    %c27 = arith.constant 27 : index
    %252 = memref.load %arg1[%c27] : memref<64xf32, #tpu.memory_space<smem>>
    %253 = vector.broadcast %252 : f32 to vector<13x13x2xf32>
    %254 = arith.mulf %253, %247 : vector<13x13x2xf32>
    %255 = arith.addf %238, %254 : vector<13x13x2xf32>
    %c43 = arith.constant 43 : index
    %256 = memref.load %arg1[%c43] : memref<64xf32, #tpu.memory_space<smem>>
    %257 = vector.broadcast %256 : f32 to vector<13x13x2xf32>
    %258 = arith.mulf %257, %247 : vector<13x13x2xf32>
    %259 = arith.addf %242, %258 : vector<13x13x2xf32>
    %c59 = arith.constant 59 : index
    %260 = memref.load %arg1[%c59] : memref<64xf32, #tpu.memory_space<smem>>
    %261 = vector.broadcast %260 : f32 to vector<13x13x2xf32>
    %262 = arith.mulf %261, %247 : vector<13x13x2xf32>
    %263 = arith.addf %246, %262 : vector<13x13x2xf32>
    %264 = vector.extract_strided_slice %212 {offsets = [3, 0, 0], sizes = [13, 13, 2], strides = [1, 1, 1]} : vector<16x13x2xf32> to vector<13x13x2xf32>
    %c15 = arith.constant 15 : index
    %265 = memref.load %arg1[%c15] : memref<64xf32, #tpu.memory_space<smem>>
    %266 = vector.broadcast %265 : f32 to vector<13x13x2xf32>
    %267 = arith.mulf %266, %264 : vector<13x13x2xf32>
    %268 = arith.addf %251, %267 : vector<13x13x2xf32>
    %c31 = arith.constant 31 : index
    %269 = memref.load %arg1[%c31] : memref<64xf32, #tpu.memory_space<smem>>
    %270 = vector.broadcast %269 : f32 to vector<13x13x2xf32>
    %271 = arith.mulf %270, %264 : vector<13x13x2xf32>
    %272 = arith.addf %255, %271 : vector<13x13x2xf32>
    %c47 = arith.constant 47 : index
    %273 = memref.load %arg1[%c47] : memref<64xf32, #tpu.memory_space<smem>>
    %274 = vector.broadcast %273 : f32 to vector<13x13x2xf32>
    %275 = arith.mulf %274, %264 : vector<13x13x2xf32>
    %276 = arith.addf %259, %275 : vector<13x13x2xf32>
    %c63 = arith.constant 63 : index
    %277 = memref.load %arg1[%c63] : memref<64xf32, #tpu.memory_space<smem>>
    %278 = vector.broadcast %277 : f32 to vector<13x13x2xf32>
    %279 = arith.mulf %278, %264 : vector<13x13x2xf32>
    %280 = arith.addf %263, %279 : vector<13x13x2xf32>
    %281 = vector.shape_cast %268 : vector<13x13x2xf32> to vector<1x13x13x2xf32>
    %282 = vector.shape_cast %272 : vector<13x13x2xf32> to vector<1x13x13x2xf32>
    %283 = vector.shape_cast %276 : vector<13x13x2xf32> to vector<1x13x13x2xf32>
    %284 = vector.shape_cast %280 : vector<13x13x2xf32> to vector<1x13x13x2xf32>
    %285 = tpu.concatenate %281, %282, %283, %284 in 0 : vector<1x13x13x2xf32>, vector<1x13x13x2xf32>, vector<1x13x13x2xf32>, vector<1x13x13x2xf32> -> vector<4x13x13x2xf32>
    %c0_6 = arith.constant 0 : index
    %c0_7 = arith.constant 0 : index
    %c0_8 = arith.constant 0 : index
    %c0_9 = arith.constant 0 : index
    %286 = vector.load %arg3[%c0_6, %c0_7, %c0_8, %c0_9] : memref<4x13x13x2xf32, #tpu.memory_space<vmem>>, vector<4x13x13x2xf32>
    tpu.vector_store %arg3[%c0_6, %c0_7, %c0_8, %c0_9], %285 {strides = array<i32>} : memref<4x13x13x2xf32, #tpu.memory_space<vmem>>, vector<4x13x13x2xf32>,
    %cst_10 = arith.constant 0.000000e+00 : f32
    %287 = vector.broadcast %cst_10 : f32 to vector<4x13x13x2xf32>
    %288 = arith.maximumf %285, %287 : vector<4x13x13x2xf32>
    %c0_11 = arith.constant 0 : index
    %c0_12 = arith.constant 0 : index
    %c0_13 = arith.constant 0 : index
    %c0_14 = arith.constant 0 : index
    %289 = vector.load %arg4[%c0_11, %c0_12, %c0_13, %c0_14] : memref<4x13x13x2xf32, #tpu.memory_space<vmem>>, vector<4x13x13x2xf32>
    tpu.vector_store %arg4[%c0_11, %c0_12, %c0_13, %c0_14], %288 {strides = array<i32>} : memref<4x13x13x2xf32, #tpu.memory_space<vmem>>, vector<4x13x13x2xf32>,
    %290 = vector.extract_strided_slice %288 {offsets = [0, 0, 0, 0], sizes = [4, 1, 13, 2], strides = [1, 1, 1, 1]} : vector<4x13x13x2xf32> to vector<4x1x13x2xf32>
    %291 = vector.shape_cast %290 : vector<4x1x13x2xf32> to vector<4x13x2xf32>
    %292 = vector.extract_strided_slice %288 {offsets = [0, 1, 0, 0], sizes = [4, 1, 13, 2], strides = [1, 1, 1, 1]} : vector<4x13x13x2xf32> to vector<4x1x13x2xf32>
    %293 = vector.shape_cast %292 : vector<4x1x13x2xf32> to vector<4x13x2xf32>
    %294 = arith.maximumf %291, %293 : vector<4x13x2xf32>
    %295 = vector.extract_strided_slice %288 {offsets = [0, 2, 0, 0], sizes = [4, 1, 13, 2], strides = [1, 1, 1, 1]} : vector<4x13x13x2xf32> to vector<4x1x13x2xf32>
    %296 = vector.shape_cast %295 : vector<4x1x13x2xf32> to vector<4x13x2xf32>
    %297 = arith.maximumf %294, %296 : vector<4x13x2xf32>
    %298 = vector.extract_strided_slice %288 {offsets = [0, 3, 0, 0], sizes = [4, 1, 13, 2], strides = [1, 1, 1, 1]} : vector<4x13x13x2xf32> to vector<4x1x13x2xf32>
    %299 = vector.shape_cast %298 : vector<4x1x13x2xf32> to vector<4x13x2xf32>
    %300 = arith.maximumf %297, %299 : vector<4x13x2xf32>
    %301 = vector.extract_strided_slice %288 {offsets = [0, 4, 0, 0], sizes = [4, 1, 13, 2], strides = [1, 1, 1, 1]} : vector<4x13x13x2xf32> to vector<4x1x13x2xf32>
    %302 = vector.shape_cast %301 : vector<4x1x13x2xf32> to vector<4x13x2xf32>
    %303 = vector.extract_strided_slice %288 {offsets = [0, 5, 0, 0], sizes = [4, 1, 13, 2], strides = [1, 1, 1, 1]} : vector<4x13x13x2xf32> to vector<4x1x13x2xf32>
    %304 = vector.shape_cast %303 : vector<4x1x13x2xf32> to vector<4x13x2xf32>
    %305 = arith.maximumf %302, %304 : vector<4x13x2xf32>
    %306 = vector.extract_strided_slice %288 {offsets = [0, 6, 0, 0], sizes = [4, 1, 13, 2], strides = [1, 1, 1, 1]} : vector<4x13x13x2xf32> to vector<4x1x13x2xf32>
    %307 = vector.shape_cast %306 : vector<4x1x13x2xf32> to vector<4x13x2xf32>
    %308 = arith.maximumf %305, %307 : vector<4x13x2xf32>
    %309 = vector.extract_strided_slice %288 {offsets = [0, 7, 0, 0], sizes = [4, 1, 13, 2], strides = [1, 1, 1, 1]} : vector<4x13x13x2xf32> to vector<4x1x13x2xf32>
    %310 = vector.shape_cast %309 : vector<4x1x13x2xf32> to vector<4x13x2xf32>
    %311 = arith.maximumf %308, %310 : vector<4x13x2xf32>
    %312 = vector.extract_strided_slice %288 {offsets = [0, 8, 0, 0], sizes = [4, 1, 13, 2], strides = [1, 1, 1, 1]} : vector<4x13x13x2xf32> to vector<4x1x13x2xf32>
    %313 = vector.shape_cast %312 : vector<4x1x13x2xf32> to vector<4x13x2xf32>
    %314 = vector.extract_strided_slice %288 {offsets = [0, 9, 0, 0], sizes = [4, 1, 13, 2], strides = [1, 1, 1, 1]} : vector<4x13x13x2xf32> to vector<4x1x13x2xf32>
    %315 = vector.shape_cast %314 : vector<4x1x13x2xf32> to vector<4x13x2xf32>
    %316 = arith.maximumf %313, %315 : vector<4x13x2xf32>
    %317 = vector.extract_strided_slice %288 {offsets = [0, 10, 0, 0], sizes = [4, 1, 13, 2], strides = [1, 1, 1, 1]} : vector<4x13x13x2xf32> to vector<4x1x13x2xf32>
    %318 = vector.shape_cast %317 : vector<4x1x13x2xf32> to vector<4x13x2xf32>
    %319 = arith.maximumf %316, %318 : vector<4x13x2xf32>
    %320 = vector.extract_strided_slice %288 {offsets = [0, 11, 0, 0], sizes = [4, 1, 13, 2], strides = [1, 1, 1, 1]} : vector<4x13x13x2xf32> to vector<4x1x13x2xf32>
    %321 = vector.shape_cast %320 : vector<4x1x13x2xf32> to vector<4x13x2xf32>
    %322 = arith.maximumf %319, %321 : vector<4x13x2xf32>
    %323 = vector.shape_cast %300 : vector<4x13x2xf32> to vector<4x1x13x2xf32>
    %324 = vector.shape_cast %311 : vector<4x13x2xf32> to vector<4x1x13x2xf32>
    %325 = vector.shape_cast %322 : vector<4x13x2xf32> to vector<4x1x13x2xf32>
    %326 = tpu.concatenate %323, %324, %325 in 1 : vector<4x1x13x2xf32>, vector<4x1x13x2xf32>, vector<4x1x13x2xf32> -> vector<4x3x13x2xf32>
    %327 = vector.extract_strided_slice %326 {offsets = [0, 0, 0, 0], sizes = [4, 3, 4, 2], strides = [1, 1, 1, 1]} : vector<4x3x13x2xf32> to vector<4x3x4x2xf32>
    %cst_15 = arith.constant dense<0xFF800000> : vector<4x3x2xf32>
    %328 = vector.multi_reduction <maximumf>, %327, %cst_15 [2] : vector<4x3x4x2xf32> to vector<4x3x2xf32>
    %c0_16 = arith.constant 0 : index
    %c0_17 = arith.constant 0 : index
    %c0_18 = arith.constant 0 : index
    %c0_19 = arith.constant 0 : index
    %329 = vector.load %arg5[%c0_16, %c0_17, %c0_18, %c0_19] : memref<4x3x3x2xf32, #tpu.memory_space<vmem>>, vector<4x3x1x2xf32>
    %330 = vector.shape_cast %329 : vector<4x3x1x2xf32> to vector<4x3x2xf32>
    %331 = vector.shape_cast %328 : vector<4x3x2xf32> to vector<4x3x1x2xf32>
    tpu.vector_store %arg5[%c0_16, %c0_17, %c0_18, %c0_19], %331 {strides = array<i32>} : memref<4x3x3x2xf32, #tpu.memory_space<vmem>>, vector<4x3x1x2xf32>,
    %332 = vector.extract_strided_slice %326 {offsets = [0, 0, 4, 0], sizes = [4, 3, 4, 2], strides = [1, 1, 1, 1]} : vector<4x3x13x2xf32> to vector<4x3x4x2xf32>
    %cst_20 = arith.constant dense<0xFF800000> : vector<4x3x2xf32>
    %333 = vector.multi_reduction <maximumf>, %332, %cst_20 [2] : vector<4x3x4x2xf32> to vector<4x3x2xf32>
    %c0_21 = arith.constant 0 : index
    %c0_22 = arith.constant 0 : index
    %c1_23 = arith.constant 1 : index
    %c0_24 = arith.constant 0 : index
    %334 = vector.load %arg5[%c0_21, %c0_22, %c1_23, %c0_24] : memref<4x3x3x2xf32, #tpu.memory_space<vmem>>, vector<4x3x1x2xf32>
    %335 = vector.shape_cast %334 : vector<4x3x1x2xf32> to vector<4x3x2xf32>
    %336 = vector.shape_cast %333 : vector<4x3x2xf32> to vector<4x3x1x2xf32>
    tpu.vector_store %arg5[%c0_21, %c0_22, %c1_23, %c0_24], %336 {strides = array<i32>} : memref<4x3x3x2xf32, #tpu.memory_space<vmem>>, vector<4x3x1x2xf32>,
    %337 = vector.extract_strided_slice %326 {offsets = [0, 0, 8, 0], sizes = [4, 3, 4, 2], strides = [1, 1, 1, 1]} : vector<4x3x13x2xf32> to vector<4x3x4x2xf32>
    %cst_25 = arith.constant dense<0xFF800000> : vector<4x3x2xf32>
    %338 = vector.multi_reduction <maximumf>, %337, %cst_25 [2] : vector<4x3x4x2xf32> to vector<4x3x2xf32>
    %c0_26 = arith.constant 0 : index
    %c0_27 = arith.constant 0 : index
    %c2_28 = arith.constant 2 : index
    %c0_29 = arith.constant 0 : index
    %339 = vector.load %arg5[%c0_26, %c0_27, %c2_28, %c0_29] : memref<4x3x3x2xf32, #tpu.memory_space<vmem>>, vector<4x3x1x2xf32>
    %340 = vector.shape_cast %339 : vector<4x3x1x2xf32> to vector<4x3x2xf32>
    %341 = vector.shape_cast %338 : vector<4x3x2xf32> to vector<4x3x1x2xf32>
    tpu.vector_store %arg5[%c0_26, %c0_27, %c2_28, %c0_29], %341 {strides = array<i32>} : memref<4x3x3x2xf32, #tpu.memory_space<vmem>>, vector<4x3x1x2xf32>,
    return
  }
  func.func @transform_0(%arg0: i32) -> i32 {
    %c0_i32 = arith.constant 0 : i32
    %c0_i32_0 = arith.constant 0 : i32
    return %c0_i32 : i32
  }
  func.func @transform_1(%arg0: i32) -> (i32, i32, i32) {
    %c0_i32 = arith.constant 0 : i32
    %c0_i32_0 = arith.constant 0 : i32
    %c0_i32_1 = arith.constant 0 : i32
    return %c0_i32, %c0_i32_0, %arg0 : i32, i32, i32
  }
  func.func @transform_2(%arg0: i32) -> (i32, i32, i32, i32) {
    %c0_i32 = arith.constant 0 : i32
    %c0_i32_0 = arith.constant 0 : i32
    %c0_i32_1 = arith.constant 0 : i32
    %c0_i32_2 = arith.constant 0 : i32
    return %c0_i32, %c0_i32_0, %c0_i32_1, %arg0 : i32, i32, i32, i32
  }
  func.func @transform_3(%arg0: i32) -> (i32, i32, i32, i32) {
    %c0_i32 = arith.constant 0 : i32
    %c0_i32_0 = arith.constant 0 : i32
    %c0_i32_1 = arith.constant 0 : i32
    %c0_i32_2 = arith.constant 0 : i32
    return %c0_i32, %c0_i32_0, %c0_i32_1, %arg0 : i32, i32, i32, i32
  }
  func.func @transform_4(%arg0: i32) -> (i32, i32, i32, i32) {
    %c0_i32 = arith.constant 0 : i32
    %c0_i32_0 = arith.constant 0 : i32
    %c0_i32_1 = arith.constant 0 : i32
    %c0_i32_2 = arith.constant 0 : i32
    return %c0_i32, %c0_i32_0, %c0_i32_1, %arg0 : i32, i32, i32, i32
  }
}

</mosaic_0001>

<llo_original>
// kernel: tpu_custom_call.1
$region0: #{tpu_custom_call.1}
  #allocation0 [shape = 'u32[]', space=smem, size = 0x4, offset = 0x4, fixed_abs, tag = 'smem constant byte address 0x4 - core index']
  #allocation1 [shape = 'u32[144,128]{1,0:T(1,128)}', space=vmem, size = 0x12000, scoped, tag = 'internal scratch']
  %s0 = inlined_call_operand.vmem [shape: f32[64], index: 0, kind: input, shape index: {}]
  %s1 = inlined_call_operand.vmem [shape: f32[16,16,2], index: 1, kind: input, shape index: {}]
  %s2 = inlined_call_operand.vmem [shape: f32[4,13,13,2], index: 2, kind: output, shape index: {0}]
  %s3 = inlined_call_operand.vmem [shape: f32[4,13,13,2], index: 3, kind: output, shape index: {1}]
  %s4 = inlined_call_operand.vmem [shape: f32[4,3,3,2], index: 4, kind: output, shape index: {2}]
  %5 = xla_tuple %s2, %s3, %s4
  %s6 = sld [smem:[#allocation0]]
  $region38: #{tpu_custom_call.1} parent=0
    _
  %s8 = ssub.s32 1, %s6
  %s9 = scalar_select 0, %s8, %s6
  $region1: #{tpu_custom_call.1} parent=0
    #allocation2 [shape = 'u8[512]{0}', space=smem, size = 0x200, scoped, tag = 'input window, operand 0, single buffered']
    #allocation3 [shape = 's32[1]{0}', space=sflag, size = 0x4, scoped, tag = 'scoped memory for tpu_custom_call.1']
    %10 = vsyncpa [#allocation3], 0
    // Predicated region
    $region2: #{tpu_custom_call.1} parent=1 // pred_check
      _
    $region3: #{tpu_custom_call.1} parent=1 // pred_check_branch
      %12 = sbr.rel (0) target = $region5
    $region4: #{tpu_custom_call.1} parent=1 // pred_region
      %s14 = ssub.s32 16, 16
      %15 = vsyncadd [#allocation3], %s14
      %s17 = sshll.u32 %s0, 4
      %s18 = int_to_ptr.vmem [resolvable:$true] %s17
      %20 = dma.vmem_to_smem %s18, 16, [#allocation2], [#allocation3]
    $region5: #{tpu_custom_call.1} parent=1 // pred_fallthru
      _
    // Predicated region
    $region6: #{tpu_custom_call.1} parent=1 // pred_check
      _
    $region7: #{tpu_custom_call.1} parent=1 // pred_check_branch
      %22 = sbr.rel (0) target = $region9
    $region8: #{tpu_custom_call.1} parent=1 // pred_region
      _
    $region9: #{tpu_custom_call.1} parent=1 // pred_fallthru
      _
    // Predicated region
    $region10: #{tpu_custom_call.1} parent=1 // pred_check
      _
    $region11: #{tpu_custom_call.1} parent=1 // pred_check_branch
      %24 = sbr.rel (0) target = $region13
    $region12: #{tpu_custom_call.1} parent=1 // pred_region
      %25 = dma.done [#allocation3], 16
    $region13: #{tpu_custom_call.1} parent=1 // pred_fallthru
      _
    %26 = sfence
    %v27 = vld [vmem:[%s1] sm:$0xff]
    %v28 = vld [vmem:[%s1 + $0x8] sm:$0xff]
    %v29 = vld [vmem:[%s1 + $0x10] sm:$0xff]
    %v30 = vld [vmem:[%s1 + $0x18] sm:$0xff]
    %v31 = vld [vmem:[%s1 + $0x20] sm:$0xff]
    %v32 = vld [vmem:[%s1 + $0x28] sm:$0xff]
    %v33 = vld [vmem:[%s1 + $0x30] sm:$0xff]
    %v34 = vld [vmem:[%s1 + $0x38] sm:$0xff]
    %v35 = vld [vmem:[%s1 + $0x40] sm:$0xff]
    %v36 = vld [vmem:[%s1 + $0x48] sm:$0xff]
    %v37 = vld [vmem:[%s1 + $0x50] sm:$0xff]
    %v38 = vld [vmem:[%s1 + $0x58] sm:$0xff]
    %v39 = vld [vmem:[%s1 + $0x60] sm:$0xff]
    %v40 = vld [vmem:[%s1 + $0x68] sm:$0xff]
    %v41 = vld [vmem:[%s1 + $0x70] sm:$0xff]
    %v42 = vld [vmem:[%s1 + $0x78] sm:$0xff]
    %v43 = vld [vmem:[%s1 + $0x80] sm:$0xff]
    %v44 = vld [vmem:[%s1 + $0x88] sm:$0xff]
    %v45 = vld [vmem:[%s1 + $0x90] sm:$0xff]
    %v46 = vld [vmem:[%s1 + $0x98] sm:$0xff]
    %v47 = vld [vmem:[%s1 + $0xa0] sm:$0xff]
    %v48 = vld [vmem:[%s1 + $0xa8] sm:$0xff]
    %v49 = vld [vmem:[%s1 + $0xb0] sm:$0xff]
    %v50 = vld [vmem:[%s1 + $0xb8] sm:$0xff]
    %v51 = vld [vmem:[%s1 + $0xc0] sm:$0xff]
    %v52 = vld [vmem:[%s1 + $0xc8] sm:$0xff]
    %v53 = vld [vmem:[%s1 + $0xd0] sm:$0xff]
    %v54 = vld [vmem:[%s1 + $0xd8] sm:$0xff]
    %v55 = vld [vmem:[%s1 + $0xe0] sm:$0xff]
    %v56 = vld [vmem:[%s1 + $0xe8] sm:$0xff]
    %v57 = vld [vmem:[%s1 + $0xf0] sm:$0xff]
    %v58 = vld [vmem:[%s1 + $0xf8] sm:$0xff]
    %s59 = sld [smem:[#allocation2]]
    %v60 = vstv %s59
    %v61 = vmul.f32 %v60, %v27
    %v62 = vmul.f32 %v60, %v28
    %v63 = vmul.f32 %v60, %v29
    %v64 = vmul.f32 %v60, %v30
    %v65 = vmul.f32 %v60, %v31
    %v66 = vmul.f32 %v60, %v32
    %v67 = vmul.f32 %v60, %v33
    %v68 = vmul.f32 %v60, %v34
    %v69 = vmul.f32 %v60, %v35
    %v70 = vmul.f32 %v60, %v36
    %v71 = vmul.f32 %v60, %v37
    %v72 = vmul.f32 %v60, %v38
    %v73 = vmul.f32 %v60, %v39
    %v74 = vmul.f32 %v60, %v40
    %v75 = vmul.f32 %v60, %v41
    %v76 = vmul.f32 %v60, %v42
    %v77 = vmul.f32 %v60, %v43
    %v78 = vmul.f32 %v60, %v44
    %v79 = vmul.f32 %v60, %v45
    %v80 = vmul.f32 %v60, %v46
    %v81 = vmul.f32 %v60, %v47
    %v82 = vmul.f32 %v60, %v48
    %v83 = vmul.f32 %v60, %v49
    %v84 = vmul.f32 %v60, %v50
    %v85 = vmul.f32 %v60, %v51
    %v86 = vmul.f32 %v60, %v52
    %v87 = vadd.f32 %v61, 0.0
    %v88 = vadd.f32 %v62, 0.0
    %v89 = vadd.f32 %v63, 0.0
    %v90 = vadd.f32 %v64, 0.0
    %v91 = vadd.f32 %v65, 0.0
    %v92 = vadd.f32 %v66, 0.0
    %v93 = vadd.f32 %v67, 0.0
    %v94 = vadd.f32 %v68, 0.0
    %v95 = vadd.f32 %v69, 0.0
    %v96 = vadd.f32 %v70, 0.0
    %v97 = vadd.f32 %v71, 0.0
    %v98 = vadd.f32 %v72, 0.0
    %v99 = vadd.f32 %v73, 0.0
    %v100 = vadd.f32 %v74, 0.0
    %v101 = vadd.f32 %v75, 0.0
    %v102 = vadd.f32 %v76, 0.0
    %v103 = vadd.f32 %v77, 0.0
    %v104 = vadd.f32 %v78, 0.0
    %v105 = vadd.f32 %v79, 0.0
    %v106 = vadd.f32 %v80, 0.0
    %v107 = vadd.f32 %v81, 0.0
    %v108 = vadd.f32 %v82, 0.0
    %v109 = vadd.f32 %v83, 0.0
    %v110 = vadd.f32 %v84, 0.0
    %v111 = vadd.f32 %v85, 0.0
    %v112 = vadd.f32 %v86, 0.0
    %s113 = sld [smem:[#allocation2 + $0x10]]
    %v114 = vstv %s113
    %v115 = vmul.f32 %v114, %v27
    %v116 = vmul.f32 %v114, %v28
    %v117 = vmul.f32 %v114, %v29
    %v118 = vmul.f32 %v114, %v30
    %v119 = vmul.f32 %v114, %v31
    %v120 = vmul.f32 %v114, %v32
    %v121 = vmul.f32 %v114, %v33
    %v122 = vmul.f32 %v114, %v34
    %v123 = vmul.f32 %v114, %v35
    %v124 = vmul.f32 %v114, %v36
    %v125 = vmul.f32 %v114, %v37
    %v126 = vmul.f32 %v114, %v38
    %v127 = vmul.f32 %v114, %v39
    %v128 = vmul.f32 %v114, %v40
    %v129 = vmul.f32 %v114, %v41
    %v130 = vmul.f32 %v114, %v42
    %v131 = vmul.f32 %v114, %v43
    %v132 = vmul.f32 %v114, %v44
    %v133 = vmul.f32 %v114, %v45
    %v134 = vmul.f32 %v114, %v46
    %v135 = vmul.f32 %v114, %v47
    %v136 = vmul.f32 %v114, %v48
    %v137 = vmul.f32 %v114, %v49
    %v138 = vmul.f32 %v114, %v50
    %v139 = vmul.f32 %v114, %v51
    %v140 = vmul.f32 %v114, %v52
    %v141 = vadd.f32 %v115, 0.0
    %v142 = vadd.f32 %v116, 0.0
    %v143 = vadd.f32 %v117, 0.0
    %v144 = vadd.f32 %v118, 0.0
    %v145 = vadd.f32 %v119, 0.0
    %v146 = vadd.f32 %v120, 0.0
    %v147 = vadd.f32 %v121, 0.0
    %v148 = vadd.f32 %v122, 0.0
    %v149 = vadd.f32 %v123, 0.0
    %v150 = vadd.f32 %v124, 0.0
    %v151 = vadd.f32 %v125, 0.0
    %v152 = vadd.f32 %v126, 0.0
    %v153 = vadd.f32 %v127, 0.0
    %v154 = vadd.f32 %v128, 0.0
    %v155 = vadd.f32 %v129, 0.0
    %v156 = vadd.f32 %v130, 0.0
    %v157 = vadd.f32 %v131, 0.0
    %v158 = vadd.f32 %v132, 0.0
    %v159 = vadd.f32 %v133, 0.0
    %v160 = vadd.f32 %v134, 0.0
    %v161 = vadd.f32 %v135, 0.0
    %v162 = vadd.f32 %v136, 0.0
    %v163 = vadd.f32 %v137, 0.0
    %v164 = vadd.f32 %v138, 0.0
    %v165 = vadd.f32 %v139, 0.0
    %v166 = vadd.f32 %v140, 0.0
    %s167 = sld [smem:[#allocation2 + $0x20]]
    %v168 = vstv %s167
    %v169 = vmul.f32 %v168, %v27
    %v170 = vmul.f32 %v168, %v28
    %v171 = vmul.f32 %v168, %v29
    %v172 = vmul.f32 %v168, %v30
    %v173 = vmul.f32 %v168, %v31
    %v174 = vmul.f32 %v168, %v32
    %v175 = vmul.f32 %v168, %v33
    %v176 = vmul.f32 %v168, %v34
    %v177 = vmul.f32 %v168, %v35
    %v178 = vmul.f32 %v168, %v36
    %v179 = vmul.f32 %v168, %v37
    %v180 = vmul.f32 %v168, %v38
    %v181 = vmul.f32 %v168, %v39
    %v182 = vmul.f32 %v168, %v40
    %v183 = vmul.f32 %v168, %v41
    %v184 = vmul.f32 %v168, %v42
    %v185 = vmul.f32 %v168, %v43
    %v186 = vmul.f32 %v168, %v44
    %v187 = vmul.f32 %v168, %v45
    %v188 = vmul.f32 %v168, %v46
    %v189 = vmul.f32 %v168, %v47
    %v190 = vmul.f32 %v168, %v48
    %v191 = vmul.f32 %v168, %v49
    %v192 = vmul.f32 %v168, %v50
    %v193 = vmul.f32 %v168, %v51
    %v194 = vmul.f32 %v168, %v52
    %v195 = vadd.f32 %v169, 0.0
    %v196 = vadd.f32 %v170, 0.0
    %v197 = vadd.f32 %v171, 0.0
    %v198 = vadd.f32 %v172, 0.0
    %v199 = vadd.f32 %v173, 0.0
    %v200 = vadd.f32 %v174, 0.0
    %v201 = vadd.f32 %v175, 0.0
    %v202 = vadd.f32 %v176, 0.0
    %v203 = vadd.f32 %v177, 0.0
    %v204 = vadd.f32 %v178, 0.0
    %v205 = vadd.f32 %v179, 0.0
    %v206 = vadd.f32 %v180, 0.0
    %v207 = vadd.f32 %v181, 0.0
    %v208 = vadd.f32 %v182, 0.0
    %v209 = vadd.f32 %v183, 0.0
    %v210 = vadd.f32 %v184, 0.0
    %v211 = vadd.f32 %v185, 0.0
    %v212 = vadd.f32 %v186, 0.0
    %v213 = vadd.f32 %v187, 0.0
    %v214 = vadd.f32 %v188, 0.0
    %v215 = vadd.f32 %v189, 0.0
    %v216 = vadd.f32 %v190, 0.0
    %v217 = vadd.f32 %v191, 0.0
    %v218 = vadd.f32 %v192, 0.0
    %v219 = vadd.f32 %v193, 0.0
    %v220 = vadd.f32 %v194, 0.0
    %s221 = sld [smem:[#allocation2 + $0x30]]
    %v222 = vstv %s221
    %v223 = vmul.f32 %v222, %v27
    %v224 = vmul.f32 %v222, %v28
    %v225 = vmul.f32 %v222, %v29
    %v226 = vmul.f32 %v222, %v30
    %v227 = vmul.f32 %v222, %v31
    %v228 = vmul.f32 %v222, %v32
    %v229 = vmul.f32 %v222, %v33
    %v230 = vmul.f32 %v222, %v34
    %v231 = vmul.f32 %v222, %v35
    %v232 = vmul.f32 %v222, %v36
    %v233 = vmul.f32 %v222, %v37
    %v234 = vmul.f32 %v222, %v38
    %v235 = vmul.f32 %v222, %v39
    %v236 = vmul.f32 %v222, %v40
    %v237 = vmul.f32 %v222, %v41
    %v238 = vmul.f32 %v222, %v42
    %v239 = vmul.f32 %v222, %v43
    %v240 = vmul.f32 %v222, %v44
    %v241 = vmul.f32 %v222, %v45
    %v242 = vmul.f32 %v222, %v46
    %v243 = vmul.f32 %v222, %v47
    %v244 = vmul.f32 %v222, %v48
    %v245 = vmul.f32 %v222, %v49
    %v246 = vmul.f32 %v222, %v50
    %v247 = vmul.f32 %v222, %v51
    %v248 = vmul.f32 %v222, %v52
    %v249 = vadd.f32 %v223, 0.0
    %v250 = vadd.f32 %v224, 0.0
    %v251 = vadd.f32 %v225, 0.0
    %v252 = vadd.f32 %v226, 0.0
    %v253 = vadd.f32 %v227, 0.0
    %v254 = vadd.f32 %v228, 0.0
    %v255 = vadd.f32 %v229, 0.0
    %v256 = vadd.f32 %v230, 0.0
    %v257 = vadd.f32 %v231, 0.0
    %v258 = vadd.f32 %v232, 0.0
    %v259 = vadd.f32 %v233, 0.0
    %v260 = vadd.f32 %v234, 0.0
    %v261 = vadd.f32 %v235, 0.0
    %v262 = vadd.f32 %v236, 0.0
    %v263 = vadd.f32 %v237, 0.0
    %v264 = vadd.f32 %v238, 0.0
    %v265 = vadd.f32 %v239, 0.0
    %v266 = vadd.f32 %v240, 0.0
    %v267 = vadd.f32 %v241, 0.0
    %v268 = vadd.f32 %v242, 0.0
    %v269 = vadd.f32 %v243, 0.0
    %v270 = vadd.f32 %v244, 0.0
    %v271 = vadd.f32 %v245, 0.0
    %v272 = vadd.f32 %v246, 0.0
    %v273 = vadd.f32 %v247, 0.0
    %v274 = vadd.f32 %v248, 0.0
    %s275 = sld [smem:[#allocation2 + $0x4]]
    %v276 = vstv %s275
    %v277 = vmul.f32 %v276, %v29
    %v278 = vmul.f32 %v276, %v30
    %v279 = vmul.f32 %v276, %v31
    %v280 = vmul.f32 %v276, %v32
    %v281 = vmul.f32 %v276, %v33
    %v282 = vmul.f32 %v276, %v34
    %v283 = vmul.f32 %v276, %v35
    %v284 = vmul.f32 %v276, %v36
    %v285 = vmul.f32 %v276, %v37
    %v286 = vmul.f32 %v276, %v38
    %v287 = vmul.f32 %v276, %v39
    %v288 = vmul.f32 %v276, %v40
    %v289 = vmul.f32 %v276, %v41
    %v290 = vmul.f32 %v276, %v42
    %v291 = vmul.f32 %v276, %v43
    %v292 = vmul.f32 %v276, %v44
    %v293 = vmul.f32 %v276, %v45
    %v294 = vmul.f32 %v276, %v46
    %v295 = vmul.f32 %v276, %v47
    %v296 = vmul.f32 %v276, %v48
    %v297 = vmul.f32 %v276, %v49
    %v298 = vmul.f32 %v276, %v50
    %v299 = vmul.f32 %v276, %v51
    %v300 = vmul.f32 %v276, %v52
    %v301 = vmul.f32 %v276, %v53
    %v302 = vmul.f32 %v276, %v54
    %v303 = vadd.f32 %v87, %v277
    %v304 = vadd.f32 %v88, %v278
    %v305 = vadd.f32 %v89, %v279
    %v306 = vadd.f32 %v90, %v280
    %v307 = vadd.f32 %v91, %v281
    %v308 = vadd.f32 %v92, %v282
    %v309 = vadd.f32 %v93, %v283
    %v310 = vadd.f32 %v94, %v284
    %v311 = vadd.f32 %v95, %v285
    %v312 = vadd.f32 %v96, %v286
    %v313 = vadd.f32 %v97, %v287
    %v314 = vadd.f32 %v98, %v288
    %v315 = vadd.f32 %v99, %v289
    %v316 = vadd.f32 %v100, %v290
    %v317 = vadd.f32 %v101, %v291
    %v318 = vadd.f32 %v102, %v292
    %v319 = vadd.f32 %v103, %v293
    %v320 = vadd.f32 %v104, %v294
    %v321 = vadd.f32 %v105, %v295
    %v322 = vadd.f32 %v106, %v296
    %v323 = vadd.f32 %v107, %v297
    %v324 = vadd.f32 %v108, %v298
    %v325 = vadd.f32 %v109, %v299
    %v326 = vadd.f32 %v110, %v300
    %v327 = vadd.f32 %v111, %v301
    %v328 = vadd.f32 %v112, %v302
    %s329 = sld [smem:[#allocation2 + $0x14]]
    %v330 = vstv %s329
    %v331 = vmul.f32 %v330, %v29
    %v332 = vmul.f32 %v330, %v30
    %v333 = vmul.f32 %v330, %v31
    %v334 = vmul.f32 %v330, %v32
    %v335 = vmul.f32 %v330, %v33
    %v336 = vmul.f32 %v330, %v34
    %v337 = vmul.f32 %v330, %v35
    %v338 = vmul.f32 %v330, %v36
    %v339 = vmul.f32 %v330, %v37
    %v340 = vmul.f32 %v330, %v38
    %v341 = vmul.f32 %v330, %v39
    %v342 = vmul.f32 %v330, %v40
    %v343 = vmul.f32 %v330, %v41
    %v344 = vmul.f32 %v330, %v42
    %v345 = vmul.f32 %v330, %v43
    %v346 = vmul.f32 %v330, %v44
    %v347 = vmul.f32 %v330, %v45
    %v348 = vmul.f32 %v330, %v46
    %v349 = vmul.f32 %v330, %v47
    %v350 = vmul.f32 %v330, %v48
    %v351 = vmul.f32 %v330, %v49
    %v352 = vmul.f32 %v330, %v50
    %v353 = vmul.f32 %v330, %v51
    %v354 = vmul.f32 %v330, %v52
    %v355 = vmul.f32 %v330, %v53
    %v356 = vmul.f32 %v330, %v54
    %v357 = vadd.f32 %v141, %v331
    %v358 = vadd.f32 %v142, %v332
    %v359 = vadd.f32 %v143, %v333
    %v360 = vadd.f32 %v144, %v334
    %v361 = vadd.f32 %v145, %v335
    %v362 = vadd.f32 %v146, %v336
    %v363 = vadd.f32 %v147, %v337
    %v364 = vadd.f32 %v148, %v338
    %v365 = vadd.f32 %v149, %v339
    %v366 = vadd.f32 %v150, %v340
    %v367 = vadd.f32 %v151, %v341
    %v368 = vadd.f32 %v152, %v342
    %v369 = vadd.f32 %v153, %v343
    %v370 = vadd.f32 %v154, %v344
    %v371 = vadd.f32 %v155, %v345
    %v372 = vadd.f32 %v156, %v346
    %v373 = vadd.f32 %v157, %v347
    %v374 = vadd.f32 %v158, %v348
    %v375 = vadd.f32 %v159, %v349
    %v376 = vadd.f32 %v160, %v350
    %v377 = vadd.f32 %v161, %v351
    %v378 = vadd.f32 %v162, %v352
    %v379 = vadd.f32 %v163, %v353
    %v380 = vadd.f32 %v164, %v354
    %v381 = vadd.f32 %v165, %v355
    %v382 = vadd.f32 %v166, %v356
    %s383 = sld [smem:[#allocation2 + $0x24]]
    %v384 = vstv %s383
    %v385 = vmul.f32 %v384, %v29
    %v386 = vmul.f32 %v384, %v30
    %v387 = vmul.f32 %v384, %v31
    %v388 = vmul.f32 %v384, %v32
    %v389 = vmul.f32 %v384, %v33
    %v390 = vmul.f32 %v384, %v34
    %v391 = vmul.f32 %v384, %v35
    %v392 = vmul.f32 %v384, %v36
    %v393 = vmul.f32 %v384, %v37
    %v394 = vmul.f32 %v384, %v38
    %v395 = vmul.f32 %v384, %v39
    %v396 = vmul.f32 %v384, %v40
    %v397 = vmul.f32 %v384, %v41
    %v398 = vmul.f32 %v384, %v42
    %v399 = vmul.f32 %v384, %v43
    %v400 = vmul.f32 %v384, %v44
    %v401 = vmul.f32 %v384, %v45
    %v402 = vmul.f32 %v384, %v46
    %v403 = vmul.f32 %v384, %v47
    %v404 = vmul.f32 %v384, %v48
    %v405 = vmul.f32 %v384, %v49
    %v406 = vmul.f32 %v384, %v50
    %v407 = vmul.f32 %v384, %v51
    %v408 = vmul.f32 %v384, %v52
    %v409 = vmul.f32 %v384, %v53
    %v410 = vmul.f32 %v384, %v54
    %v411 = vadd.f32 %v195, %v385
    %v412 = vadd.f32 %v196, %v386
    %v413 = vadd.f32 %v197, %v387
    %v414 = vadd.f32 %v198, %v388
    %v415 = vadd.f32 %v199, %v389
    %v416 = vadd.f32 %v200, %v390
    %v417 = vadd.f32 %v201, %v391
    %v418 = vadd.f32 %v202, %v392
    %v419 = vadd.f32 %v203, %v393
    %v420 = vadd.f32 %v204, %v394
    %v421 = vadd.f32 %v205, %v395
    %v422 = vadd.f32 %v206, %v396
    %v423 = vadd.f32 %v207, %v397
    %v424 = vadd.f32 %v208, %v398
    %v425 = vadd.f32 %v209, %v399
    %v426 = vadd.f32 %v210, %v400
    %v427 = vadd.f32 %v211, %v401
    %v428 = vadd.f32 %v212, %v402
    %v429 = vadd.f32 %v213, %v403
    %v430 = vadd.f32 %v214, %v404
    %v431 = vadd.f32 %v215, %v405
    %v432 = vadd.f32 %v216, %v406
    %v433 = vadd.f32 %v217, %v407
    %v434 = vadd.f32 %v218, %v408
    %v435 = vadd.f32 %v219, %v409
    %v436 = vadd.f32 %v220, %v410
    %s437 = sld [smem:[#allocation2 + $0x34]]
    %v438 = vstv %s437
    %v439 = vmul.f32 %v438, %v29
    %v440 = vmul.f32 %v438, %v30
    %v441 = vmul.f32 %v438, %v31
    %v442 = vmul.f32 %v438, %v32
    %v443 = vmul.f32 %v438, %v33
    %v444 = vmul.f32 %v438, %v34
    %v445 = vmul.f32 %v438, %v35
    %v446 = vmul.f32 %v438, %v36
    %v447 = vmul.f32 %v438, %v37
    %v448 = vmul.f32 %v438, %v38
    %v449 = vmul.f32 %v438, %v39
    %v450 = vmul.f32 %v438, %v40
    %v451 = vmul.f32 %v438, %v41
    %v452 = vmul.f32 %v438, %v42
    %v453 = vmul.f32 %v438, %v43
    %v454 = vmul.f32 %v438, %v44
    %v455 = vmul.f32 %v438, %v45
    %v456 = vmul.f32 %v438, %v46
    %v457 = vmul.f32 %v438, %v47
    %v458 = vmul.f32 %v438, %v48
    %v459 = vmul.f32 %v438, %v49
    %v460 = vmul.f32 %v438, %v50
    %v461 = vmul.f32 %v438, %v51
    %v462 = vmul.f32 %v438, %v52
    %v463 = vmul.f32 %v438, %v53
    %v464 = vmul.f32 %v438, %v54
    %v465 = vadd.f32 %v249, %v439
    %v466 = vadd.f32 %v250, %v440
    %v467 = vadd.f32 %v251, %v441
    %v468 = vadd.f32 %v252, %v442
    %v469 = vadd.f32 %v253, %v443
    %v470 = vadd.f32 %v254, %v444
    %v471 = vadd.f32 %v255, %v445
    %v472 = vadd.f32 %v256, %v446
    %v473 = vadd.f32 %v257, %v447
    %v474 = vadd.f32 %v258, %v448
    %v475 = vadd.f32 %v259, %v449
    %v476 = vadd.f32 %v260, %v450
    %v477 = vadd.f32 %v261, %v451
    %v478 = vadd.f32 %v262, %v452
    %v479 = vadd.f32 %v263, %v453
    %v480 = vadd.f32 %v264, %v454
    %v481 = vadd.f32 %v265, %v455
    %v482 = vadd.f32 %v266, %v456
    %v483 = vadd.f32 %v267, %v457
    %v484 = vadd.f32 %v268, %v458
    %v485 = vadd.f32 %v269, %v459
    %v486 = vadd.f32 %v270, %v460
    %v487 = vadd.f32 %v271, %v461
    %v488 = vadd.f32 %v272, %v462
    %v489 = vadd.f32 %v273, %v463
    %v490 = vadd.f32 %v274, %v464
    %s491 = sld [smem:[#allocation2 + $0x8]]
    %v492 = vstv %s491
    %v493 = vmul.f32 %v492, %v31
    %v494 = vmul.f32 %v492, %v32
    %v495 = vmul.f32 %v492, %v33
    %v496 = vmul.f32 %v492, %v34
    %v497 = vmul.f32 %v492, %v35
    %v498 = vmul.f32 %v492, %v36
    %v499 = vmul.f32 %v492, %v37
    %v500 = vmul.f32 %v492, %v38
    %v501 = vmul.f32 %v492, %v39
    %v502 = vmul.f32 %v492, %v40
    %v503 = vmul.f32 %v492, %v41
    %v504 = vmul.f32 %v492, %v42
    %v505 = vmul.f32 %v492, %v43
    %v506 = vmul.f32 %v492, %v44
    %v507 = vmul.f32 %v492, %v45
    %v508 = vmul.f32 %v492, %v46
    %v509 = vmul.f32 %v492, %v47
    %v510 = vmul.f32 %v492, %v48
    %v511 = vmul.f32 %v492, %v49
    %v512 = vmul.f32 %v492, %v50
    %v513 = vmul.f32 %v492, %v51
    %v514 = vmul.f32 %v492, %v52
    %v515 = vmul.f32 %v492, %v53
    %v516 = vmul.f32 %v492, %v54
    %v517 = vmul.f32 %v492, %v55
    %v518 = vmul.f32 %v492, %v56
    %v519 = vadd.f32 %v303, %v493
    %v520 = vadd.f32 %v304, %v494
    %v521 = vadd.f32 %v305, %v495
    %v522 = vadd.f32 %v306, %v496
    %v523 = vadd.f32 %v307, %v497
    %v524 = vadd.f32 %v308, %v498
    %v525 = vadd.f32 %v309, %v499
    %v526 = vadd.f32 %v310, %v500
    %v527 = vadd.f32 %v311, %v501
    %v528 = vadd.f32 %v312, %v502
    %v529 = vadd.f32 %v313, %v503
    %v530 = vadd.f32 %v314, %v504
    %v531 = vadd.f32 %v315, %v505
    %v532 = vadd.f32 %v316, %v506
    %v533 = vadd.f32 %v317, %v507
    %v534 = vadd.f32 %v318, %v508
    %v535 = vadd.f32 %v319, %v509
    %v536 = vadd.f32 %v320, %v510
    %v537 = vadd.f32 %v321, %v511
    %v538 = vadd.f32 %v322, %v512
    %v539 = vadd.f32 %v323, %v513
    %v540 = vadd.f32 %v324, %v514
    %v541 = vadd.f32 %v325, %v515
    %v542 = vadd.f32 %v326, %v516
    %v543 = vadd.f32 %v327, %v517
    %v544 = vadd.f32 %v328, %v518
    %s545 = sld [smem:[#allocation2 + $0x18]]
    %v546 = vstv %s545
    %v547 = vmul.f32 %v546, %v31
    %v548 = vmul.f32 %v546, %v32
    %v549 = vmul.f32 %v546, %v33
    %v550 = vmul.f32 %v546, %v34
    %v551 = vmul.f32 %v546, %v35
    %v552 = vmul.f32 %v546, %v36
    %v553 = vmul.f32 %v546, %v37
    %v554 = vmul.f32 %v546, %v38
    %v555 = vmul.f32 %v546, %v39
    %v556 = vmul.f32 %v546, %v40
    %v557 = vmul.f32 %v546, %v41
    %v558 = vmul.f32 %v546, %v42
    %v559 = vmul.f32 %v546, %v43
    %v560 = vmul.f32 %v546, %v44
    %v561 = vmul.f32 %v546, %v45
    %v562 = vmul.f32 %v546, %v46
    %v563 = vmul.f32 %v546, %v47
    %v564 = vmul.f32 %v546, %v48
    %v565 = vmul.f32 %v546, %v49
    %v566 = vmul.f32 %v546, %v50
    %v567 = vmul.f32 %v546, %v51
    %v568 = vmul.f32 %v546, %v52
    %v569 = vmul.f32 %v546, %v53
    %v570 = vmul.f32 %v546, %v54
    %v571 = vmul.f32 %v546, %v55
    %v572 = vmul.f32 %v546, %v56
    %v573 = vadd.f32 %v357, %v547
    %v574 = vadd.f32 %v358, %v548
    %v575 = vadd.f32 %v359, %v549
    %v576 = vadd.f32 %v360, %v550
    %v577 = vadd.f32 %v361, %v551
    %v578 = vadd.f32 %v362, %v552
    %v579 = vadd.f32 %v363, %v553
    %v580 = vadd.f32 %v364, %v554
    %v581 = vadd.f32 %v365, %v555
    %v582 = vadd.f32 %v366, %v556
    %v583 = vadd.f32 %v367, %v557
    %v584 = vadd.f32 %v368, %v558
    %v585 = vadd.f32 %v369, %v559
    %v586 = vadd.f32 %v370, %v560
    %v587 = vadd.f32 %v371, %v561
    %v588 = vadd.f32 %v372, %v562
    %v589 = vadd.f32 %v373, %v563
    %v590 = vadd.f32 %v374, %v564
    %v591 = vadd.f32 %v375, %v565
    %v592 = vadd.f32 %v376, %v566
    %v593 = vadd.f32 %v377, %v567
    %v594 = vadd.f32 %v378, %v568
    %v595 = vadd.f32 %v379, %v569
    %v596 = vadd.f32 %v380, %v570
    %v597 = vadd.f32 %v381, %v571
    %v598 = vadd.f32 %v382, %v572
    %s599 = sld [smem:[#allocation2 + $0x28]]
    %v600 = vstv %s599
    %v601 = vmul.f32 %v600, %v31
    %v602 = vmul.f32 %v600, %v32
    %v603 = vmul.f32 %v600, %v33
    %v604 = vmul.f32 %v600, %v34
    %v605 = vmul.f32 %v600, %v35
    %v606 = vmul.f32 %v600, %v36
    %v607 = vmul.f32 %v600, %v37
    %v608 = vmul.f32 %v600, %v38
    %v609 = vmul.f32 %v600, %v39
    %v610 = vmul.f32 %v600, %v40
    %v611 = vmul.f32 %v600, %v41
    %v612 = vmul.f32 %v600, %v42
    %v613 = vmul.f32 %v600, %v43
    %v614 = vmul.f32 %v600, %v44
    %v615 = vmul.f32 %v600, %v45
    %v616 = vmul.f32 %v600, %v46
    %v617 = vmul.f32 %v600, %v47
    %v618 = vmul.f32 %v600, %v48
    %v619 = vmul.f32 %v600, %v49
    %v620 = vmul.f32 %v600, %v50
    %v621 = vmul.f32 %v600, %v51
    %v622 = vmul.f32 %v600, %v52
    %v623 = vmul.f32 %v600, %v53
    %v624 = vmul.f32 %v600, %v54
    %v625 = vmul.f32 %v600, %v55
    %v626 = vmul.f32 %v600, %v56
    %v627 = vadd.f32 %v411, %v601
    %v628 = vadd.f32 %v412, %v602
    %v629 = vadd.f32 %v413, %v603
    %v630 = vadd.f32 %v414, %v604
    %v631 = vadd.f32 %v415, %v605
    %v632 = vadd.f32 %v416, %v606
    %v633 = vadd.f32 %v417, %v607
    %v634 = vadd.f32 %v418, %v608
    %v635 = vadd.f32 %v419, %v609
    %v636 = vadd.f32 %v420, %v610
    %v637 = vadd.f32 %v421, %v611
    %v638 = vadd.f32 %v422, %v612
    %v639 = vadd.f32 %v423, %v613
    %v640 = vadd.f32 %v424, %v614
    %v641 = vadd.f32 %v425, %v615
    %v642 = vadd.f32 %v426, %v616
    %v643 = vadd.f32 %v427, %v617
    %v644 = vadd.f32 %v428, %v618
    %v645 = vadd.f32 %v429, %v619
    %v646 = vadd.f32 %v430, %v620
    %v647 = vadd.f32 %v431, %v621
    %v648 = vadd.f32 %v432, %v622
    %v649 = vadd.f32 %v433, %v623
    %v650 = vadd.f32 %v434, %v624
    %v651 = vadd.f32 %v435, %v625
    %v652 = vadd.f32 %v436, %v626
    %s653 = sld [smem:[#allocation2 + $0x38]]
    %v654 = vstv %s653
    %v655 = vmul.f32 %v654, %v31
    %v656 = vmul.f32 %v654, %v32
    %v657 = vmul.f32 %v654, %v33
    %v658 = vmul.f32 %v654, %v34
    %v659 = vmul.f32 %v654, %v35
    %v660 = vmul.f32 %v654, %v36
    %v661 = vmul.f32 %v654, %v37
    %v662 = vmul.f32 %v654, %v38
    %v663 = vmul.f32 %v654, %v39
    %v664 = vmul.f32 %v654, %v40
    %v665 = vmul.f32 %v654, %v41
    %v666 = vmul.f32 %v654, %v42
    %v667 = vmul.f32 %v654, %v43
    %v668 = vmul.f32 %v654, %v44
    %v669 = vmul.f32 %v654, %v45
    %v670 = vmul.f32 %v654, %v46
    %v671 = vmul.f32 %v654, %v47
    %v672 = vmul.f32 %v654, %v48
    %v673 = vmul.f32 %v654, %v49
    %v674 = vmul.f32 %v654, %v50
    %v675 = vmul.f32 %v654, %v51
    %v676 = vmul.f32 %v654, %v52
    %v677 = vmul.f32 %v654, %v53
    %v678 = vmul.f32 %v654, %v54
    %v679 = vmul.f32 %v654, %v55
    %v680 = vmul.f32 %v654, %v56
    %v681 = vadd.f32 %v465, %v655
    %v682 = vadd.f32 %v466, %v656
    %v683 = vadd.f32 %v467, %v657
    %v684 = vadd.f32 %v468, %v658
    %v685 = vadd.f32 %v469, %v659
    %v686 = vadd.f32 %v470, %v660
    %v687 = vadd.f32 %v471, %v661
    %v688 = vadd.f32 %v472, %v662
    %v689 = vadd.f32 %v473, %v663
    %v690 = vadd.f32 %v474, %v664
    %v691 = vadd.f32 %v475, %v665
    %v692 = vadd.f32 %v476, %v666
    %v693 = vadd.f32 %v477, %v667
    %v694 = vadd.f32 %v478, %v668
    %v695 = vadd.f32 %v479, %v669
    %v696 = vadd.f32 %v480, %v670
    %v697 = vadd.f32 %v481, %v671
    %v698 = vadd.f32 %v482, %v672
    %v699 = vadd.f32 %v483, %v673
    %v700 = vadd.f32 %v484, %v674
    %v701 = vadd.f32 %v485, %v675
    %v702 = vadd.f32 %v486, %v676
    %v703 = vadd.f32 %v487, %v677
    %v704 = vadd.f32 %v488, %v678
    %v705 = vadd.f32 %v489, %v679
    %v706 = vadd.f32 %v490, %v680
    %s707 = sld [smem:[#allocation2 + $0xc]]
    %v708 = vstv %s707
    %v709 = vmul.f32 %v708, %v33
    %v710 = vmul.f32 %v708, %v34
    %v711 = vmul.f32 %v708, %v35
    %v712 = vmul.f32 %v708, %v36
    %v713 = vmul.f32 %v708, %v37
    %v714 = vmul.f32 %v708, %v38
    %v715 = vmul.f32 %v708, %v39
    %v716 = vmul.f32 %v708, %v40
    %v717 = vmul.f32 %v708, %v41
    %v718 = vmul.f32 %v708, %v42
    %v719 = vmul.f32 %v708, %v43
    %v720 = vmul.f32 %v708, %v44
    %v721 = vmul.f32 %v708, %v45
    %v722 = vmul.f32 %v708, %v46
    %v723 = vmul.f32 %v708, %v47
    %v724 = vmul.f32 %v708, %v48
    %v725 = vmul.f32 %v708, %v49
    %v726 = vmul.f32 %v708, %v50
    %v727 = vmul.f32 %v708, %v51
    %v728 = vmul.f32 %v708, %v52
    %v729 = vmul.f32 %v708, %v53
    %v730 = vmul.f32 %v708, %v54
    %v731 = vmul.f32 %v708, %v55
    %v732 = vmul.f32 %v708, %v56
    %v733 = vmul.f32 %v708, %v57
    %v734 = vmul.f32 %v708, %v58
    %v735 = vadd.f32 %v519, %v709
    %v736 = vadd.f32 %v520, %v710
    %v737 = vadd.f32 %v521, %v711
    %v738 = vadd.f32 %v522, %v712
    %v739 = vadd.f32 %v523, %v713
    %v740 = vadd.f32 %v524, %v714
    %v741 = vadd.f32 %v525, %v715
    %v742 = vadd.f32 %v526, %v716
    %v743 = vadd.f32 %v527, %v717
    %v744 = vadd.f32 %v528, %v718
    %v745 = vadd.f32 %v529, %v719
    %v746 = vadd.f32 %v530, %v720
    %v747 = vadd.f32 %v531, %v721
    %v748 = vadd.f32 %v532, %v722
    %v749 = vadd.f32 %v533, %v723
    %v750 = vadd.f32 %v534, %v724
    %v751 = vadd.f32 %v535, %v725
    %v752 = vadd.f32 %v536, %v726
    %v753 = vadd.f32 %v537, %v727
    %v754 = vadd.f32 %v538, %v728
    %v755 = vadd.f32 %v539, %v729
    %v756 = vadd.f32 %v540, %v730
    %v757 = vadd.f32 %v541, %v731
    %v758 = vadd.f32 %v542, %v732
    %v759 = vadd.f32 %v543, %v733
    %v760 = vadd.f32 %v544, %v734
    %s761 = sld [smem:[#allocation2 + $0x1c]]
    %v762 = vstv %s761
    %v763 = vmul.f32 %v762, %v33
    %v764 = vmul.f32 %v762, %v34
    %v765 = vmul.f32 %v762, %v35
    %v766 = vmul.f32 %v762, %v36
    %v767 = vmul.f32 %v762, %v37
    %v768 = vmul.f32 %v762, %v38
    %v769 = vmul.f32 %v762, %v39
    %v770 = vmul.f32 %v762, %v40
    %v771 = vmul.f32 %v762, %v41
    %v772 = vmul.f32 %v762, %v42
    %v773 = vmul.f32 %v762, %v43
    %v774 = vmul.f32 %v762, %v44
    %v775 = vmul.f32 %v762, %v45
    %v776 = vmul.f32 %v762, %v46
    %v777 = vmul.f32 %v762, %v47
    %v778 = vmul.f32 %v762, %v48
    %v779 = vmul.f32 %v762, %v49
    %v780 = vmul.f32 %v762, %v50
    %v781 = vmul.f32 %v762, %v51
    %v782 = vmul.f32 %v762, %v52
    %v783 = vmul.f32 %v762, %v53
    %v784 = vmul.f32 %v762, %v54
    %v785 = vmul.f32 %v762, %v55
    %v786 = vmul.f32 %v762, %v56
    %v787 = vmul.f32 %v762, %v57
    %v788 = vmul.f32 %v762, %v58
    %v789 = vadd.f32 %v573, %v763
    %v790 = vadd.f32 %v574, %v764
    %v791 = vadd.f32 %v575, %v765
    %v792 = vadd.f32 %v576, %v766
    %v793 = vadd.f32 %v577, %v767
    %v794 = vadd.f32 %v578, %v768
    %v795 = vadd.f32 %v579, %v769
    %v796 = vadd.f32 %v580, %v770
    %v797 = vadd.f32 %v581, %v771
    %v798 = vadd.f32 %v582, %v772
    %v799 = vadd.f32 %v583, %v773
    %v800 = vadd.f32 %v584, %v774
    %v801 = vadd.f32 %v585, %v775
    %v802 = vadd.f32 %v586, %v776
    %v803 = vadd.f32 %v587, %v777
    %v804 = vadd.f32 %v588, %v778
    %v805 = vadd.f32 %v589, %v779
    %v806 = vadd.f32 %v590, %v780
    %v807 = vadd.f32 %v591, %v781
    %v808 = vadd.f32 %v592, %v782
    %v809 = vadd.f32 %v593, %v783
    %v810 = vadd.f32 %v594, %v784
    %v811 = vadd.f32 %v595, %v785
    %v812 = vadd.f32 %v596, %v786
    %v813 = vadd.f32 %v597, %v787
    %v814 = vadd.f32 %v598, %v788
    %s815 = sld [smem:[#allocation2 + $0x2c]]
    %v816 = vstv %s815
    %v817 = vmul.f32 %v816, %v33
    %v818 = vmul.f32 %v816, %v34
    %v819 = vmul.f32 %v816, %v35
    %v820 = vmul.f32 %v816, %v36
    %v821 = vmul.f32 %v816, %v37
    %v822 = vmul.f32 %v816, %v38
    %v823 = vmul.f32 %v816, %v39
    %v824 = vmul.f32 %v816, %v40
    %v825 = vmul.f32 %v816, %v41
    %v826 = vmul.f32 %v816, %v42
    %v827 = vmul.f32 %v816, %v43
    %v828 = vmul.f32 %v816, %v44
    %v829 = vmul.f32 %v816, %v45
    %v830 = vmul.f32 %v816, %v46
    %v831 = vmul.f32 %v816, %v47
    %v832 = vmul.f32 %v816, %v48
    %v833 = vmul.f32 %v816, %v49
    %v834 = vmul.f32 %v816, %v50
    %v835 = vmul.f32 %v816, %v51
    %v836 = vmul.f32 %v816, %v52
    %v837 = vmul.f32 %v816, %v53
    %v838 = vmul.f32 %v816, %v54
    %v839 = vmul.f32 %v816, %v55
    %v840 = vmul.f32 %v816, %v56
    %v841 = vmul.f32 %v816, %v57
    %v842 = vmul.f32 %v816, %v58
    %v843 = vadd.f32 %v627, %v817
    %v844 = vadd.f32 %v628, %v818
    %v845 = vadd.f32 %v629, %v819
    %v846 = vadd.f32 %v630, %v820
    %v847 = vadd.f32 %v631, %v821
    %v848 = vadd.f32 %v632, %v822
    %v849 = vadd.f32 %v633, %v823
    %v850 = vadd.f32 %v634, %v824
    %v851 = vadd.f32 %v635, %v825
    %v852 = vadd.f32 %v636, %v826
    %v853 = vadd.f32 %v637, %v827
    %v854 = vadd.f32 %v638, %v828
    %v855 = vadd.f32 %v639, %v829
    %v856 = vadd.f32 %v640, %v830
    %v857 = vadd.f32 %v641, %v831
    %v858 = vadd.f32 %v642, %v832
    %v859 = vadd.f32 %v643, %v833
    %v860 = vadd.f32 %v644, %v834
    %v861 = vadd.f32 %v645, %v835
    %v862 = vadd.f32 %v646, %v836
    %v863 = vadd.f32 %v647, %v837
    %v864 = vadd.f32 %v648, %v838
    %v865 = vadd.f32 %v649, %v839
    %v866 = vadd.f32 %v650, %v840
    %v867 = vadd.f32 %v651, %v841
    %v868 = vadd.f32 %v652, %v842
    %s869 = sld [smem:[#allocation2 + $0x3c]]
    %v870 = vstv %s869
    %v871 = vmul.f32 %v870, %v33
    %v872 = vmul.f32 %v870, %v34
    %v873 = vmul.f32 %v870, %v35
    %v874 = vmul.f32 %v870, %v36
    %v875 = vmul.f32 %v870, %v37
    %v876 = vmul.f32 %v870, %v38
    %v877 = vmul.f32 %v870, %v39
    %v878 = vmul.f32 %v870, %v40
    %v879 = vmul.f32 %v870, %v41
    %v880 = vmul.f32 %v870, %v42
    %v881 = vmul.f32 %v870, %v43
    %v882 = vmul.f32 %v870, %v44
    %v883 = vmul.f32 %v870, %v45
    %v884 = vmul.f32 %v870, %v46
    %v885 = vmul.f32 %v870, %v47
    %v886 = vmul.f32 %v870, %v48
    %v887 = vmul.f32 %v870, %v49
    %v888 = vmul.f32 %v870, %v50
    %v889 = vmul.f32 %v870, %v51
    %v890 = vmul.f32 %v870, %v52
    %v891 = vmul.f32 %v870, %v53
    %v892 = vmul.f32 %v870, %v54
    %v893 = vmul.f32 %v870, %v55
    %v894 = vmul.f32 %v870, %v56
    %v895 = vmul.f32 %v870, %v57
    %v896 = vmul.f32 %v870, %v58
    %v897 = vadd.f32 %v681, %v871
    %v898 = vadd.f32 %v682, %v872
    %v899 = vadd.f32 %v683, %v873
    %v900 = vadd.f32 %v684, %v874
    %v901 = vadd.f32 %v685, %v875
    %v902 = vadd.f32 %v686, %v876
    %v903 = vadd.f32 %v687, %v877
    %v904 = vadd.f32 %v688, %v878
    %v905 = vadd.f32 %v689, %v879
    %v906 = vadd.f32 %v690, %v880
    %v907 = vadd.f32 %v691, %v881
    %v908 = vadd.f32 %v692, %v882
    %v909 = vadd.f32 %v693, %v883
    %v910 = vadd.f32 %v694, %v884
    %v911 = vadd.f32 %v695, %v885
    %v912 = vadd.f32 %v696, %v886
    %v913 = vadd.f32 %v697, %v887
    %v914 = vadd.f32 %v698, %v888
    %v915 = vadd.f32 %v699, %v889
    %v916 = vadd.f32 %v700, %v890
    %v917 = vadd.f32 %v701, %v891
    %v918 = vadd.f32 %v702, %v892
    %v919 = vadd.f32 %v703, %v893
    %v920 = vadd.f32 %v704, %v894
    %v921 = vadd.f32 %v705, %v895
    %v922 = vadd.f32 %v706, %v896
    %s923 = sld [smem:[#allocation2 + $0x1]]
    %v924 = vstv %s923
    %v925 = vmul.f32 %v924, %v27
    %v926 = vmul.f32 %v924, %v28
    %v927 = vmul.f32 %v924, %v29
    %v928 = vmul.f32 %v924, %v30
    %v929 = vmul.f32 %v924, %v31
    %v930 = vmul.f32 %v924, %v32
    %v931 = vmul.f32 %v924, %v33
    %v932 = vmul.f32 %v924, %v34
    %v933 = vmul.f32 %v924, %v35
    %v934 = vmul.f32 %v924, %v36
    %v935 = vmul.f32 %v924, %v37
    %v936 = vmul.f32 %v924, %v38
    %v937 = vmul.f32 %v924, %v39
    %v938 = vmul.f32 %v924, %v40
    %v939 = vmul.f32 %v924, %v41
    %v940 = vmul.f32 %v924, %v42
    %v941 = vmul.f32 %v924, %v43
    %v942 = vmul.f32 %v924, %v44
    %v943 = vmul.f32 %v924, %v45
    %v944 = vmul.f32 %v924, %v46
    %v945 = vmul.f32 %v924, %v47
    %v946 = vmul.f32 %v924, %v48
    %v947 = vmul.f32 %v924, %v49
    %v948 = vmul.f32 %v924, %v50
    %v949 = vmul.f32 %v924, %v51
    %v950 = vmul.f32 %v924, %v52
    %vm977 = vcmask 1046528
    %v978 = vrot.slane %v925, 1
    %v979 = vrot.slane %v926, 1
    %v980 = vsel %vm977, %v978, %v979
    %v981 = vrot.slane %v927, 1
    %v982 = vrot.slane %v928, 1
    %v983 = vsel %vm977, %v981, %v982
    %v984 = vrot.slane %v929, 1
    %v985 = vrot.slane %v930, 1
    %v986 = vsel %vm977, %v984, %v985
    %v987 = vrot.slane %v931, 1
    %v988 = vrot.slane %v932, 1
    %v989 = vsel %vm977, %v987, %v988
    %v990 = vrot.slane %v933, 1
    %v991 = vrot.slane %v934, 1
    %v992 = vsel %vm977, %v990, %v991
    %v993 = vrot.slane %v935, 1
    %v994 = vrot.slane %v936, 1
    %v995 = vsel %vm977, %v993, %v994
    %v996 = vrot.slane %v937, 1
    %v997 = vrot.slane %v938, 1
    %v998 = vsel %vm977, %v996, %v997
    %v999 = vrot.slane %v939, 1
    %v1000 = vrot.slane %v940, 1
    %v1001 = vsel %vm977, %v999, %v1000
    %v1002 = vrot.slane %v941, 1
    %v1003 = vrot.slane %v942, 1
    %v1004 = vsel %vm977, %v1002, %v1003
    %v1005 = vrot.slane %v943, 1
    %v1006 = vrot.slane %v944, 1
    %v1007 = vsel %vm977, %v1005, %v1006
    %v1008 = vrot.slane %v945, 1
    %v1009 = vrot.slane %v946, 1
    %v1010 = vsel %vm977, %v1008, %v1009
    %v1011 = vrot.slane %v947, 1
    %v1012 = vrot.slane %v948, 1
    %v1013 = vsel %vm977, %v1011, %v1012
    %v1014 = vrot.slane %v949, 1
    %v1015 = vrot.slane %v950, 1
    %v1016 = vsel %vm977, %v1014, %v1015
    %v1043 = vadd.f32 %v735, %v980
    %v1044 = vadd.f32 %v736, %v979
    %v1045 = vadd.f32 %v737, %v983
    %v1046 = vadd.f32 %v738, %v982
    %v1047 = vadd.f32 %v739, %v986
    %v1048 = vadd.f32 %v740, %v985
    %v1049 = vadd.f32 %v741, %v989
    %v1050 = vadd.f32 %v742, %v988
    %v1051 = vadd.f32 %v743, %v992
    %v1052 = vadd.f32 %v744, %v991
    %v1053 = vadd.f32 %v745, %v995
    %v1054 = vadd.f32 %v746, %v994
    %v1055 = vadd.f32 %v747, %v998
    %v1056 = vadd.f32 %v748, %v997
    %v1057 = vadd.f32 %v749, %v1001
    %v1058 = vadd.f32 %v750, %v1000
    %v1059 = vadd.f32 %v751, %v1004
    %v1060 = vadd.f32 %v752, %v1003
    %v1061 = vadd.f32 %v753, %v1007
    %v1062 = vadd.f32 %v754, %v1006
    %v1063 = vadd.f32 %v755, %v1010
    %v1064 = vadd.f32 %v756, %v1009
    %v1065 = vadd.f32 %v757, %v1013
    %v1066 = vadd.f32 %v758, %v1012
    %v1067 = vadd.f32 %v759, %v1016
    %v1068 = vadd.f32 %v760, %v1015
    %s1069 = sld [smem:[#allocation2 + $0x11]]
    %v1070 = vstv %s1069
    %v1071 = vmul.f32 %v1070, %v27
    %v1072 = vmul.f32 %v1070, %v28
    %v1073 = vmul.f32 %v1070, %v29
    %v1074 = vmul.f32 %v1070, %v30
    %v1075 = vmul.f32 %v1070, %v31
    %v1076 = vmul.f32 %v1070, %v32
    %v1077 = vmul.f32 %v1070, %v33
    %v1078 = vmul.f32 %v1070, %v34
    %v1079 = vmul.f32 %v1070, %v35
    %v1080 = vmul.f32 %v1070, %v36
    %v1081 = vmul.f32 %v1070, %v37
    %v1082 = vmul.f32 %v1070, %v38
    %v1083 = vmul.f32 %v1070, %v39
    %v1084 = vmul.f32 %v1070, %v40
    %v1085 = vmul.f32 %v1070, %v41
    %v1086 = vmul.f32 %v1070, %v42
    %v1087 = vmul.f32 %v1070, %v43
    %v1088 = vmul.f32 %v1070, %v44
    %v1089 = vmul.f32 %v1070, %v45
    %v1090 = vmul.f32 %v1070, %v46
    %v1091 = vmul.f32 %v1070, %v47
    %v1092 = vmul.f32 %v1070, %v48
    %v1093 = vmul.f32 %v1070, %v49
    %v1094 = vmul.f32 %v1070, %v50
    %v1095 = vmul.f32 %v1070, %v51
    %v1096 = vmul.f32 %v1070, %v52
    %v1123 = vrot.slane %v1071, 1
    %v1124 = vrot.slane %v1072, 1
    %v1125 = vsel %vm977, %v1123, %v1124
    %v1126 = vrot.slane %v1073, 1
    %v1127 = vrot.slane %v1074, 1
    %v1128 = vsel %vm977, %v1126, %v1127
    %v1129 = vrot.slane %v1075, 1
    %v1130 = vrot.slane %v1076, 1
    %v1131 = vsel %vm977, %v1129, %v1130
    %v1132 = vrot.slane %v1077, 1
    %v1133 = vrot.slane %v1078, 1
    %v1134 = vsel %vm977, %v1132, %v1133
    %v1135 = vrot.slane %v1079, 1
    %v1136 = vrot.slane %v1080, 1
    %v1137 = vsel %vm977, %v1135, %v1136
    %v1138 = vrot.slane %v1081, 1
    %v1139 = vrot.slane %v1082, 1
    %v1140 = vsel %vm977, %v1138, %v1139
    %v1141 = vrot.slane %v1083, 1
    %v1142 = vrot.slane %v1084, 1
    %v1143 = vsel %vm977, %v1141, %v1142
    %v1144 = vrot.slane %v1085, 1
    %v1145 = vrot.slane %v1086, 1
    %v1146 = vsel %vm977, %v1144, %v1145
    %v1147 = vrot.slane %v1087, 1
    %v1148 = vrot.slane %v1088, 1
    %v1149 = vsel %vm977, %v1147, %v1148
    %v1150 = vrot.slane %v1089, 1
    %v1151 = vrot.slane %v1090, 1
    %v1152 = vsel %vm977, %v1150, %v1151
    %v1153 = vrot.slane %v1091, 1
    %v1154 = vrot.slane %v1092, 1
    %v1155 = vsel %vm977, %v1153, %v1154
    %v1156 = vrot.slane %v1093, 1
    %v1157 = vrot.slane %v1094, 1
    %v1158 = vsel %vm977, %v1156, %v1157
    %v1159 = vrot.slane %v1095, 1
    %v1160 = vrot.slane %v1096, 1
    %v1161 = vsel %vm977, %v1159, %v1160
    %v1188 = vadd.f32 %v789, %v1125
    %v1189 = vadd.f32 %v790, %v1124
    %v1190 = vadd.f32 %v791, %v1128
    %v1191 = vadd.f32 %v792, %v1127
    %v1192 = vadd.f32 %v793, %v1131
    %v1193 = vadd.f32 %v794, %v1130
    %v1194 = vadd.f32 %v795, %v1134
    %v1195 = vadd.f32 %v796, %v1133
    %v1196 = vadd.f32 %v797, %v1137
    %v1197 = vadd.f32 %v798, %v1136
    %v1198 = vadd.f32 %v799, %v1140
    %v1199 = vadd.f32 %v800, %v1139
    %v1200 = vadd.f32 %v801, %v1143
    %v1201 = vadd.f32 %v802, %v1142
    %v1202 = vadd.f32 %v803, %v1146
    %v1203 = vadd.f32 %v804, %v1145
    %v1204 = vadd.f32 %v805, %v1149
    %v1205 = vadd.f32 %v806, %v1148
    %v1206 = vadd.f32 %v807, %v1152
    %v1207 = vadd.f32 %v808, %v1151
    %v1208 = vadd.f32 %v809, %v1155
    %v1209 = vadd.f32 %v810, %v1154
    %v1210 = vadd.f32 %v811, %v1158
    %v1211 = vadd.f32 %v812, %v1157
    %v1212 = vadd.f32 %v813, %v1161
    %v1213 = vadd.f32 %v814, %v1160
    %s1214 = sld [smem:[#allocation2 + $0x21]]
    %v1215 = vstv %s1214
    %v1216 = vmul.f32 %v1215, %v27
    %v1217 = vmul.f32 %v1215, %v28
    %v1218 = vmul.f32 %v1215, %v29
    %v1219 = vmul.f32 %v1215, %v30
    %v1220 = vmul.f32 %v1215, %v31
    %v1221 = vmul.f32 %v1215, %v32
    %v1222 = vmul.f32 %v1215, %v33
    %v1223 = vmul.f32 %v1215, %v34
    %v1224 = vmul.f32 %v1215, %v35
    %v1225 = vmul.f32 %v1215, %v36
    %v1226 = vmul.f32 %v1215, %v37
    %v1227 = vmul.f32 %v1215, %v38
    %v1228 = vmul.f32 %v1215, %v39
    %v1229 = vmul.f32 %v1215, %v40
    %v1230 = vmul.f32 %v1215, %v41
    %v1231 = vmul.f32 %v1215, %v42
    %v1232 = vmul.f32 %v1215, %v43
    %v1233 = vmul.f32 %v1215, %v44
    %v1234 = vmul.f32 %v1215, %v45
    %v1235 = vmul.f32 %v1215, %v46
    %v1236 = vmul.f32 %v1215, %v47
    %v1237 = vmul.f32 %v1215, %v48
    %v1238 = vmul.f32 %v1215, %v49
    %v1239 = vmul.f32 %v1215, %v50
    %v1240 = vmul.f32 %v1215, %v51
    %v1241 = vmul.f32 %v1215, %v52
    %v1268 = vrot.slane %v1216, 1
    %v1269 = vrot.slane %v1217, 1
    %v1270 = vsel %vm977, %v1268, %v1269
    %v1271 = vrot.slane %v1218, 1
    %v1272 = vrot.slane %v1219, 1
    %v1273 = vsel %vm977, %v1271, %v1272
    %v1274 = vrot.slane %v1220, 1
    %v1275 = vrot.slane %v1221, 1
    %v1276 = vsel %vm977, %v1274, %v1275
    %v1277 = vrot.slane %v1222, 1
    %v1278 = vrot.slane %v1223, 1
    %v1279 = vsel %vm977, %v1277, %v1278
    %v1280 = vrot.slane %v1224, 1
    %v1281 = vrot.slane %v1225, 1
    %v1282 = vsel %vm977, %v1280, %v1281
    %v1283 = vrot.slane %v1226, 1
    %v1284 = vrot.slane %v1227, 1
    %v1285 = vsel %vm977, %v1283, %v1284
    %v1286 = vrot.slane %v1228, 1
    %v1287 = vrot.slane %v1229, 1
    %v1288 = vsel %vm977, %v1286, %v1287
    %v1289 = vrot.slane %v1230, 1
    %v1290 = vrot.slane %v1231, 1
    %v1291 = vsel %vm977, %v1289, %v1290
    %v1292 = vrot.slane %v1232, 1
    %v1293 = vrot.slane %v1233, 1
    %v1294 = vsel %vm977, %v1292, %v1293
    %v1295 = vrot.slane %v1234, 1
    %v1296 = vrot.slane %v1235, 1
    %v1297 = vsel %vm977, %v1295, %v1296
    %v1298 = vrot.slane %v1236, 1
    %v1299 = vrot.slane %v1237, 1
    %v1300 = vsel %vm977, %v1298, %v1299
    %v1301 = vrot.slane %v1238, 1
    %v1302 = vrot.slane %v1239, 1
    %v1303 = vsel %vm977, %v1301, %v1302
    %v1304 = vrot.slane %v1240, 1
    %v1305 = vrot.slane %v1241, 1
    %v1306 = vsel %vm977, %v1304, %v1305
    %v1333 = vadd.f32 %v843, %v1270
    %v1334 = vadd.f32 %v844, %v1269
    %v1335 = vadd.f32 %v845, %v1273
    %v1336 = vadd.f32 %v846, %v1272
    %v1337 = vadd.f32 %v847, %v1276
    %v1338 = vadd.f32 %v848, %v1275
    %v1339 = vadd.f32 %v849, %v1279
    %v1340 = vadd.f32 %v850, %v1278
    %v1341 = vadd.f32 %v851, %v1282
    %v1342 = vadd.f32 %v852, %v1281
    %v1343 = vadd.f32 %v853, %v1285
    %v1344 = vadd.f32 %v854, %v1284
    %v1345 = vadd.f32 %v855, %v1288
    %v1346 = vadd.f32 %v856, %v1287
    %v1347 = vadd.f32 %v857, %v1291
    %v1348 = vadd.f32 %v858, %v1290
    %v1349 = vadd.f32 %v859, %v1294
    %v1350 = vadd.f32 %v860, %v1293
    %v1351 = vadd.f32 %v861, %v1297
    %v1352 = vadd.f32 %v862, %v1296
    %v1353 = vadd.f32 %v863, %v1300
    %v1354 = vadd.f32 %v864, %v1299
    %v1355 = vadd.f32 %v865, %v1303
    %v1356 = vadd.f32 %v866, %v1302
    %v1357 = vadd.f32 %v867, %v1306
    %v1358 = vadd.f32 %v868, %v1305
    %s1359 = sld [smem:[#allocation2 + $0x31]]
    %v1360 = vstv %s1359
    %v1361 = vmul.f32 %v1360, %v27
    %v1362 = vmul.f32 %v1360, %v28
    %v1363 = vmul.f32 %v1360, %v29
    %v1364 = vmul.f32 %v1360, %v30
    %v1365 = vmul.f32 %v1360, %v31
    %v1366 = vmul.f32 %v1360, %v32
    %v1367 = vmul.f32 %v1360, %v33
    %v1368 = vmul.f32 %v1360, %v34
    %v1369 = vmul.f32 %v1360, %v35
    %v1370 = vmul.f32 %v1360, %v36
    %v1371 = vmul.f32 %v1360, %v37
    %v1372 = vmul.f32 %v1360, %v38
    %v1373 = vmul.f32 %v1360, %v39
    %v1374 = vmul.f32 %v1360, %v40
    %v1375 = vmul.f32 %v1360, %v41
    %v1376 = vmul.f32 %v1360, %v42
    %v1377 = vmul.f32 %v1360, %v43
    %v1378 = vmul.f32 %v1360, %v44
    %v1379 = vmul.f32 %v1360, %v45
    %v1380 = vmul.f32 %v1360, %v46
    %v1381 = vmul.f32 %v1360, %v47
    %v1382 = vmul.f32 %v1360, %v48
    %v1383 = vmul.f32 %v1360, %v49
    %v1384 = vmul.f32 %v1360, %v50
    %v1385 = vmul.f32 %v1360, %v51
    %v1386 = vmul.f32 %v1360, %v52
    %v1413 = vrot.slane %v1361, 1
    %v1414 = vrot.slane %v1362, 1
    %v1415 = vsel %vm977, %v1413, %v1414
    %v1416 = vrot.slane %v1363, 1
    %v1417 = vrot.slane %v1364, 1
    %v1418 = vsel %vm977, %v1416, %v1417
    %v1419 = vrot.slane %v1365, 1
    %v1420 = vrot.slane %v1366, 1
    %v1421 = vsel %vm977, %v1419, %v1420
    %v1422 = vrot.slane %v1367, 1
    %v1423 = vrot.slane %v1368, 1
    %v1424 = vsel %vm977, %v1422, %v1423
    %v1425 = vrot.slane %v1369, 1
    %v1426 = vrot.slane %v1370, 1
    %v1427 = vsel %vm977, %v1425, %v1426
    %v1428 = vrot.slane %v1371, 1
    %v1429 = vrot.slane %v1372, 1
    %v1430 = vsel %vm977, %v1428, %v1429
    %v1431 = vrot.slane %v1373, 1
    %v1432 = vrot.slane %v1374, 1
    %v1433 = vsel %vm977, %v1431, %v1432
    %v1434 = vrot.slane %v1375, 1
    %v1435 = vrot.slane %v1376, 1
    %v1436 = vsel %vm977, %v1434, %v1435
    %v1437 = vrot.slane %v1377, 1
    %v1438 = vrot.slane %v1378, 1
    %v1439 = vsel %vm977, %v1437, %v1438
    %v1440 = vrot.slane %v1379, 1
    %v1441 = vrot.slane %v1380, 1
    %v1442 = vsel %vm977, %v1440, %v1441
    %v1443 = vrot.slane %v1381, 1
    %v1444 = vrot.slane %v1382, 1
    %v1445 = vsel %vm977, %v1443, %v1444
    %v1446 = vrot.slane %v1383, 1
    %v1447 = vrot.slane %v1384, 1
    %v1448 = vsel %vm977, %v1446, %v1447
    %v1449 = vrot.slane %v1385, 1
    %v1450 = vrot.slane %v1386, 1
    %v1451 = vsel %vm977, %v1449, %v1450
    %v1478 = vadd.f32 %v897, %v1415
    %v1479 = vadd.f32 %v898, %v1414
    %v1480 = vadd.f32 %v899, %v1418
    %v1481 = vadd.f32 %v900, %v1417
    %v1482 = vadd.f32 %v901, %v1421
    %v1483 = vadd.f32 %v902, %v1420
    %v1484 = vadd.f32 %v903, %v1424
    %v1485 = vadd.f32 %v904, %v1423
    %v1486 = vadd.f32 %v905, %v1427
    %v1487 = vadd.f32 %v906, %v1426
    %v1488 = vadd.f32 %v907, %v1430
    %v1489 = vadd.f32 %v908, %v1429
    %v1490 = vadd.f32 %v909, %v1433
    %v1491 = vadd.f32 %v910, %v1432
    %v1492 = vadd.f32 %v911, %v1436
    %v1493 = vadd.f32 %v912, %v1435
    %v1494 = vadd.f32 %v913, %v1439
    %v1495 = vadd.f32 %v914, %v1438
    %v1496 = vadd.f32 %v915, %v1442
    %v1497 = vadd.f32 %v916, %v1441
    %v1498 = vadd.f32 %v917, %v1445
    %v1499 = vadd.f32 %v918, %v1444
    %v1500 = vadd.f32 %v919, %v1448
    %v1501 = vadd.f32 %v920, %v1447
    %v1502 = vadd.f32 %v921, %v1451
    %v1503 = vadd.f32 %v922, %v1450
    %s1504 = sld [smem:[#allocation2 + $0x5]]
    %v1505 = vstv %s1504
    %v1506 = vmul.f32 %v1505, %v29
    %v1507 = vmul.f32 %v1505, %v30
    %v1508 = vmul.f32 %v1505, %v31
    %v1509 = vmul.f32 %v1505, %v32
    %v1510 = vmul.f32 %v1505, %v33
    %v1511 = vmul.f32 %v1505, %v34
    %v1512 = vmul.f32 %v1505, %v35
    %v1513 = vmul.f32 %v1505, %v36
    %v1514 = vmul.f32 %v1505, %v37
    %v1515 = vmul.f32 %v1505, %v38
    %v1516 = vmul.f32 %v1505, %v39
    %v1517 = vmul.f32 %v1505, %v40
    %v1518 = vmul.f32 %v1505, %v41
    %v1519 = vmul.f32 %v1505, %v42
    %v1520 = vmul.f32 %v1505, %v43
    %v1521 = vmul.f32 %v1505, %v44
    %v1522 = vmul.f32 %v1505, %v45
    %v1523 = vmul.f32 %v1505, %v46
    %v1524 = vmul.f32 %v1505, %v47
    %v1525 = vmul.f32 %v1505, %v48
    %v1526 = vmul.f32 %v1505, %v49
    %v1527 = vmul.f32 %v1505, %v50
    %v1528 = vmul.f32 %v1505, %v51
    %v1529 = vmul.f32 %v1505, %v52
    %v1530 = vmul.f32 %v1505, %v53
    %v1531 = vmul.f32 %v1505, %v54
    %v1558 = vrot.slane %v1506, 1
    %v1559 = vrot.slane %v1507, 1
    %v1560 = vsel %vm977, %v1558, %v1559
    %v1561 = vrot.slane %v1508, 1
    %v1562 = vrot.slane %v1509, 1
    %v1563 = vsel %vm977, %v1561, %v1562
    %v1564 = vrot.slane %v1510, 1
    %v1565 = vrot.slane %v1511, 1
    %v1566 = vsel %vm977, %v1564, %v1565
    %v1567 = vrot.slane %v1512, 1
    %v1568 = vrot.slane %v1513, 1
    %v1569 = vsel %vm977, %v1567, %v1568
    %v1570 = vrot.slane %v1514, 1
    %v1571 = vrot.slane %v1515, 1
    %v1572 = vsel %vm977, %v1570, %v1571
    %v1573 = vrot.slane %v1516, 1
    %v1574 = vrot.slane %v1517, 1
    %v1575 = vsel %vm977, %v1573, %v1574
    %v1576 = vrot.slane %v1518, 1
    %v1577 = vrot.slane %v1519, 1
    %v1578 = vsel %vm977, %v1576, %v1577
    %v1579 = vrot.slane %v1520, 1
    %v1580 = vrot.slane %v1521, 1
    %v1581 = vsel %vm977, %v1579, %v1580
    %v1582 = vrot.slane %v1522, 1
    %v1583 = vrot.slane %v1523, 1
    %v1584 = vsel %vm977, %v1582, %v1583
    %v1585 = vrot.slane %v1524, 1
    %v1586 = vrot.slane %v1525, 1
    %v1587 = vsel %vm977, %v1585, %v1586
    %v1588 = vrot.slane %v1526, 1
    %v1589 = vrot.slane %v1527, 1
    %v1590 = vsel %vm977, %v1588, %v1589
    %v1591 = vrot.slane %v1528, 1
    %v1592 = vrot.slane %v1529, 1
    %v1593 = vsel %vm977, %v1591, %v1592
    %v1594 = vrot.slane %v1530, 1
    %v1595 = vrot.slane %v1531, 1
    %v1596 = vsel %vm977, %v1594, %v1595
    %v1623 = vadd.f32 %v1043, %v1560
    %v1624 = vadd.f32 %v1044, %v1559
    %v1625 = vadd.f32 %v1045, %v1563
    %v1626 = vadd.f32 %v1046, %v1562
    %v1627 = vadd.f32 %v1047, %v1566
    %v1628 = vadd.f32 %v1048, %v1565
    %v1629 = vadd.f32 %v1049, %v1569
    %v1630 = vadd.f32 %v1050, %v1568
    %v1631 = vadd.f32 %v1051, %v1572
    %v1632 = vadd.f32 %v1052, %v1571
    %v1633 = vadd.f32 %v1053, %v1575
    %v1634 = vadd.f32 %v1054, %v1574
    %v1635 = vadd.f32 %v1055, %v1578
    %v1636 = vadd.f32 %v1056, %v1577
    %v1637 = vadd.f32 %v1057, %v1581
    %v1638 = vadd.f32 %v1058, %v1580
    %v1639 = vadd.f32 %v1059, %v1584
    %v1640 = vadd.f32 %v1060, %v1583
    %v1641 = vadd.f32 %v1061, %v1587
    %v1642 = vadd.f32 %v1062, %v1586
    %v1643 = vadd.f32 %v1063, %v1590
    %v1644 = vadd.f32 %v1064, %v1589
    %v1645 = vadd.f32 %v1065, %v1593
    %v1646 = vadd.f32 %v1066, %v1592
    %v1647 = vadd.f32 %v1067, %v1596
    %v1648 = vadd.f32 %v1068, %v1595
    %s1649 = sld [smem:[#allocation2 + $0x15]]
    %v1650 = vstv %s1649
    %v1651 = vmul.f32 %v1650, %v29
    %v1652 = vmul.f32 %v1650, %v30
    %v1653 = vmul.f32 %v1650, %v31
    %v1654 = vmul.f32 %v1650, %v32
    %v1655 = vmul.f32 %v1650, %v33
    %v1656 = vmul.f32 %v1650, %v34
    %v1657 = vmul.f32 %v1650, %v35
    %v1658 = vmul.f32 %v1650, %v36
    %v1659 = vmul.f32 %v1650, %v37
    %v1660 = vmul.f32 %v1650, %v38
    %v1661 = vmul.f32 %v1650, %v39
    %v1662 = vmul.f32 %v1650, %v40
    %v1663 = vmul.f32 %v1650, %v41
    %v1664 = vmul.f32 %v1650, %v42
    %v1665 = vmul.f32 %v1650, %v43
    %v1666 = vmul.f32 %v1650, %v44
    %v1667 = vmul.f32 %v1650, %v45
    %v1668 = vmul.f32 %v1650, %v46
    %v1669 = vmul.f32 %v1650, %v47
    %v1670 = vmul.f32 %v1650, %v48
    %v1671 = vmul.f32 %v1650, %v49
    %v1672 = vmul.f32 %v1650, %v50
    %v1673 = vmul.f32 %v1650, %v51
    %v1674 = vmul.f32 %v1650, %v52
    %v1675 = vmul.f32 %v1650, %v53
    %v1676 = vmul.f32 %v1650, %v54
    %v1703 = vrot.slane %v1651, 1
    %v1704 = vrot.slane %v1652, 1
    %v1705 = vsel %vm977, %v1703, %v1704
    %v1706 = vrot.slane %v1653, 1
    %v1707 = vrot.slane %v1654, 1
    %v1708 = vsel %vm977, %v1706, %v1707
    %v1709 = vrot.slane %v1655, 1
    %v1710 = vrot.slane %v1656, 1
    %v1711 = vsel %vm977, %v1709, %v1710
    %v1712 = vrot.slane %v1657, 1
    %v1713 = vrot.slane %v1658, 1
    %v1714 = vsel %vm977, %v1712, %v1713
    %v1715 = vrot.slane %v1659, 1
    %v1716 = vrot.slane %v1660, 1
    %v1717 = vsel %vm977, %v1715, %v1716
    %v1718 = vrot.slane %v1661, 1
    %v1719 = vrot.slane %v1662, 1
    %v1720 = vsel %vm977, %v1718, %v1719
    %v1721 = vrot.slane %v1663, 1
    %v1722 = vrot.slane %v1664, 1
    %v1723 = vsel %vm977, %v1721, %v1722
    %v1724 = vrot.slane %v1665, 1
    %v1725 = vrot.slane %v1666, 1
    %v1726 = vsel %vm977, %v1724, %v1725
    %v1727 = vrot.slane %v1667, 1
    %v1728 = vrot.slane %v1668, 1
    %v1729 = vsel %vm977, %v1727, %v1728
    %v1730 = vrot.slane %v1669, 1
    %v1731 = vrot.slane %v1670, 1
    %v1732 = vsel %vm977, %v1730, %v1731
    %v1733 = vrot.slane %v1671, 1
    %v1734 = vrot.slane %v1672, 1
    %v1735 = vsel %vm977, %v1733, %v1734
    %v1736 = vrot.slane %v1673, 1
    %v1737 = vrot.slane %v1674, 1
    %v1738 = vsel %vm977, %v1736, %v1737
    %v1739 = vrot.slane %v1675, 1
    %v1740 = vrot.slane %v1676, 1
    %v1741 = vsel %vm977, %v1739, %v1740
    %v1768 = vadd.f32 %v1188, %v1705
    %v1769 = vadd.f32 %v1189, %v1704
    %v1770 = vadd.f32 %v1190, %v1708
    %v1771 = vadd.f32 %v1191, %v1707
    %v1772 = vadd.f32 %v1192, %v1711
    %v1773 = vadd.f32 %v1193, %v1710
    %v1774 = vadd.f32 %v1194, %v1714
    %v1775 = vadd.f32 %v1195, %v1713
    %v1776 = vadd.f32 %v1196, %v1717
    %v1777 = vadd.f32 %v1197, %v1716
    %v1778 = vadd.f32 %v1198, %v1720
    %v1779 = vadd.f32 %v1199, %v1719
    %v1780 = vadd.f32 %v1200, %v1723
    %v1781 = vadd.f32 %v1201, %v1722
    %v1782 = vadd.f32 %v1202, %v1726
    %v1783 = vadd.f32 %v1203, %v1725
    %v1784 = vadd.f32 %v1204, %v1729
    %v1785 = vadd.f32 %v1205, %v1728
    %v1786 = vadd.f32 %v1206, %v1732
    %v1787 = vadd.f32 %v1207, %v1731
    %v1788 = vadd.f32 %v1208, %v1735
    %v1789 = vadd.f32 %v1209, %v1734
    %v1790 = vadd.f32 %v1210, %v1738
    %v1791 = vadd.f32 %v1211, %v1737
    %v1792 = vadd.f32 %v1212, %v1741
    %v1793 = vadd.f32 %v1213, %v1740
    %s1794 = sld [smem:[#allocation2 + $0x25]]
    %v1795 = vstv %s1794
    %v1796 = vmul.f32 %v1795, %v29
    %v1797 = vmul.f32 %v1795, %v30
    %v1798 = vmul.f32 %v1795, %v31
    %v1799 = vmul.f32 %v1795, %v32
    %v1800 = vmul.f32 %v1795, %v33
    %v1801 = vmul.f32 %v1795, %v34
    %v1802 = vmul.f32 %v1795, %v35
    %v1803 = vmul.f32 %v1795, %v36
    %v1804 = vmul.f32 %v1795, %v37
    %v1805 = vmul.f32 %v1795, %v38
    %v1806 = vmul.f32 %v1795, %v39
    %v1807 = vmul.f32 %v1795, %v40
    %v1808 = vmul.f32 %v1795, %v41
    %v1809 = vmul.f32 %v1795, %v42
    %v1810 = vmul.f32 %v1795, %v43
    %v1811 = vmul.f32 %v1795, %v44
    %v1812 = vmul.f32 %v1795, %v45
    %v1813 = vmul.f32 %v1795, %v46
    %v1814 = vmul.f32 %v1795, %v47
    %v1815 = vmul.f32 %v1795, %v48
    %v1816 = vmul.f32 %v1795, %v49
    %v1817 = vmul.f32 %v1795, %v50
    %v1818 = vmul.f32 %v1795, %v51
    %v1819 = vmul.f32 %v1795, %v52
    %v1820 = vmul.f32 %v1795, %v53
    %v1821 = vmul.f32 %v1795, %v54
    %v1848 = vrot.slane %v1796, 1
    %v1849 = vrot.slane %v1797, 1
    %v1850 = vsel %vm977, %v1848, %v1849
    %v1851 = vrot.slane %v1798, 1
    %v1852 = vrot.slane %v1799, 1
    %v1853 = vsel %vm977, %v1851, %v1852
    %v1854 = vrot.slane %v1800, 1
    %v1855 = vrot.slane %v1801, 1
    %v1856 = vsel %vm977, %v1854, %v1855
    %v1857 = vrot.slane %v1802, 1
    %v1858 = vrot.slane %v1803, 1
    %v1859 = vsel %vm977, %v1857, %v1858
    %v1860 = vrot.slane %v1804, 1
    %v1861 = vrot.slane %v1805, 1
    %v1862 = vsel %vm977, %v1860, %v1861
    %v1863 = vrot.slane %v1806, 1
    %v1864 = vrot.slane %v1807, 1
    %v1865 = vsel %vm977, %v1863, %v1864
    %v1866 = vrot.slane %v1808, 1
    %v1867 = vrot.slane %v1809, 1
    %v1868 = vsel %vm977, %v1866, %v1867
    %v1869 = vrot.slane %v1810, 1
    %v1870 = vrot.slane %v1811, 1
    %v1871 = vsel %vm977, %v1869, %v1870
    %v1872 = vrot.slane %v1812, 1
    %v1873 = vrot.slane %v1813, 1
    %v1874 = vsel %vm977, %v1872, %v1873
    %v1875 = vrot.slane %v1814, 1
    %v1876 = vrot.slane %v1815, 1
    %v1877 = vsel %vm977, %v1875, %v1876
    %v1878 = vrot.slane %v1816, 1
    %v1879 = vrot.slane %v1817, 1
    %v1880 = vsel %vm977, %v1878, %v1879
    %v1881 = vrot.slane %v1818, 1
    %v1882 = vrot.slane %v1819, 1
    %v1883 = vsel %vm977, %v1881, %v1882
    %v1884 = vrot.slane %v1820, 1
    %v1885 = vrot.slane %v1821, 1
    %v1886 = vsel %vm977, %v1884, %v1885
    %v1913 = vadd.f32 %v1333, %v1850
    %v1914 = vadd.f32 %v1334, %v1849
    %v1915 = vadd.f32 %v1335, %v1853
    %v1916 = vadd.f32 %v1336, %v1852
    %v1917 = vadd.f32 %v1337, %v1856
    %v1918 = vadd.f32 %v1338, %v1855
    %v1919 = vadd.f32 %v1339, %v1859
    %v1920 = vadd.f32 %v1340, %v1858
    %v1921 = vadd.f32 %v1341, %v1862
    %v1922 = vadd.f32 %v1342, %v1861
    %v1923 = vadd.f32 %v1343, %v1865
    %v1924 = vadd.f32 %v1344, %v1864
    %v1925 = vadd.f32 %v1345, %v1868
    %v1926 = vadd.f32 %v1346, %v1867
    %v1927 = vadd.f32 %v1347, %v1871
    %v1928 = vadd.f32 %v1348, %v1870
    %v1929 = vadd.f32 %v1349, %v1874
    %v1930 = vadd.f32 %v1350, %v1873
    %v1931 = vadd.f32 %v1351, %v1877
    %v1932 = vadd.f32 %v1352, %v1876
    %v1933 = vadd.f32 %v1353, %v1880
    %v1934 = vadd.f32 %v1354, %v1879
    %v1935 = vadd.f32 %v1355, %v1883
    %v1936 = vadd.f32 %v1356, %v1882
    %v1937 = vadd.f32 %v1357, %v1886
    %v1938 = vadd.f32 %v1358, %v1885
    %s1939 = sld [smem:[#allocation2 + $0x35]]
    %v1940 = vstv %s1939
    %v1941 = vmul.f32 %v1940, %v29
    %v1942 = vmul.f32 %v1940, %v30
    %v1943 = vmul.f32 %v1940, %v31
    %v1944 = vmul.f32 %v1940, %v32
    %v1945 = vmul.f32 %v1940, %v33
    %v1946 = vmul.f32 %v1940, %v34
    %v1947 = vmul.f32 %v1940, %v35
    %v1948 = vmul.f32 %v1940, %v36
    %v1949 = vmul.f32 %v1940, %v37
    %v1950 = vmul.f32 %v1940, %v38
    %v1951 = vmul.f32 %v1940, %v39
    %v1952 = vmul.f32 %v1940, %v40
    %v1953 = vmul.f32 %v1940, %v41
    %v1954 = vmul.f32 %v1940, %v42
    %v1955 = vmul.f32 %v1940, %v43
    %v1956 = vmul.f32 %v1940, %v44
    %v1957 = vmul.f32 %v1940, %v45
    %v1958 = vmul.f32 %v1940, %v46
    %v1959 = vmul.f32 %v1940, %v47
    %v1960 = vmul.f32 %v1940, %v48
    %v1961 = vmul.f32 %v1940, %v49
    %v1962 = vmul.f32 %v1940, %v50
    %v1963 = vmul.f32 %v1940, %v51
    %v1964 = vmul.f32 %v1940, %v52
    %v1965 = vmul.f32 %v1940, %v53
    %v1966 = vmul.f32 %v1940, %v54
    %v1993 = vrot.slane %v1941, 1
    %v1994 = vrot.slane %v1942, 1
    %v1995 = vsel %vm977, %v1993, %v1994
    %v1996 = vrot.slane %v1943, 1
    %v1997 = vrot.slane %v1944, 1
    %v1998 = vsel %vm977, %v1996, %v1997
    %v1999 = vrot.slane %v1945, 1
    %v2000 = vrot.slane %v1946, 1
    %v2001 = vsel %vm977, %v1999, %v2000
    %v2002 = vrot.slane %v1947, 1
    %v2003 = vrot.slane %v1948, 1
    %v2004 = vsel %vm977, %v2002, %v2003
    %v2005 = vrot.slane %v1949, 1
    %v2006 = vrot.slane %v1950, 1
    %v2007 = vsel %vm977, %v2005, %v2006
    %v2008 = vrot.slane %v1951, 1
    %v2009 = vrot.slane %v1952, 1
    %v2010 = vsel %vm977, %v2008, %v2009
    %v2011 = vrot.slane %v1953, 1
    %v2012 = vrot.slane %v1954, 1
    %v2013 = vsel %vm977, %v2011, %v2012
    %v2014 = vrot.slane %v1955, 1
    %v2015 = vrot.slane %v1956, 1
    %v2016 = vsel %vm977, %v2014, %v2015
    %v2017 = vrot.slane %v1957, 1
    %v2018 = vrot.slane %v1958, 1
    %v2019 = vsel %vm977, %v2017, %v2018
    %v2020 = vrot.slane %v1959, 1
    %v2021 = vrot.slane %v1960, 1
    %v2022 = vsel %vm977, %v2020, %v2021
    %v2023 = vrot.slane %v1961, 1
    %v2024 = vrot.slane %v1962, 1
    %v2025 = vsel %vm977, %v2023, %v2024
    %v2026 = vrot.slane %v1963, 1
    %v2027 = vrot.slane %v1964, 1
    %v2028 = vsel %vm977, %v2026, %v2027
    %v2029 = vrot.slane %v1965, 1
    %v2030 = vrot.slane %v1966, 1
    %v2031 = vsel %vm977, %v2029, %v2030
    %v2058 = vadd.f32 %v1478, %v1995
    %v2059 = vadd.f32 %v1479, %v1994
    %v2060 = vadd.f32 %v1480, %v1998
    %v2061 = vadd.f32 %v1481, %v1997
    %v2062 = vadd.f32 %v1482, %v2001
    %v2063 = vadd.f32 %v1483, %v2000
    %v2064 = vadd.f32 %v1484, %v2004
    %v2065 = vadd.f32 %v1485, %v2003
    %v2066 = vadd.f32 %v1486, %v2007
    %v2067 = vadd.f32 %v1487, %v2006
    %v2068 = vadd.f32 %v1488, %v2010
    %v2069 = vadd.f32 %v1489, %v2009
    %v2070 = vadd.f32 %v1490, %v2013
    %v2071 = vadd.f32 %v1491, %v2012
    %v2072 = vadd.f32 %v1492, %v2016
    %v2073 = vadd.f32 %v1493, %v2015
    %v2074 = vadd.f32 %v1494, %v2019
    %v2075 = vadd.f32 %v1495, %v2018
    %v2076 = vadd.f32 %v1496, %v2022
    %v2077 = vadd.f32 %v1497, %v2021
    %v2078 = vadd.f32 %v1498, %v2025
    %v2079 = vadd.f32 %v1499, %v2024
    %v2080 = vadd.f32 %v1500, %v2028
    %v2081 = vadd.f32 %v1501, %v2027
    %v2082 = vadd.f32 %v1502, %v2031
    %v2083 = vadd.f32 %v1503, %v2030
    %s2084 = sld [smem:[#allocation2 + $0x9]]
    %v2085 = vstv %s2084
    %v2086 = vmul.f32 %v2085, %v31
    %v2087 = vmul.f32 %v2085, %v32
    %v2088 = vmul.f32 %v2085, %v33
    %v2089 = vmul.f32 %v2085, %v34
    %v2090 = vmul.f32 %v2085, %v35
    %v2091 = vmul.f32 %v2085, %v36
    %v2092 = vmul.f32 %v2085, %v37
    %v2093 = vmul.f32 %v2085, %v38
    %v2094 = vmul.f32 %v2085, %v39
    %v2095 = vmul.f32 %v2085, %v40
    %v2096 = vmul.f32 %v2085, %v41
    %v2097 = vmul.f32 %v2085, %v42
    %v2098 = vmul.f32 %v2085, %v43
    %v2099 = vmul.f32 %v2085, %v44
    %v2100 = vmul.f32 %v2085, %v45
    %v2101 = vmul.f32 %v2085, %v46
    %v2102 = vmul.f32 %v2085, %v47
    %v2103 = vmul.f32 %v2085, %v48
    %v2104 = vmul.f32 %v2085, %v49
    %v2105 = vmul.f32 %v2085, %v50
    %v2106 = vmul.f32 %v2085, %v51
    %v2107 = vmul.f32 %v2085, %v52
    %v2108 = vmul.f32 %v2085, %v53
    %v2109 = vmul.f32 %v2085, %v54
    %v2110 = vmul.f32 %v2085, %v55
    %v2111 = vmul.f32 %v2085, %v56
    %v2138 = vrot.slane %v2086, 1
    %v2139 = vrot.slane %v2087, 1
    %v2140 = vsel %vm977, %v2138, %v2139
    %v2141 = vrot.slane %v2088, 1
    %v2142 = vrot.slane %v2089, 1
    %v2143 = vsel %vm977, %v2141, %v2142
    %v2144 = vrot.slane %v2090, 1
    %v2145 = vrot.slane %v2091, 1
    %v2146 = vsel %vm977, %v2144, %v2145
    %v2147 = vrot.slane %v2092, 1
    %v2148 = vrot.slane %v2093, 1
    %v2149 = vsel %vm977, %v2147, %v2148
    %v2150 = vrot.slane %v2094, 1
    %v2151 = vrot.slane %v2095, 1
    %v2152 = vsel %vm977, %v2150, %v2151
    %v2153 = vrot.slane %v2096, 1
    %v2154 = vrot.slane %v2097, 1
    %v2155 = vsel %vm977, %v2153, %v2154
    %v2156 = vrot.slane %v2098, 1
    %v2157 = vrot.slane %v2099, 1
    %v2158 = vsel %vm977, %v2156, %v2157
    %v2159 = vrot.slane %v2100, 1
    %v2160 = vrot.slane %v2101, 1
    %v2161 = vsel %vm977, %v2159, %v2160
    %v2162 = vrot.slane %v2102, 1
    %v2163 = vrot.slane %v2103, 1
    %v2164 = vsel %vm977, %v2162, %v2163
    %v2165 = vrot.slane %v2104, 1
    %v2166 = vrot.slane %v2105, 1
    %v2167 = vsel %vm977, %v2165, %v2166
    %v2168 = vrot.slane %v2106, 1
    %v2169 = vrot.slane %v2107, 1
    %v2170 = vsel %vm977, %v2168, %v2169
    %v2171 = vrot.slane %v2108, 1
    %v2172 = vrot.slane %v2109, 1
    %v2173 = vsel %vm977, %v2171, %v2172
    %v2174 = vrot.slane %v2110, 1
    %v2175 = vrot.slane %v2111, 1
    %v2176 = vsel %vm977, %v2174, %v2175
    %v2203 = vadd.f32 %v1623, %v2140
    %v2204 = vadd.f32 %v1624, %v2139
    %v2205 = vadd.f32 %v1625, %v2143
    %v2206 = vadd.f32 %v1626, %v2142
    %v2207 = vadd.f32 %v1627, %v2146
    %v2208 = vadd.f32 %v1628, %v2145
    %v2209 = vadd.f32 %v1629, %v2149
    %v2210 = vadd.f32 %v1630, %v2148
    %v2211 = vadd.f32 %v1631, %v2152
    %v2212 = vadd.f32 %v1632, %v2151
    %v2213 = vadd.f32 %v1633, %v2155
    %v2214 = vadd.f32 %v1634, %v2154
    %v2215 = vadd.f32 %v1635, %v2158
    %v2216 = vadd.f32 %v1636, %v2157
    %v2217 = vadd.f32 %v1637, %v2161
    %v2218 = vadd.f32 %v1638, %v2160
    %v2219 = vadd.f32 %v1639, %v2164
    %v2220 = vadd.f32 %v1640, %v2163
    %v2221 = vadd.f32 %v1641, %v2167
    %v2222 = vadd.f32 %v1642, %v2166
    %v2223 = vadd.f32 %v1643, %v2170
    %v2224 = vadd.f32 %v1644, %v2169
    %v2225 = vadd.f32 %v1645, %v2173
    %v2226 = vadd.f32 %v1646, %v2172
    %v2227 = vadd.f32 %v1647, %v2176
    %v2228 = vadd.f32 %v1648, %v2175
    %s2229 = sld [smem:[#allocation2 + $0x19]]
    %v2230 = vstv %s2229
    %v2231 = vmul.f32 %v2230, %v31
    %v2232 = vmul.f32 %v2230, %v32
    %v2233 = vmul.f32 %v2230, %v33
    %v2234 = vmul.f32 %v2230, %v34
    %v2235 = vmul.f32 %v2230, %v35
    %v2236 = vmul.f32 %v2230, %v36
    %v2237 = vmul.f32 %v2230, %v37
    %v2238 = vmul.f32 %v2230, %v38
    %v2239 = vmul.f32 %v2230, %v39
    %v2240 = vmul.f32 %v2230, %v40
    %v2241 = vmul.f32 %v2230, %v41
    %v2242 = vmul.f32 %v2230, %v42
    %v2243 = vmul.f32 %v2230, %v43
    %v2244 = vmul.f32 %v2230, %v44
    %v2245 = vmul.f32 %v2230, %v45
    %v2246 = vmul.f32 %v2230, %v46
    %v2247 = vmul.f32 %v2230, %v47
    %v2248 = vmul.f32 %v2230, %v48
    %v2249 = vmul.f32 %v2230, %v49
    %v2250 = vmul.f32 %v2230, %v50
    %v2251 = vmul.f32 %v2230, %v51
    %v2252 = vmul.f32 %v2230, %v52
    %v2253 = vmul.f32 %v2230, %v53
    %v2254 = vmul.f32 %v2230, %v54
    %v2255 = vmul.f32 %v2230, %v55
    %v2256 = vmul.f32 %v2230, %v56
    %v2283 = vrot.slane %v2231, 1
    %v2284 = vrot.slane %v2232, 1
    %v2285 = vsel %vm977, %v2283, %v2284
    %v2286 = vrot.slane %v2233, 1
    %v2287 = vrot.slane %v2234, 1
    %v2288 = vsel %vm977, %v2286, %v2287
    %v2289 = vrot.slane %v2235, 1
    %v2290 = vrot.slane %v2236, 1
    %v2291 = vsel %vm977, %v2289, %v2290
    %v2292 = vrot.slane %v2237, 1
    %v2293 = vrot.slane %v2238, 1
    %v2294 = vsel %vm977, %v2292, %v2293
    %v2295 = vrot.slane %v2239, 1
    %v2296 = vrot.slane %v2240, 1
    %v2297 = vsel %vm977, %v2295, %v2296
    %v2298 = vrot.slane %v2241, 1
    %v2299 = vrot.slane %v2242, 1
    %v2300 = vsel %vm977, %v2298, %v2299
    %v2301 = vrot.slane %v2243, 1
    %v2302 = vrot.slane %v2244, 1
    %v2303 = vsel %vm977, %v2301, %v2302
    %v2304 = vrot.slane %v2245, 1
    %v2305 = vrot.slane %v2246, 1
    %v2306 = vsel %vm977, %v2304, %v2305
    %v2307 = vrot.slane %v2247, 1
    %v2308 = vrot.slane %v2248, 1
    %v2309 = vsel %vm977, %v2307, %v2308
    %v2310 = vrot.slane %v2249, 1
    %v2311 = vrot.slane %v2250, 1
    %v2312 = vsel %vm977, %v2310, %v2311
    %v2313 = vrot.slane %v2251, 1
    %v2314 = vrot.slane %v2252, 1
    %v2315 = vsel %vm977, %v2313, %v2314
    %v2316 = vrot.slane %v2253, 1
    %v2317 = vrot.slane %v2254, 1
    %v2318 = vsel %vm977, %v2316, %v2317
    %v2319 = vrot.slane %v2255, 1
    %v2320 = vrot.slane %v2256, 1
    %v2321 = vsel %vm977, %v2319, %v2320
    %v2348 = vadd.f32 %v1768, %v2285
    %v2349 = vadd.f32 %v1769, %v2284
    %v2350 = vadd.f32 %v1770, %v2288
    %v2351 = vadd.f32 %v1771, %v2287
    %v2352 = vadd.f32 %v1772, %v2291
    %v2353 = vadd.f32 %v1773, %v2290
    %v2354 = vadd.f32 %v1774, %v2294
    %v2355 = vadd.f32 %v1775, %v2293
    %v2356 = vadd.f32 %v1776, %v2297
    %v2357 = vadd.f32 %v1777, %v2296
    %v2358 = vadd.f32 %v1778, %v2300
    %v2359 = vadd.f32 %v1779, %v2299
    %v2360 = vadd.f32 %v1780, %v2303
    %v2361 = vadd.f32 %v1781, %v2302
    %v2362 = vadd.f32 %v1782, %v2306
    %v2363 = vadd.f32 %v1783, %v2305
    %v2364 = vadd.f32 %v1784, %v2309
    %v2365 = vadd.f32 %v1785, %v2308
    %v2366 = vadd.f32 %v1786, %v2312
    %v2367 = vadd.f32 %v1787, %v2311
    %v2368 = vadd.f32 %v1788, %v2315
    %v2369 = vadd.f32 %v1789, %v2314
    %v2370 = vadd.f32 %v1790, %v2318
    %v2371 = vadd.f32 %v1791, %v2317
    %v2372 = vadd.f32 %v1792, %v2321
    %v2373 = vadd.f32 %v1793, %v2320
    %s2374 = sld [smem:[#allocation2 + $0x29]]
    %v2375 = vstv %s2374
    %v2376 = vmul.f32 %v2375, %v31
    %v2377 = vmul.f32 %v2375, %v32
    %v2378 = vmul.f32 %v2375, %v33
    %v2379 = vmul.f32 %v2375, %v34
    %v2380 = vmul.f32 %v2375, %v35
    %v2381 = vmul.f32 %v2375, %v36
    %v2382 = vmul.f32 %v2375, %v37
    %v2383 = vmul.f32 %v2375, %v38
    %v2384 = vmul.f32 %v2375, %v39
    %v2385 = vmul.f32 %v2375, %v40
    %v2386 = vmul.f32 %v2375, %v41
    %v2387 = vmul.f32 %v2375, %v42
    %v2388 = vmul.f32 %v2375, %v43
    %v2389 = vmul.f32 %v2375, %v44
    %v2390 = vmul.f32 %v2375, %v45
    %v2391 = vmul.f32 %v2375, %v46
    %v2392 = vmul.f32 %v2375, %v47
    %v2393 = vmul.f32 %v2375, %v48
    %v2394 = vmul.f32 %v2375, %v49
    %v2395 = vmul.f32 %v2375, %v50
    %v2396 = vmul.f32 %v2375, %v51
    %v2397 = vmul.f32 %v2375, %v52
    %v2398 = vmul.f32 %v2375, %v53
    %v2399 = vmul.f32 %v2375, %v54
    %v2400 = vmul.f32 %v2375, %v55
    %v2401 = vmul.f32 %v2375, %v56
    %v2428 = vrot.slane %v2376, 1
    %v2429 = vrot.slane %v2377, 1
    %v2430 = vsel %vm977, %v2428, %v2429
    %v2431 = vrot.slane %v2378, 1
    %v2432 = vrot.slane %v2379, 1
    %v2433 = vsel %vm977, %v2431, %v2432
    %v2434 = vrot.slane %v2380, 1
    %v2435 = vrot.slane %v2381, 1
    %v2436 = vsel %vm977, %v2434, %v2435
    %v2437 = vrot.slane %v2382, 1
    %v2438 = vrot.slane %v2383, 1
    %v2439 = vsel %vm977, %v2437, %v2438
    %v2440 = vrot.slane %v2384, 1
    %v2441 = vrot.slane %v2385, 1
    %v2442 = vsel %vm977, %v2440, %v2441
    %v2443 = vrot.slane %v2386, 1
    %v2444 = vrot.slane %v2387, 1
    %v2445 = vsel %vm977, %v2443, %v2444
    %v2446 = vrot.slane %v2388, 1
    %v2447 = vrot.slane %v2389, 1
    %v2448 = vsel %vm977, %v2446, %v2447
    %v2449 = vrot.slane %v2390, 1
    %v2450 = vrot.slane %v2391, 1
    %v2451 = vsel %vm977, %v2449, %v2450
    %v2452 = vrot.slane %v2392, 1
    %v2453 = vrot.slane %v2393, 1
    %v2454 = vsel %vm977, %v2452, %v2453
    %v2455 = vrot.slane %v2394, 1
    %v2456 = vrot.slane %v2395, 1
    %v2457 = vsel %vm977, %v2455, %v2456
    %v2458 = vrot.slane %v2396, 1
    %v2459 = vrot.slane %v2397, 1
    %v2460 = vsel %vm977, %v2458, %v2459
    %v2461 = vrot.slane %v2398, 1
    %v2462 = vrot.slane %v2399, 1
    %v2463 = vsel %vm977, %v2461, %v2462
    %v2464 = vrot.slane %v2400, 1
    %v2465 = vrot.slane %v2401, 1
    %v2466 = vsel %vm977, %v2464, %v2465
    %v2493 = vadd.f32 %v1913, %v2430
    %v2494 = vadd.f32 %v1914, %v2429
    %v2495 = vadd.f32 %v1915, %v2433
    %v2496 = vadd.f32 %v1916, %v2432
    %v2497 = vadd.f32 %v1917, %v2436
    %v2498 = vadd.f32 %v1918, %v2435
    %v2499 = vadd.f32 %v1919, %v2439
    %v2500 = vadd.f32 %v1920, %v2438
    %v2501 = vadd.f32 %v1921, %v2442
    %v2502 = vadd.f32 %v1922, %v2441
    %v2503 = vadd.f32 %v1923, %v2445
    %v2504 = vadd.f32 %v1924, %v2444
    %v2505 = vadd.f32 %v1925, %v2448
    %v2506 = vadd.f32 %v1926, %v2447
    %v2507 = vadd.f32 %v1927, %v2451
    %v2508 = vadd.f32 %v1928, %v2450
    %v2509 = vadd.f32 %v1929, %v2454
    %v2510 = vadd.f32 %v1930, %v2453
    %v2511 = vadd.f32 %v1931, %v2457
    %v2512 = vadd.f32 %v1932, %v2456
    %v2513 = vadd.f32 %v1933, %v2460
    %v2514 = vadd.f32 %v1934, %v2459
    %v2515 = vadd.f32 %v1935, %v2463
    %v2516 = vadd.f32 %v1936, %v2462
    %v2517 = vadd.f32 %v1937, %v2466
    %v2518 = vadd.f32 %v1938, %v2465
    %s2519 = sld [smem:[#allocation2 + $0x39]]
    %v2520 = vstv %s2519
    %v2521 = vmul.f32 %v2520, %v31
    %v2522 = vmul.f32 %v2520, %v32
    %v2523 = vmul.f32 %v2520, %v33
    %v2524 = vmul.f32 %v2520, %v34
    %v2525 = vmul.f32 %v2520, %v35
    %v2526 = vmul.f32 %v2520, %v36
    %v2527 = vmul.f32 %v2520, %v37
    %v2528 = vmul.f32 %v2520, %v38
    %v2529 = vmul.f32 %v2520, %v39
    %v2530 = vmul.f32 %v2520, %v40
    %v2531 = vmul.f32 %v2520, %v41
    %v2532 = vmul.f32 %v2520, %v42
    %v2533 = vmul.f32 %v2520, %v43
    %v2534 = vmul.f32 %v2520, %v44
    %v2535 = vmul.f32 %v2520, %v45
    %v2536 = vmul.f32 %v2520, %v46
    %v2537 = vmul.f32 %v2520, %v47
    %v2538 = vmul.f32 %v2520, %v48
    %v2539 = vmul.f32 %v2520, %v49
    %v2540 = vmul.f32 %v2520, %v50
    %v2541 = vmul.f32 %v2520, %v51
    %v2542 = vmul.f32 %v2520, %v52
    %v2543 = vmul.f32 %v2520, %v53
    %v2544 = vmul.f32 %v2520, %v54
    %v2545 = vmul.f32 %v2520, %v55
    %v2546 = vmul.f32 %v2520, %v56
    %v2573 = vrot.slane %v2521, 1
    %v2574 = vrot.slane %v2522, 1
    %v2575 = vsel %vm977, %v2573, %v2574
    %v2576 = vrot.slane %v2523, 1
    %v2577 = vrot.slane %v2524, 1
    %v2578 = vsel %vm977, %v2576, %v2577
    %v2579 = vrot.slane %v2525, 1
    %v2580 = vrot.slane %v2526, 1
    %v2581 = vsel %vm977, %v2579, %v2580
    %v2582 = vrot.slane %v2527, 1
    %v2583 = vrot.slane %v2528, 1
    %v2584 = vsel %vm977, %v2582, %v2583
    %v2585 = vrot.slane %v2529, 1
    %v2586 = vrot.slane %v2530, 1
    %v2587 = vsel %vm977, %v2585, %v2586
    %v2588 = vrot.slane %v2531, 1
    %v2589 = vrot.slane %v2532, 1
    %v2590 = vsel %vm977, %v2588, %v2589
    %v2591 = vrot.slane %v2533, 1
    %v2592 = vrot.slane %v2534, 1
    %v2593 = vsel %vm977, %v2591, %v2592
    %v2594 = vrot.slane %v2535, 1
    %v2595 = vrot.slane %v2536, 1
    %v2596 = vsel %vm977, %v2594, %v2595
    %v2597 = vrot.slane %v2537, 1
    %v2598 = vrot.slane %v2538, 1
    %v2599 = vsel %vm977, %v2597, %v2598
    %v2600 = vrot.slane %v2539, 1
    %v2601 = vrot.slane %v2540, 1
    %v2602 = vsel %vm977, %v2600, %v2601
    %v2603 = vrot.slane %v2541, 1
    %v2604 = vrot.slane %v2542, 1
    %v2605 = vsel %vm977, %v2603, %v2604
    %v2606 = vrot.slane %v2543, 1
    %v2607 = vrot.slane %v2544, 1
    %v2608 = vsel %vm977, %v2606, %v2607
    %v2609 = vrot.slane %v2545, 1
    %v2610 = vrot.slane %v2546, 1
    %v2611 = vsel %vm977, %v2609, %v2610
    %v2638 = vadd.f32 %v2058, %v2575
    %v2639 = vadd.f32 %v2059, %v2574
    %v2640 = vadd.f32 %v2060, %v2578
    %v2641 = vadd.f32 %v2061, %v2577
    %v2642 = vadd.f32 %v2062, %v2581
    %v2643 = vadd.f32 %v2063, %v2580
    %v2644 = vadd.f32 %v2064, %v2584
    %v2645 = vadd.f32 %v2065, %v2583
    %v2646 = vadd.f32 %v2066, %v2587
    %v2647 = vadd.f32 %v2067, %v2586
    %v2648 = vadd.f32 %v2068, %v2590
    %v2649 = vadd.f32 %v2069, %v2589
    %v2650 = vadd.f32 %v2070, %v2593
    %v2651 = vadd.f32 %v2071, %v2592
    %v2652 = vadd.f32 %v2072, %v2596
    %v2653 = vadd.f32 %v2073, %v2595
    %v2654 = vadd.f32 %v2074, %v2599
    %v2655 = vadd.f32 %v2075, %v2598
    %v2656 = vadd.f32 %v2076, %v2602
    %v2657 = vadd.f32 %v2077, %v2601
    %v2658 = vadd.f32 %v2078, %v2605
    %v2659 = vadd.f32 %v2079, %v2604
    %v2660 = vadd.f32 %v2080, %v2608
    %v2661 = vadd.f32 %v2081, %v2607
    %v2662 = vadd.f32 %v2082, %v2611
    %v2663 = vadd.f32 %v2083, %v2610
    %s2664 = sld [smem:[#allocation2 + $0xd]]
    %v2665 = vstv %s2664
    %v2666 = vmul.f32 %v2665, %v33
    %v2667 = vmul.f32 %v2665, %v34
    %v2668 = vmul.f32 %v2665, %v35
    %v2669 = vmul.f32 %v2665, %v36
    %v2670 = vmul.f32 %v2665, %v37
    %v2671 = vmul.f32 %v2665, %v38
    %v2672 = vmul.f32 %v2665, %v39
    %v2673 = vmul.f32 %v2665, %v40
    %v2674 = vmul.f32 %v2665, %v41
    %v2675 = vmul.f32 %v2665, %v42
    %v2676 = vmul.f32 %v2665, %v43
    %v2677 = vmul.f32 %v2665, %v44
    %v2678 = vmul.f32 %v2665, %v45
    %v2679 = vmul.f32 %v2665, %v46
    %v2680 = vmul.f32 %v2665, %v47
    %v2681 = vmul.f32 %v2665, %v48
    %v2682 = vmul.f32 %v2665, %v49
    %v2683 = vmul.f32 %v2665, %v50
    %v2684 = vmul.f32 %v2665, %v51
    %v2685 = vmul.f32 %v2665, %v52
    %v2686 = vmul.f32 %v2665, %v53
    %v2687 = vmul.f32 %v2665, %v54
    %v2688 = vmul.f32 %v2665, %v55
    %v2689 = vmul.f32 %v2665, %v56
    %v2690 = vmul.f32 %v2665, %v57
    %v2691 = vmul.f32 %v2665, %v58
    %v2718 = vrot.slane %v2666, 1
    %v2719 = vrot.slane %v2667, 1
    %v2720 = vsel %vm977, %v2718, %v2719
    %v2721 = vrot.slane %v2668, 1
    %v2722 = vrot.slane %v2669, 1
    %v2723 = vsel %vm977, %v2721, %v2722
    %v2724 = vrot.slane %v2670, 1
    %v2725 = vrot.slane %v2671, 1
    %v2726 = vsel %vm977, %v2724, %v2725
    %v2727 = vrot.slane %v2672, 1
    %v2728 = vrot.slane %v2673, 1
    %v2729 = vsel %vm977, %v2727, %v2728
    %v2730 = vrot.slane %v2674, 1
    %v2731 = vrot.slane %v2675, 1
    %v2732 = vsel %vm977, %v2730, %v2731
    %v2733 = vrot.slane %v2676, 1
    %v2734 = vrot.slane %v2677, 1
    %v2735 = vsel %vm977, %v2733, %v2734
    %v2736 = vrot.slane %v2678, 1
    %v2737 = vrot.slane %v2679, 1
    %v2738 = vsel %vm977, %v2736, %v2737
    %v2739 = vrot.slane %v2680, 1
    %v2740 = vrot.slane %v2681, 1
    %v2741 = vsel %vm977, %v2739, %v2740
    %v2742 = vrot.slane %v2682, 1
    %v2743 = vrot.slane %v2683, 1
    %v2744 = vsel %vm977, %v2742, %v2743
    %v2745 = vrot.slane %v2684, 1
    %v2746 = vrot.slane %v2685, 1
    %v2747 = vsel %vm977, %v2745, %v2746
    %v2748 = vrot.slane %v2686, 1
    %v2749 = vrot.slane %v2687, 1
    %v2750 = vsel %vm977, %v2748, %v2749
    %v2751 = vrot.slane %v2688, 1
    %v2752 = vrot.slane %v2689, 1
    %v2753 = vsel %vm977, %v2751, %v2752
    %v2754 = vrot.slane %v2690, 1
    %v2755 = vrot.slane %v2691, 1
    %v2756 = vsel %vm977, %v2754, %v2755
    %v2783 = vadd.f32 %v2203, %v2720
    %v2784 = vadd.f32 %v2204, %v2719
    %v2785 = vadd.f32 %v2205, %v2723
    %v2786 = vadd.f32 %v2206, %v2722
    %v2787 = vadd.f32 %v2207, %v2726
    %v2788 = vadd.f32 %v2208, %v2725
    %v2789 = vadd.f32 %v2209, %v2729
    %v2790 = vadd.f32 %v2210, %v2728
    %v2791 = vadd.f32 %v2211, %v2732
    %v2792 = vadd.f32 %v2212, %v2731
    %v2793 = vadd.f32 %v2213, %v2735
    %v2794 = vadd.f32 %v2214, %v2734
    %v2795 = vadd.f32 %v2215, %v2738
    %v2796 = vadd.f32 %v2216, %v2737
    %v2797 = vadd.f32 %v2217, %v2741
    %v2798 = vadd.f32 %v2218, %v2740
    %v2799 = vadd.f32 %v2219, %v2744
    %v2800 = vadd.f32 %v2220, %v2743
    %v2801 = vadd.f32 %v2221, %v2747
    %v2802 = vadd.f32 %v2222, %v2746
    %v2803 = vadd.f32 %v2223, %v2750
    %v2804 = vadd.f32 %v2224, %v2749
    %v2805 = vadd.f32 %v2225, %v2753
    %v2806 = vadd.f32 %v2226, %v2752
    %v2807 = vadd.f32 %v2227, %v2756
    %v2808 = vadd.f32 %v2228, %v2755
    %s2809 = sld [smem:[#allocation2 + $0x1d]]
    %v2810 = vstv %s2809
    %v2811 = vmul.f32 %v2810, %v33
    %v2812 = vmul.f32 %v2810, %v34
    %v2813 = vmul.f32 %v2810, %v35
    %v2814 = vmul.f32 %v2810, %v36
    %v2815 = vmul.f32 %v2810, %v37
    %v2816 = vmul.f32 %v2810, %v38
    %v2817 = vmul.f32 %v2810, %v39
    %v2818 = vmul.f32 %v2810, %v40
    %v2819 = vmul.f32 %v2810, %v41
    %v2820 = vmul.f32 %v2810, %v42
    %v2821 = vmul.f32 %v2810, %v43
    %v2822 = vmul.f32 %v2810, %v44
    %v2823 = vmul.f32 %v2810, %v45
    %v2824 = vmul.f32 %v2810, %v46
    %v2825 = vmul.f32 %v2810, %v47
    %v2826 = vmul.f32 %v2810, %v48
    %v2827 = vmul.f32 %v2810, %v49
    %v2828 = vmul.f32 %v2810, %v50
    %v2829 = vmul.f32 %v2810, %v51
    %v2830 = vmul.f32 %v2810, %v52
    %v2831 = vmul.f32 %v2810, %v53
    %v2832 = vmul.f32 %v2810, %v54
    %v2833 = vmul.f32 %v2810, %v55
    %v2834 = vmul.f32 %v2810, %v56
    %v2835 = vmul.f32 %v2810, %v57
    %v2836 = vmul.f32 %v2810, %v58
    %v2863 = vrot.slane %v2811, 1
    %v2864 = vrot.slane %v2812, 1
    %v2865 = vsel %vm977, %v2863, %v2864
    %v2866 = vrot.slane %v2813, 1
    %v2867 = vrot.slane %v2814, 1
    %v2868 = vsel %vm977, %v2866, %v2867
    %v2869 = vrot.slane %v2815, 1
    %v2870 = vrot.slane %v2816, 1
    %v2871 = vsel %vm977, %v2869, %v2870
    %v2872 = vrot.slane %v2817, 1
    %v2873 = vrot.slane %v2818, 1
    %v2874 = vsel %vm977, %v2872, %v2873
    %v2875 = vrot.slane %v2819, 1
    %v2876 = vrot.slane %v2820, 1
    %v2877 = vsel %vm977, %v2875, %v2876
    %v2878 = vrot.slane %v2821, 1
    %v2879 = vrot.slane %v2822, 1
    %v2880 = vsel %vm977, %v2878, %v2879
    %v2881 = vrot.slane %v2823, 1
    %v2882 = vrot.slane %v2824, 1
    %v2883 = vsel %vm977, %v2881, %v2882
    %v2884 = vrot.slane %v2825, 1
    %v2885 = vrot.slane %v2826, 1
    %v2886 = vsel %vm977, %v2884, %v2885
    %v2887 = vrot.slane %v2827, 1
    %v2888 = vrot.slane %v2828, 1
    %v2889 = vsel %vm977, %v2887, %v2888
    %v2890 = vrot.slane %v2829, 1
    %v2891 = vrot.slane %v2830, 1
    %v2892 = vsel %vm977, %v2890, %v2891
    %v2893 = vrot.slane %v2831, 1
    %v2894 = vrot.slane %v2832, 1
    %v2895 = vsel %vm977, %v2893, %v2894
    %v2896 = vrot.slane %v2833, 1
    %v2897 = vrot.slane %v2834, 1
    %v2898 = vsel %vm977, %v2896, %v2897
    %v2899 = vrot.slane %v2835, 1
    %v2900 = vrot.slane %v2836, 1
    %v2901 = vsel %vm977, %v2899, %v2900
    %v2928 = vadd.f32 %v2348, %v2865
    %v2929 = vadd.f32 %v2349, %v2864
    %v2930 = vadd.f32 %v2350, %v2868
    %v2931 = vadd.f32 %v2351, %v2867
    %v2932 = vadd.f32 %v2352, %v2871
    %v2933 = vadd.f32 %v2353, %v2870
    %v2934 = vadd.f32 %v2354, %v2874
    %v2935 = vadd.f32 %v2355, %v2873
    %v2936 = vadd.f32 %v2356, %v2877
    %v2937 = vadd.f32 %v2357, %v2876
    %v2938 = vadd.f32 %v2358, %v2880
    %v2939 = vadd.f32 %v2359, %v2879
    %v2940 = vadd.f32 %v2360, %v2883
    %v2941 = vadd.f32 %v2361, %v2882
    %v2942 = vadd.f32 %v2362, %v2886
    %v2943 = vadd.f32 %v2363, %v2885
    %v2944 = vadd.f32 %v2364, %v2889
    %v2945 = vadd.f32 %v2365, %v2888
    %v2946 = vadd.f32 %v2366, %v2892
    %v2947 = vadd.f32 %v2367, %v2891
    %v2948 = vadd.f32 %v2368, %v2895
    %v2949 = vadd.f32 %v2369, %v2894
    %v2950 = vadd.f32 %v2370, %v2898
    %v2951 = vadd.f32 %v2371, %v2897
    %v2952 = vadd.f32 %v2372, %v2901
    %v2953 = vadd.f32 %v2373, %v2900
    %s2954 = sld [smem:[#allocation2 + $0x2d]]
    %v2955 = vstv %s2954
    %v2956 = vmul.f32 %v2955, %v33
    %v2957 = vmul.f32 %v2955, %v34
    %v2958 = vmul.f32 %v2955, %v35
    %v2959 = vmul.f32 %v2955, %v36
    %v2960 = vmul.f32 %v2955, %v37
    %v2961 = vmul.f32 %v2955, %v38
    %v2962 = vmul.f32 %v2955, %v39
    %v2963 = vmul.f32 %v2955, %v40
    %v2964 = vmul.f32 %v2955, %v41
    %v2965 = vmul.f32 %v2955, %v42
    %v2966 = vmul.f32 %v2955, %v43
    %v2967 = vmul.f32 %v2955, %v44
    %v2968 = vmul.f32 %v2955, %v45
    %v2969 = vmul.f32 %v2955, %v46
    %v2970 = vmul.f32 %v2955, %v47
    %v2971 = vmul.f32 %v2955, %v48
    %v2972 = vmul.f32 %v2955, %v49
    %v2973 = vmul.f32 %v2955, %v50
    %v2974 = vmul.f32 %v2955, %v51
    %v2975 = vmul.f32 %v2955, %v52
    %v2976 = vmul.f32 %v2955, %v53
    %v2977 = vmul.f32 %v2955, %v54
    %v2978 = vmul.f32 %v2955, %v55
    %v2979 = vmul.f32 %v2955, %v56
    %v2980 = vmul.f32 %v2955, %v57
    %v2981 = vmul.f32 %v2955, %v58
    %v3008 = vrot.slane %v2956, 1
    %v3009 = vrot.slane %v2957, 1
    %v3010 = vsel %vm977, %v3008, %v3009
    %v3011 = vrot.slane %v2958, 1
    %v3012 = vrot.slane %v2959, 1
    %v3013 = vsel %vm977, %v3011, %v3012
    %v3014 = vrot.slane %v2960, 1
    %v3015 = vrot.slane %v2961, 1
    %v3016 = vsel %vm977, %v3014, %v3015
    %v3017 = vrot.slane %v2962, 1
    %v3018 = vrot.slane %v2963, 1
    %v3019 = vsel %vm977, %v3017, %v3018
    %v3020 = vrot.slane %v2964, 1
    %v3021 = vrot.slane %v2965, 1
    %v3022 = vsel %vm977, %v3020, %v3021
    %v3023 = vrot.slane %v2966, 1
    %v3024 = vrot.slane %v2967, 1
    %v3025 = vsel %vm977, %v3023, %v3024
    %v3026 = vrot.slane %v2968, 1
    %v3027 = vrot.slane %v2969, 1
    %v3028 = vsel %vm977, %v3026, %v3027
    %v3029 = vrot.slane %v2970, 1
    %v3030 = vrot.slane %v2971, 1
    %v3031 = vsel %vm977, %v3029, %v3030
    %v3032 = vrot.slane %v2972, 1
    %v3033 = vrot.slane %v2973, 1
    %v3034 = vsel %vm977, %v3032, %v3033
    %v3035 = vrot.slane %v2974, 1
    %v3036 = vrot.slane %v2975, 1
    %v3037 = vsel %vm977, %v3035, %v3036
    %v3038 = vrot.slane %v2976, 1
    %v3039 = vrot.slane %v2977, 1
    %v3040 = vsel %vm977, %v3038, %v3039
    %v3041 = vrot.slane %v2978, 1
    %v3042 = vrot.slane %v2979, 1
    %v3043 = vsel %vm977, %v3041, %v3042
    %v3044 = vrot.slane %v2980, 1
    %v3045 = vrot.slane %v2981, 1
    %v3046 = vsel %vm977, %v3044, %v3045
    %v3073 = vadd.f32 %v2493, %v3010
    %v3074 = vadd.f32 %v2494, %v3009
    %v3075 = vadd.f32 %v2495, %v3013
    %v3076 = vadd.f32 %v2496, %v3012
    %v3077 = vadd.f32 %v2497, %v3016
    %v3078 = vadd.f32 %v2498, %v3015
    %v3079 = vadd.f32 %v2499, %v3019
    %v3080 = vadd.f32 %v2500, %v3018
    %v3081 = vadd.f32 %v2501, %v3022
    %v3082 = vadd.f32 %v2502, %v3021
    %v3083 = vadd.f32 %v2503, %v3025
    %v3084 = vadd.f32 %v2504, %v3024
    %v3085 = vadd.f32 %v2505, %v3028
    %v3086 = vadd.f32 %v2506, %v3027
    %v3087 = vadd.f32 %v2507, %v3031
    %v3088 = vadd.f32 %v2508, %v3030
    %v3089 = vadd.f32 %v2509, %v3034
    %v3090 = vadd.f32 %v2510, %v3033
    %v3091 = vadd.f32 %v2511, %v3037
    %v3092 = vadd.f32 %v2512, %v3036
    %v3093 = vadd.f32 %v2513, %v3040
    %v3094 = vadd.f32 %v2514, %v3039
    %v3095 = vadd.f32 %v2515, %v3043
    %v3096 = vadd.f32 %v2516, %v3042
    %v3097 = vadd.f32 %v2517, %v3046
    %v3098 = vadd.f32 %v2518, %v3045
    %s3099 = sld [smem:[#allocation2 + $0x3d]]
    %v3100 = vstv %s3099
    %v3101 = vmul.f32 %v3100, %v33
    %v3102 = vmul.f32 %v3100, %v34
    %v3103 = vmul.f32 %v3100, %v35
    %v3104 = vmul.f32 %v3100, %v36
    %v3105 = vmul.f32 %v3100, %v37
    %v3106 = vmul.f32 %v3100, %v38
    %v3107 = vmul.f32 %v3100, %v39
    %v3108 = vmul.f32 %v3100, %v40
    %v3109 = vmul.f32 %v3100, %v41
    %v3110 = vmul.f32 %v3100, %v42
    %v3111 = vmul.f32 %v3100, %v43
    %v3112 = vmul.f32 %v3100, %v44
    %v3113 = vmul.f32 %v3100, %v45
    %v3114 = vmul.f32 %v3100, %v46
    %v3115 = vmul.f32 %v3100, %v47
    %v3116 = vmul.f32 %v3100, %v48
    %v3117 = vmul.f32 %v3100, %v49
    %v3118 = vmul.f32 %v3100, %v50
    %v3119 = vmul.f32 %v3100, %v51
    %v3120 = vmul.f32 %v3100, %v52
    %v3121 = vmul.f32 %v3100, %v53
    %v3122 = vmul.f32 %v3100, %v54
    %v3123 = vmul.f32 %v3100, %v55
    %v3124 = vmul.f32 %v3100, %v56
    %v3125 = vmul.f32 %v3100, %v57
    %v3126 = vmul.f32 %v3100, %v58
    %v3153 = vrot.slane %v3101, 1
    %v3154 = vrot.slane %v3102, 1
    %v3155 = vsel %vm977, %v3153, %v3154
    %v3156 = vrot.slane %v3103, 1
    %v3157 = vrot.slane %v3104, 1
    %v3158 = vsel %vm977, %v3156, %v3157
    %v3159 = vrot.slane %v3105, 1
    %v3160 = vrot.slane %v3106, 1
    %v3161 = vsel %vm977, %v3159, %v3160
    %v3162 = vrot.slane %v3107, 1
    %v3163 = vrot.slane %v3108, 1
    %v3164 = vsel %vm977, %v3162, %v3163
    %v3165 = vrot.slane %v3109, 1
    %v3166 = vrot.slane %v3110, 1
    %v3167 = vsel %vm977, %v3165, %v3166
    %v3168 = vrot.slane %v3111, 1
    %v3169 = vrot.slane %v3112, 1
    %v3170 = vsel %vm977, %v3168, %v3169
    %v3171 = vrot.slane %v3113, 1
    %v3172 = vrot.slane %v3114, 1
    %v3173 = vsel %vm977, %v3171, %v3172
    %v3174 = vrot.slane %v3115, 1
    %v3175 = vrot.slane %v3116, 1
    %v3176 = vsel %vm977, %v3174, %v3175
    %v3177 = vrot.slane %v3117, 1
    %v3178 = vrot.slane %v3118, 1
    %v3179 = vsel %vm977, %v3177, %v3178
    %v3180 = vrot.slane %v3119, 1
    %v3181 = vrot.slane %v3120, 1
    %v3182 = vsel %vm977, %v3180, %v3181
    %v3183 = vrot.slane %v3121, 1
    %v3184 = vrot.slane %v3122, 1
    %v3185 = vsel %vm977, %v3183, %v3184
    %v3186 = vrot.slane %v3123, 1
    %v3187 = vrot.slane %v3124, 1
    %v3188 = vsel %vm977, %v3186, %v3187
    %v3189 = vrot.slane %v3125, 1
    %v3190 = vrot.slane %v3126, 1
    %v3191 = vsel %vm977, %v3189, %v3190
    %v3218 = vadd.f32 %v2638, %v3155
    %v3219 = vadd.f32 %v2639, %v3154
    %v3220 = vadd.f32 %v2640, %v3158
    %v3221 = vadd.f32 %v2641, %v3157
    %v3222 = vadd.f32 %v2642, %v3161
    %v3223 = vadd.f32 %v2643, %v3160
    %v3224 = vadd.f32 %v2644, %v3164
    %v3225 = vadd.f32 %v2645, %v3163
    %v3226 = vadd.f32 %v2646, %v3167
    %v3227 = vadd.f32 %v2647, %v3166
    %v3228 = vadd.f32 %v2648, %v3170
    %v3229 = vadd.f32 %v2649, %v3169
    %v3230 = vadd.f32 %v2650, %v3173
    %v3231 = vadd.f32 %v2651, %v3172
    %v3232 = vadd.f32 %v2652, %v3176
    %v3233 = vadd.f32 %v2653, %v3175
    %v3234 = vadd.f32 %v2654, %v3179
    %v3235 = vadd.f32 %v2655, %v3178
    %v3236 = vadd.f32 %v2656, %v3182
    %v3237 = vadd.f32 %v2657, %v3181
    %v3238 = vadd.f32 %v2658, %v3185
    %v3239 = vadd.f32 %v2659, %v3184
    %v3240 = vadd.f32 %v2660, %v3188
    %v3241 = vadd.f32 %v2661, %v3187
    %v3242 = vadd.f32 %v2662, %v3191
    %v3243 = vadd.f32 %v2663, %v3190
    %s3244 = sld [smem:[#allocation2 + $0x2]]
    %v3245 = vstv %s3244
    %v3246 = vmul.f32 %v3245, %v27
    %v3247 = vmul.f32 %v3245, %v28
    %v3248 = vmul.f32 %v3245, %v29
    %v3249 = vmul.f32 %v3245, %v30
    %v3250 = vmul.f32 %v3245, %v31
    %v3251 = vmul.f32 %v3245, %v32
    %v3252 = vmul.f32 %v3245, %v33
    %v3253 = vmul.f32 %v3245, %v34
    %v3254 = vmul.f32 %v3245, %v35
    %v3255 = vmul.f32 %v3245, %v36
    %v3256 = vmul.f32 %v3245, %v37
    %v3257 = vmul.f32 %v3245, %v38
    %v3258 = vmul.f32 %v3245, %v39
    %v3259 = vmul.f32 %v3245, %v40
    %v3260 = vmul.f32 %v3245, %v41
    %v3261 = vmul.f32 %v3245, %v42
    %v3262 = vmul.f32 %v3245, %v43
    %v3263 = vmul.f32 %v3245, %v44
    %v3264 = vmul.f32 %v3245, %v45
    %v3265 = vmul.f32 %v3245, %v46
    %v3266 = vmul.f32 %v3245, %v47
    %v3267 = vmul.f32 %v3245, %v48
    %v3268 = vmul.f32 %v3245, %v49
    %v3269 = vmul.f32 %v3245, %v50
    %v3270 = vmul.f32 %v3245, %v51
    %v3271 = vmul.f32 %v3245, %v52
    %vm3298 = vcmask 1045504
    %v3299 = vrot.slane %v3246, 2
    %v3300 = vrot.slane %v3247, 2
    %v3301 = vsel %vm3298, %v3299, %v3300
    %v3302 = vrot.slane %v3248, 2
    %v3303 = vrot.slane %v3249, 2
    %v3304 = vsel %vm3298, %v3302, %v3303
    %v3305 = vrot.slane %v3250, 2
    %v3306 = vrot.slane %v3251, 2
    %v3307 = vsel %vm3298, %v3305, %v3306
    %v3308 = vrot.slane %v3252, 2
    %v3309 = vrot.slane %v3253, 2
    %v3310 = vsel %vm3298, %v3308, %v3309
    %v3311 = vrot.slane %v3254, 2
    %v3312 = vrot.slane %v3255, 2
    %v3313 = vsel %vm3298, %v3311, %v3312
    %v3314 = vrot.slane %v3256, 2
    %v3315 = vrot.slane %v3257, 2
    %v3316 = vsel %vm3298, %v3314, %v3315
    %v3317 = vrot.slane %v3258, 2
    %v3318 = vrot.slane %v3259, 2
    %v3319 = vsel %vm3298, %v3317, %v3318
    %v3320 = vrot.slane %v3260, 2
    %v3321 = vrot.slane %v3261, 2
    %v3322 = vsel %vm3298, %v3320, %v3321
    %v3323 = vrot.slane %v3262, 2
    %v3324 = vrot.slane %v3263, 2
    %v3325 = vsel %vm3298, %v3323, %v3324
    %v3326 = vrot.slane %v3264, 2
    %v3327 = vrot.slane %v3265, 2
    %v3328 = vsel %vm3298, %v3326, %v3327
    %v3329 = vrot.slane %v3266, 2
    %v3330 = vrot.slane %v3267, 2
    %v3331 = vsel %vm3298, %v3329, %v3330
    %v3332 = vrot.slane %v3268, 2
    %v3333 = vrot.slane %v3269, 2
    %v3334 = vsel %vm3298, %v3332, %v3333
    %v3335 = vrot.slane %v3270, 2
    %v3336 = vrot.slane %v3271, 2
    %v3337 = vsel %vm3298, %v3335, %v3336
    %v3364 = vadd.f32 %v2783, %v3301
    %v3365 = vadd.f32 %v2784, %v3300
    %v3366 = vadd.f32 %v2785, %v3304
    %v3367 = vadd.f32 %v2786, %v3303
    %v3368 = vadd.f32 %v2787, %v3307
    %v3369 = vadd.f32 %v2788, %v3306
    %v3370 = vadd.f32 %v2789, %v3310
    %v3371 = vadd.f32 %v2790, %v3309
    %v3372 = vadd.f32 %v2791, %v3313
    %v3373 = vadd.f32 %v2792, %v3312
    %v3374 = vadd.f32 %v2793, %v3316
    %v3375 = vadd.f32 %v2794, %v3315
    %v3376 = vadd.f32 %v2795, %v3319
    %v3377 = vadd.f32 %v2796, %v3318
    %v3378 = vadd.f32 %v2797, %v3322
    %v3379 = vadd.f32 %v2798, %v3321
    %v3380 = vadd.f32 %v2799, %v3325
    %v3381 = vadd.f32 %v2800, %v3324
    %v3382 = vadd.f32 %v2801, %v3328
    %v3383 = vadd.f32 %v2802, %v3327
    %v3384 = vadd.f32 %v2803, %v3331
    %v3385 = vadd.f32 %v2804, %v3330
    %v3386 = vadd.f32 %v2805, %v3334
    %v3387 = vadd.f32 %v2806, %v3333
    %v3388 = vadd.f32 %v2807, %v3337
    %v3389 = vadd.f32 %v2808, %v3336
    %s3390 = sld [smem:[#allocation2 + $0x12]]
    %v3391 = vstv %s3390
    %v3392 = vmul.f32 %v3391, %v27
    %v3393 = vmul.f32 %v3391, %v28
    %v3394 = vmul.f32 %v3391, %v29
    %v3395 = vmul.f32 %v3391, %v30
    %v3396 = vmul.f32 %v3391, %v31
    %v3397 = vmul.f32 %v3391, %v32
    %v3398 = vmul.f32 %v3391, %v33
    %v3399 = vmul.f32 %v3391, %v34
    %v3400 = vmul.f32 %v3391, %v35
    %v3401 = vmul.f32 %v3391, %v36
    %v3402 = vmul.f32 %v3391, %v37
    %v3403 = vmul.f32 %v3391, %v38
    %v3404 = vmul.f32 %v3391, %v39
    %v3405 = vmul.f32 %v3391, %v40
    %v3406 = vmul.f32 %v3391, %v41
    %v3407 = vmul.f32 %v3391, %v42
    %v3408 = vmul.f32 %v3391, %v43
    %v3409 = vmul.f32 %v3391, %v44
    %v3410 = vmul.f32 %v3391, %v45
    %v3411 = vmul.f32 %v3391, %v46
    %v3412 = vmul.f32 %v3391, %v47
    %v3413 = vmul.f32 %v3391, %v48
    %v3414 = vmul.f32 %v3391, %v49
    %v3415 = vmul.f32 %v3391, %v50
    %v3416 = vmul.f32 %v3391, %v51
    %v3417 = vmul.f32 %v3391, %v52
    %v3444 = vrot.slane %v3392, 2
    %v3445 = vrot.slane %v3393, 2
    %v3446 = vsel %vm3298, %v3444, %v3445
    %v3447 = vrot.slane %v3394, 2
    %v3448 = vrot.slane %v3395, 2
    %v3449 = vsel %vm3298, %v3447, %v3448
    %v3450 = vrot.slane %v3396, 2
    %v3451 = vrot.slane %v3397, 2
    %v3452 = vsel %vm3298, %v3450, %v3451
    %v3453 = vrot.slane %v3398, 2
    %v3454 = vrot.slane %v3399, 2
    %v3455 = vsel %vm3298, %v3453, %v3454
    %v3456 = vrot.slane %v3400, 2
    %v3457 = vrot.slane %v3401, 2
    %v3458 = vsel %vm3298, %v3456, %v3457
    %v3459 = vrot.slane %v3402, 2
    %v3460 = vrot.slane %v3403, 2
    %v3461 = vsel %vm3298, %v3459, %v3460
    %v3462 = vrot.slane %v3404, 2
    %v3463 = vrot.slane %v3405, 2
    %v3464 = vsel %vm3298, %v3462, %v3463
    %v3465 = vrot.slane %v3406, 2
    %v3466 = vrot.slane %v3407, 2
    %v3467 = vsel %vm3298, %v3465, %v3466
    %v3468 = vrot.slane %v3408, 2
    %v3469 = vrot.slane %v3409, 2
    %v3470 = vsel %vm3298, %v3468, %v3469
    %v3471 = vrot.slane %v3410, 2
    %v3472 = vrot.slane %v3411, 2
    %v3473 = vsel %vm3298, %v3471, %v3472
    %v3474 = vrot.slane %v3412, 2
    %v3475 = vrot.slane %v3413, 2
    %v3476 = vsel %vm3298, %v3474, %v3475
    %v3477 = vrot.slane %v3414, 2
    %v3478 = vrot.slane %v3415, 2
    %v3479 = vsel %vm3298, %v3477, %v3478
    %v3480 = vrot.slane %v3416, 2
    %v3481 = vrot.slane %v3417, 2
    %v3482 = vsel %vm3298, %v3480, %v3481
    %v3509 = vadd.f32 %v2928, %v3446
    %v3510 = vadd.f32 %v2929, %v3445
    %v3511 = vadd.f32 %v2930, %v3449
    %v3512 = vadd.f32 %v2931, %v3448
    %v3513 = vadd.f32 %v2932, %v3452
    %v3514 = vadd.f32 %v2933, %v3451
    %v3515 = vadd.f32 %v2934, %v3455
    %v3516 = vadd.f32 %v2935, %v3454
    %v3517 = vadd.f32 %v2936, %v3458
    %v3518 = vadd.f32 %v2937, %v3457
    %v3519 = vadd.f32 %v2938, %v3461
    %v3520 = vadd.f32 %v2939, %v3460
    %v3521 = vadd.f32 %v2940, %v3464
    %v3522 = vadd.f32 %v2941, %v3463
    %v3523 = vadd.f32 %v2942, %v3467
    %v3524 = vadd.f32 %v2943, %v3466
    %v3525 = vadd.f32 %v2944, %v3470
    %v3526 = vadd.f32 %v2945, %v3469
    %v3527 = vadd.f32 %v2946, %v3473
    %v3528 = vadd.f32 %v2947, %v3472
    %v3529 = vadd.f32 %v2948, %v3476
    %v3530 = vadd.f32 %v2949, %v3475
    %v3531 = vadd.f32 %v2950, %v3479
    %v3532 = vadd.f32 %v2951, %v3478
    %v3533 = vadd.f32 %v2952, %v3482
    %v3534 = vadd.f32 %v2953, %v3481
    %s3535 = sld [smem:[#allocation2 + $0x22]]
    %v3536 = vstv %s3535
    %v3537 = vmul.f32 %v3536, %v27
    %v3538 = vmul.f32 %v3536, %v28
    %v3539 = vmul.f32 %v3536, %v29
    %v3540 = vmul.f32 %v3536, %v30
    %v3541 = vmul.f32 %v3536, %v31
    %v3542 = vmul.f32 %v3536, %v32
    %v3543 = vmul.f32 %v3536, %v33
    %v3544 = vmul.f32 %v3536, %v34
    %v3545 = vmul.f32 %v3536, %v35
    %v3546 = vmul.f32 %v3536, %v36
    %v3547 = vmul.f32 %v3536, %v37
    %v3548 = vmul.f32 %v3536, %v38
    %v3549 = vmul.f32 %v3536, %v39
    %v3550 = vmul.f32 %v3536, %v40
    %v3551 = vmul.f32 %v3536, %v41
    %v3552 = vmul.f32 %v3536, %v42
    %v3553 = vmul.f32 %v3536, %v43
    %v3554 = vmul.f32 %v3536, %v44
    %v3555 = vmul.f32 %v3536, %v45
    %v3556 = vmul.f32 %v3536, %v46
    %v3557 = vmul.f32 %v3536, %v47
    %v3558 = vmul.f32 %v3536, %v48
    %v3559 = vmul.f32 %v3536, %v49
    %v3560 = vmul.f32 %v3536, %v50
    %v3561 = vmul.f32 %v3536, %v51
    %v3562 = vmul.f32 %v3536, %v52
    %v3589 = vrot.slane %v3537, 2
    %v3590 = vrot.slane %v3538, 2
    %v3591 = vsel %vm3298, %v3589, %v3590
    %v3592 = vrot.slane %v3539, 2
    %v3593 = vrot.slane %v3540, 2
    %v3594 = vsel %vm3298, %v3592, %v3593
    %v3595 = vrot.slane %v3541, 2
    %v3596 = vrot.slane %v3542, 2
    %v3597 = vsel %vm3298, %v3595, %v3596
    %v3598 = vrot.slane %v3543, 2
    %v3599 = vrot.slane %v3544, 2
    %v3600 = vsel %vm3298, %v3598, %v3599
    %v3601 = vrot.slane %v3545, 2
    %v3602 = vrot.slane %v3546, 2
    %v3603 = vsel %vm3298, %v3601, %v3602
    %v3604 = vrot.slane %v3547, 2
    %v3605 = vrot.slane %v3548, 2
    %v3606 = vsel %vm3298, %v3604, %v3605
    %v3607 = vrot.slane %v3549, 2
    %v3608 = vrot.slane %v3550, 2
    %v3609 = vsel %vm3298, %v3607, %v3608
    %v3610 = vrot.slane %v3551, 2
    %v3611 = vrot.slane %v3552, 2
    %v3612 = vsel %vm3298, %v3610, %v3611
    %v3613 = vrot.slane %v3553, 2
    %v3614 = vrot.slane %v3554, 2
    %v3615 = vsel %vm3298, %v3613, %v3614
    %v3616 = vrot.slane %v3555, 2
    %v3617 = vrot.slane %v3556, 2
    %v3618 = vsel %vm3298, %v3616, %v3617
    %v3619 = vrot.slane %v3557, 2
    %v3620 = vrot.slane %v3558, 2
    %v3621 = vsel %vm3298, %v3619, %v3620
    %v3622 = vrot.slane %v3559, 2
    %v3623 = vrot.slane %v3560, 2
    %v3624 = vsel %vm3298, %v3622, %v3623
    %v3625 = vrot.slane %v3561, 2
    %v3626 = vrot.slane %v3562, 2
    %v3627 = vsel %vm3298, %v3625, %v3626
    %v3654 = vadd.f32 %v3073, %v3591
    %v3655 = vadd.f32 %v3074, %v3590
    %v3656 = vadd.f32 %v3075, %v3594
    %v3657 = vadd.f32 %v3076, %v3593
    %v3658 = vadd.f32 %v3077, %v3597
    %v3659 = vadd.f32 %v3078, %v3596
    %v3660 = vadd.f32 %v3079, %v3600
    %v3661 = vadd.f32 %v3080, %v3599
    %v3662 = vadd.f32 %v3081, %v3603
    %v3663 = vadd.f32 %v3082, %v3602
    %v3664 = vadd.f32 %v3083, %v3606
    %v3665 = vadd.f32 %v3084, %v3605
    %v3666 = vadd.f32 %v3085, %v3609
    %v3667 = vadd.f32 %v3086, %v3608
    %v3668 = vadd.f32 %v3087, %v3612
    %v3669 = vadd.f32 %v3088, %v3611
    %v3670 = vadd.f32 %v3089, %v3615
    %v3671 = vadd.f32 %v3090, %v3614
    %v3672 = vadd.f32 %v3091, %v3618
    %v3673 = vadd.f32 %v3092, %v3617
    %v3674 = vadd.f32 %v3093, %v3621
    %v3675 = vadd.f32 %v3094, %v3620
    %v3676 = vadd.f32 %v3095, %v3624
    %v3677 = vadd.f32 %v3096, %v3623
    %v3678 = vadd.f32 %v3097, %v3627
    %v3679 = vadd.f32 %v3098, %v3626
    %s3680 = sld [smem:[#allocation2 + $0x32]]
    %v3681 = vstv %s3680
    %v3682 = vmul.f32 %v3681, %v27
    %v3683 = vmul.f32 %v3681, %v28
    %v3684 = vmul.f32 %v3681, %v29
    %v3685 = vmul.f32 %v3681, %v30
    %v3686 = vmul.f32 %v3681, %v31
    %v3687 = vmul.f32 %v3681, %v32
    %v3688 = vmul.f32 %v3681, %v33
    %v3689 = vmul.f32 %v3681, %v34
    %v3690 = vmul.f32 %v3681, %v35
    %v3691 = vmul.f32 %v3681, %v36
    %v3692 = vmul.f32 %v3681, %v37
    %v3693 = vmul.f32 %v3681, %v38
    %v3694 = vmul.f32 %v3681, %v39
    %v3695 = vmul.f32 %v3681, %v40
    %v3696 = vmul.f32 %v3681, %v41
    %v3697 = vmul.f32 %v3681, %v42
    %v3698 = vmul.f32 %v3681, %v43
    %v3699 = vmul.f32 %v3681, %v44
    %v3700 = vmul.f32 %v3681, %v45
    %v3701 = vmul.f32 %v3681, %v46
    %v3702 = vmul.f32 %v3681, %v47
    %v3703 = vmul.f32 %v3681, %v48
    %v3704 = vmul.f32 %v3681, %v49
    %v3705 = vmul.f32 %v3681, %v50
    %v3706 = vmul.f32 %v3681, %v51
    %v3707 = vmul.f32 %v3681, %v52
    %v3734 = vrot.slane %v3682, 2
    %v3735 = vrot.slane %v3683, 2
    %v3736 = vsel %vm3298, %v3734, %v3735
    %v3737 = vrot.slane %v3684, 2
    %v3738 = vrot.slane %v3685, 2
    %v3739 = vsel %vm3298, %v3737, %v3738
    %v3740 = vrot.slane %v3686, 2
    %v3741 = vrot.slane %v3687, 2
    %v3742 = vsel %vm3298, %v3740, %v3741
    %v3743 = vrot.slane %v3688, 2
    %v3744 = vrot.slane %v3689, 2
    %v3745 = vsel %vm3298, %v3743, %v3744
    %v3746 = vrot.slane %v3690, 2
    %v3747 = vrot.slane %v3691, 2
    %v3748 = vsel %vm3298, %v3746, %v3747
    %v3749 = vrot.slane %v3692, 2
    %v3750 = vrot.slane %v3693, 2
    %v3751 = vsel %vm3298, %v3749, %v3750
    %v3752 = vrot.slane %v3694, 2
    %v3753 = vrot.slane %v3695, 2
    %v3754 = vsel %vm3298, %v3752, %v3753
    %v3755 = vrot.slane %v3696, 2
    %v3756 = vrot.slane %v3697, 2
    %v3757 = vsel %vm3298, %v3755, %v3756
    %v3758 = vrot.slane %v3698, 2
    %v3759 = vrot.slane %v3699, 2
    %v3760 = vsel %vm3298, %v3758, %v3759
    %v3761 = vrot.slane %v3700, 2
    %v3762 = vrot.slane %v3701, 2
    %v3763 = vsel %vm3298, %v3761, %v3762
    %v3764 = vrot.slane %v3702, 2
    %v3765 = vrot.slane %v3703, 2
    %v3766 = vsel %vm3298, %v3764, %v3765
    %v3767 = vrot.slane %v3704, 2
    %v3768 = vrot.slane %v3705, 2
    %v3769 = vsel %vm3298, %v3767, %v3768
    %v3770 = vrot.slane %v3706, 2
    %v3771 = vrot.slane %v3707, 2
    %v3772 = vsel %vm3298, %v3770, %v3771
    %v3799 = vadd.f32 %v3218, %v3736
    %v3800 = vadd.f32 %v3219, %v3735
    %v3801 = vadd.f32 %v3220, %v3739
    %v3802 = vadd.f32 %v3221, %v3738
    %v3803 = vadd.f32 %v3222, %v3742
    %v3804 = vadd.f32 %v3223, %v3741
    %v3805 = vadd.f32 %v3224, %v3745
    %v3806 = vadd.f32 %v3225, %v3744
    %v3807 = vadd.f32 %v3226, %v3748
    %v3808 = vadd.f32 %v3227, %v3747
    %v3809 = vadd.f32 %v3228, %v3751
    %v3810 = vadd.f32 %v3229, %v3750
    %v3811 = vadd.f32 %v3230, %v3754
    %v3812 = vadd.f32 %v3231, %v3753
    %v3813 = vadd.f32 %v3232, %v3757
    %v3814 = vadd.f32 %v3233, %v3756
    %v3815 = vadd.f32 %v3234, %v3760
    %v3816 = vadd.f32 %v3235, %v3759
    %v3817 = vadd.f32 %v3236, %v3763
    %v3818 = vadd.f32 %v3237, %v3762
    %v3819 = vadd.f32 %v3238, %v3766
    %v3820 = vadd.f32 %v3239, %v3765
    %v3821 = vadd.f32 %v3240, %v3769
    %v3822 = vadd.f32 %v3241, %v3768
    %v3823 = vadd.f32 %v3242, %v3772
    %v3824 = vadd.f32 %v3243, %v3771
    %s3825 = sld [smem:[#allocation2 + $0x6]]
    %v3826 = vstv %s3825
    %v3827 = vmul.f32 %v3826, %v29
    %v3828 = vmul.f32 %v3826, %v30
    %v3829 = vmul.f32 %v3826, %v31
    %v3830 = vmul.f32 %v3826, %v32
    %v3831 = vmul.f32 %v3826, %v33
    %v3832 = vmul.f32 %v3826, %v34
    %v3833 = vmul.f32 %v3826, %v35
    %v3834 = vmul.f32 %v3826, %v36
    %v3835 = vmul.f32 %v3826, %v37
    %v3836 = vmul.f32 %v3826, %v38
    %v3837 = vmul.f32 %v3826, %v39
    %v3838 = vmul.f32 %v3826, %v40
    %v3839 = vmul.f32 %v3826, %v41
    %v3840 = vmul.f32 %v3826, %v42
    %v3841 = vmul.f32 %v3826, %v43
    %v3842 = vmul.f32 %v3826, %v44
    %v3843 = vmul.f32 %v3826, %v45
    %v3844 = vmul.f32 %v3826, %v46
    %v3845 = vmul.f32 %v3826, %v47
    %v3846 = vmul.f32 %v3826, %v48
    %v3847 = vmul.f32 %v3826, %v49
    %v3848 = vmul.f32 %v3826, %v50
    %v3849 = vmul.f32 %v3826, %v51
    %v3850 = vmul.f32 %v3826, %v52
    %v3851 = vmul.f32 %v3826, %v53
    %v3852 = vmul.f32 %v3826, %v54
    %v3879 = vrot.slane %v3827, 2
    %v3880 = vrot.slane %v3828, 2
    %v3881 = vsel %vm3298, %v3879, %v3880
    %v3882 = vrot.slane %v3829, 2
    %v3883 = vrot.slane %v3830, 2
    %v3884 = vsel %vm3298, %v3882, %v3883
    %v3885 = vrot.slane %v3831, 2
    %v3886 = vrot.slane %v3832, 2
    %v3887 = vsel %vm3298, %v3885, %v3886
    %v3888 = vrot.slane %v3833, 2
    %v3889 = vrot.slane %v3834, 2
    %v3890 = vsel %vm3298, %v3888, %v3889
    %v3891 = vrot.slane %v3835, 2
    %v3892 = vrot.slane %v3836, 2
    %v3893 = vsel %vm3298, %v3891, %v3892
    %v3894 = vrot.slane %v3837, 2
    %v3895 = vrot.slane %v3838, 2
    %v3896 = vsel %vm3298, %v3894, %v3895
    %v3897 = vrot.slane %v3839, 2
    %v3898 = vrot.slane %v3840, 2
    %v3899 = vsel %vm3298, %v3897, %v3898
    %v3900 = vrot.slane %v3841, 2
    %v3901 = vrot.slane %v3842, 2
    %v3902 = vsel %vm3298, %v3900, %v3901
    %v3903 = vrot.slane %v3843, 2
    %v3904 = vrot.slane %v3844, 2
    %v3905 = vsel %vm3298, %v3903, %v3904
    %v3906 = vrot.slane %v3845, 2
    %v3907 = vrot.slane %v3846, 2
    %v3908 = vsel %vm3298, %v3906, %v3907
    %v3909 = vrot.slane %v3847, 2
    %v3910 = vrot.slane %v3848, 2
    %v3911 = vsel %vm3298, %v3909, %v3910
    %v3912 = vrot.slane %v3849, 2
    %v3913 = vrot.slane %v3850, 2
    %v3914 = vsel %vm3298, %v3912, %v3913
    %v3915 = vrot.slane %v3851, 2
    %v3916 = vrot.slane %v3852, 2
    %v3917 = vsel %vm3298, %v3915, %v3916
    %v3944 = vadd.f32 %v3364, %v3881
    %v3945 = vadd.f32 %v3365, %v3880
    %v3946 = vadd.f32 %v3366, %v3884
    %v3947 = vadd.f32 %v3367, %v3883
    %v3948 = vadd.f32 %v3368, %v3887
    %v3949 = vadd.f32 %v3369, %v3886
    %v3950 = vadd.f32 %v3370, %v3890
    %v3951 = vadd.f32 %v3371, %v3889
    %v3952 = vadd.f32 %v3372, %v3893
    %v3953 = vadd.f32 %v3373, %v3892
    %v3954 = vadd.f32 %v3374, %v3896
    %v3955 = vadd.f32 %v3375, %v3895
    %v3956 = vadd.f32 %v3376, %v3899
    %v3957 = vadd.f32 %v3377, %v3898
    %v3958 = vadd.f32 %v3378, %v3902
    %v3959 = vadd.f32 %v3379, %v3901
    %v3960 = vadd.f32 %v3380, %v3905
    %v3961 = vadd.f32 %v3381, %v3904
    %v3962 = vadd.f32 %v3382, %v3908
    %v3963 = vadd.f32 %v3383, %v3907
    %v3964 = vadd.f32 %v3384, %v3911
    %v3965 = vadd.f32 %v3385, %v3910
    %v3966 = vadd.f32 %v3386, %v3914
    %v3967 = vadd.f32 %v3387, %v3913
    %v3968 = vadd.f32 %v3388, %v3917
    %v3969 = vadd.f32 %v3389, %v3916
    %s3970 = sld [smem:[#allocation2 + $0x16]]
    %v3971 = vstv %s3970
    %v3972 = vmul.f32 %v3971, %v29
    %v3973 = vmul.f32 %v3971, %v30
    %v3974 = vmul.f32 %v3971, %v31
    %v3975 = vmul.f32 %v3971, %v32
    %v3976 = vmul.f32 %v3971, %v33
    %v3977 = vmul.f32 %v3971, %v34
    %v3978 = vmul.f32 %v3971, %v35
    %v3979 = vmul.f32 %v3971, %v36
    %v3980 = vmul.f32 %v3971, %v37
    %v3981 = vmul.f32 %v3971, %v38
    %v3982 = vmul.f32 %v3971, %v39
    %v3983 = vmul.f32 %v3971, %v40
    %v3984 = vmul.f32 %v3971, %v41
    %v3985 = vmul.f32 %v3971, %v42
    %v3986 = vmul.f32 %v3971, %v43
    %v3987 = vmul.f32 %v3971, %v44
    %v3988 = vmul.f32 %v3971, %v45
    %v3989 = vmul.f32 %v3971, %v46
    %v3990 = vmul.f32 %v3971, %v47
    %v3991 = vmul.f32 %v3971, %v48
    %v3992 = vmul.f32 %v3971, %v49
    %v3993 = vmul.f32 %v3971, %v50
    %v3994 = vmul.f32 %v3971, %v51
    %v3995 = vmul.f32 %v3971, %v52
    %v3996 = vmul.f32 %v3971, %v53
    %v3997 = vmul.f32 %v3971, %v54
    %v4024 = vrot.slane %v3972, 2
    %v4025 = vrot.slane %v3973, 2
    %v4026 = vsel %vm3298, %v4024, %v4025
    %v4027 = vrot.slane %v3974, 2
    %v4028 = vrot.slane %v3975, 2
    %v4029 = vsel %vm3298, %v4027, %v4028
    %v4030 = vrot.slane %v3976, 2
    %v4031 = vrot.slane %v3977, 2
    %v4032 = vsel %vm3298, %v4030, %v4031
    %v4033 = vrot.slane %v3978, 2
    %v4034 = vrot.slane %v3979, 2
    %v4035 = vsel %vm3298, %v4033, %v4034
    %v4036 = vrot.slane %v3980, 2
    %v4037 = vrot.slane %v3981, 2
    %v4038 = vsel %vm3298, %v4036, %v4037
    %v4039 = vrot.slane %v3982, 2
    %v4040 = vrot.slane %v3983, 2
    %v4041 = vsel %vm3298, %v4039, %v4040
    %v4042 = vrot.slane %v3984, 2
    %v4043 = vrot.slane %v3985, 2
    %v4044 = vsel %vm3298, %v4042, %v4043
    %v4045 = vrot.slane %v3986, 2
    %v4046 = vrot.slane %v3987, 2
    %v4047 = vsel %vm3298, %v4045, %v4046
    %v4048 = vrot.slane %v3988, 2
    %v4049 = vrot.slane %v3989, 2
    %v4050 = vsel %vm3298, %v4048, %v4049
    %v4051 = vrot.slane %v3990, 2
    %v4052 = vrot.slane %v3991, 2
    %v4053 = vsel %vm3298, %v4051, %v4052
    %v4054 = vrot.slane %v3992, 2
    %v4055 = vrot.slane %v3993, 2
    %v4056 = vsel %vm3298, %v4054, %v4055
    %v4057 = vrot.slane %v3994, 2
    %v4058 = vrot.slane %v3995, 2
    %v4059 = vsel %vm3298, %v4057, %v4058
    %v4060 = vrot.slane %v3996, 2
    %v4061 = vrot.slane %v3997, 2
    %v4062 = vsel %vm3298, %v4060, %v4061
    %v4089 = vadd.f32 %v3509, %v4026
    %v4090 = vadd.f32 %v3510, %v4025
    %v4091 = vadd.f32 %v3511, %v4029
    %v4092 = vadd.f32 %v3512, %v4028
    %v4093 = vadd.f32 %v3513, %v4032
    %v4094 = vadd.f32 %v3514, %v4031
    %v4095 = vadd.f32 %v3515, %v4035
    %v4096 = vadd.f32 %v3516, %v4034
    %v4097 = vadd.f32 %v3517, %v4038
    %v4098 = vadd.f32 %v3518, %v4037
    %v4099 = vadd.f32 %v3519, %v4041
    %v4100 = vadd.f32 %v3520, %v4040
    %v4101 = vadd.f32 %v3521, %v4044
    %v4102 = vadd.f32 %v3522, %v4043
    %v4103 = vadd.f32 %v3523, %v4047
    %v4104 = vadd.f32 %v3524, %v4046
    %v4105 = vadd.f32 %v3525, %v4050
    %v4106 = vadd.f32 %v3526, %v4049
    %v4107 = vadd.f32 %v3527, %v4053
    %v4108 = vadd.f32 %v3528, %v4052
    %v4109 = vadd.f32 %v3529, %v4056
    %v4110 = vadd.f32 %v3530, %v4055
    %v4111 = vadd.f32 %v3531, %v4059
    %v4112 = vadd.f32 %v3532, %v4058
    %v4113 = vadd.f32 %v3533, %v4062
    %v4114 = vadd.f32 %v3534, %v4061
    %s4115 = sld [smem:[#allocation2 + $0x26]]
    %v4116 = vstv %s4115
    %v4117 = vmul.f32 %v4116, %v29
    %v4118 = vmul.f32 %v4116, %v30
    %v4119 = vmul.f32 %v4116, %v31
    %v4120 = vmul.f32 %v4116, %v32
    %v4121 = vmul.f32 %v4116, %v33
    %v4122 = vmul.f32 %v4116, %v34
    %v4123 = vmul.f32 %v4116, %v35
    %v4124 = vmul.f32 %v4116, %v36
    %v4125 = vmul.f32 %v4116, %v37
    %v4126 = vmul.f32 %v4116, %v38
    %v4127 = vmul.f32 %v4116, %v39
    %v4128 = vmul.f32 %v4116, %v40
    %v4129 = vmul.f32 %v4116, %v41
    %v4130 = vmul.f32 %v4116, %v42
    %v4131 = vmul.f32 %v4116, %v43
    %v4132 = vmul.f32 %v4116, %v44
    %v4133 = vmul.f32 %v4116, %v45
    %v4134 = vmul.f32 %v4116, %v46
    %v4135 = vmul.f32 %v4116, %v47
    %v4136 = vmul.f32 %v4116, %v48
    %v4137 = vmul.f32 %v4116, %v49
    %v4138 = vmul.f32 %v4116, %v50
    %v4139 = vmul.f32 %v4116, %v51
    %v4140 = vmul.f32 %v4116, %v52
    %v4141 = vmul.f32 %v4116, %v53
    %v4142 = vmul.f32 %v4116, %v54
    %v4169 = vrot.slane %v4117, 2
    %v4170 = vrot.slane %v4118, 2
    %v4171 = vsel %vm3298, %v4169, %v4170
    %v4172 = vrot.slane %v4119, 2
    %v4173 = vrot.slane %v4120, 2
    %v4174 = vsel %vm3298, %v4172, %v4173
    %v4175 = vrot.slane %v4121, 2
    %v4176 = vrot.slane %v4122, 2
    %v4177 = vsel %vm3298, %v4175, %v4176
    %v4178 = vrot.slane %v4123, 2
    %v4179 = vrot.slane %v4124, 2
    %v4180 = vsel %vm3298, %v4178, %v4179
    %v4181 = vrot.slane %v4125, 2
    %v4182 = vrot.slane %v4126, 2
    %v4183 = vsel %vm3298, %v4181, %v4182
    %v4184 = vrot.slane %v4127, 2
    %v4185 = vrot.slane %v4128, 2
    %v4186 = vsel %vm3298, %v4184, %v4185
    %v4187 = vrot.slane %v4129, 2
    %v4188 = vrot.slane %v4130, 2
    %v4189 = vsel %vm3298, %v4187, %v4188
    %v4190 = vrot.slane %v4131, 2
    %v4191 = vrot.slane %v4132, 2
    %v4192 = vsel %vm3298, %v4190, %v4191
    %v4193 = vrot.slane %v4133, 2
    %v4194 = vrot.slane %v4134, 2
    %v4195 = vsel %vm3298, %v4193, %v4194
    %v4196 = vrot.slane %v4135, 2
    %v4197 = vrot.slane %v4136, 2
    %v4198 = vsel %vm3298, %v4196, %v4197
    %v4199 = vrot.slane %v4137, 2
    %v4200 = vrot.slane %v4138, 2
    %v4201 = vsel %vm3298, %v4199, %v4200
    %v4202 = vrot.slane %v4139, 2
    %v4203 = vrot.slane %v4140, 2
    %v4204 = vsel %vm3298, %v4202, %v4203
    %v4205 = vrot.slane %v4141, 2
    %v4206 = vrot.slane %v4142, 2
    %v4207 = vsel %vm3298, %v4205, %v4206
    %v4234 = vadd.f32 %v3654, %v4171
    %v4235 = vadd.f32 %v3655, %v4170
    %v4236 = vadd.f32 %v3656, %v4174
    %v4237 = vadd.f32 %v3657, %v4173
    %v4238 = vadd.f32 %v3658, %v4177
    %v4239 = vadd.f32 %v3659, %v4176
    %v4240 = vadd.f32 %v3660, %v4180
    %v4241 = vadd.f32 %v3661, %v4179
    %v4242 = vadd.f32 %v3662, %v4183
    %v4243 = vadd.f32 %v3663, %v4182
    %v4244 = vadd.f32 %v3664, %v4186
    %v4245 = vadd.f32 %v3665, %v4185
    %v4246 = vadd.f32 %v3666, %v4189
    %v4247 = vadd.f32 %v3667, %v4188
    %v4248 = vadd.f32 %v3668, %v4192
    %v4249 = vadd.f32 %v3669, %v4191
    %v4250 = vadd.f32 %v3670, %v4195
    %v4251 = vadd.f32 %v3671, %v4194
    %v4252 = vadd.f32 %v3672, %v4198
    %v4253 = vadd.f32 %v3673, %v4197
    %v4254 = vadd.f32 %v3674, %v4201
    %v4255 = vadd.f32 %v3675, %v4200
    %v4256 = vadd.f32 %v3676, %v4204
    %v4257 = vadd.f32 %v3677, %v4203
    %v4258 = vadd.f32 %v3678, %v4207
    %v4259 = vadd.f32 %v3679, %v4206
    %s4260 = sld [smem:[#allocation2 + $0x36]]
    %v4261 = vstv %s4260
    %v4262 = vmul.f32 %v4261, %v29
    %v4263 = vmul.f32 %v4261, %v30
    %v4264 = vmul.f32 %v4261, %v31
    %v4265 = vmul.f32 %v4261, %v32
    %v4266 = vmul.f32 %v4261, %v33
    %v4267 = vmul.f32 %v4261, %v34
    %v4268 = vmul.f32 %v4261, %v35
    %v4269 = vmul.f32 %v4261, %v36
    %v4270 = vmul.f32 %v4261, %v37
    %v4271 = vmul.f32 %v4261, %v38
    %v4272 = vmul.f32 %v4261, %v39
    %v4273 = vmul.f32 %v4261, %v40
    %v4274 = vmul.f32 %v4261, %v41
    %v4275 = vmul.f32 %v4261, %v42
    %v4276 = vmul.f32 %v4261, %v43
    %v4277 = vmul.f32 %v4261, %v44
    %v4278 = vmul.f32 %v4261, %v45
    %v4279 = vmul.f32 %v4261, %v46
    %v4280 = vmul.f32 %v4261, %v47
    %v4281 = vmul.f32 %v4261, %v48
    %v4282 = vmul.f32 %v4261, %v49
    %v4283 = vmul.f32 %v4261, %v50
    %v4284 = vmul.f32 %v4261, %v51
    %v4285 = vmul.f32 %v4261, %v52
    %v4286 = vmul.f32 %v4261, %v53
    %v4287 = vmul.f32 %v4261, %v54
    %v4314 = vrot.slane %v4262, 2
    %v4315 = vrot.slane %v4263, 2
    %v4316 = vsel %vm3298, %v4314, %v4315
    %v4317 = vrot.slane %v4264, 2
    %v4318 = vrot.slane %v4265, 2
    %v4319 = vsel %vm3298, %v4317, %v4318
    %v4320 = vrot.slane %v4266, 2
    %v4321 = vrot.slane %v4267, 2
    %v4322 = vsel %vm3298, %v4320, %v4321
    %v4323 = vrot.slane %v4268, 2
    %v4324 = vrot.slane %v4269, 2
    %v4325 = vsel %vm3298, %v4323, %v4324
    %v4326 = vrot.slane %v4270, 2
    %v4327 = vrot.slane %v4271, 2
    %v4328 = vsel %vm3298, %v4326, %v4327
    %v4329 = vrot.slane %v4272, 2
    %v4330 = vrot.slane %v4273, 2
    %v4331 = vsel %vm3298, %v4329, %v4330
    %v4332 = vrot.slane %v4274, 2
    %v4333 = vrot.slane %v4275, 2
    %v4334 = vsel %vm3298, %v4332, %v4333
    %v4335 = vrot.slane %v4276, 2
    %v4336 = vrot.slane %v4277, 2
    %v4337 = vsel %vm3298, %v4335, %v4336
    %v4338 = vrot.slane %v4278, 2
    %v4339 = vrot.slane %v4279, 2
    %v4340 = vsel %vm3298, %v4338, %v4339
    %v4341 = vrot.slane %v4280, 2
    %v4342 = vrot.slane %v4281, 2
    %v4343 = vsel %vm3298, %v4341, %v4342
    %v4344 = vrot.slane %v4282, 2
    %v4345 = vrot.slane %v4283, 2
    %v4346 = vsel %vm3298, %v4344, %v4345
    %v4347 = vrot.slane %v4284, 2
    %v4348 = vrot.slane %v4285, 2
    %v4349 = vsel %vm3298, %v4347, %v4348
    %v4350 = vrot.slane %v4286, 2
    %v4351 = vrot.slane %v4287, 2
    %v4352 = vsel %vm3298, %v4350, %v4351
    %v4379 = vadd.f32 %v3799, %v4316
    %v4380 = vadd.f32 %v3800, %v4315
    %v4381 = vadd.f32 %v3801, %v4319
    %v4382 = vadd.f32 %v3802, %v4318
    %v4383 = vadd.f32 %v3803, %v4322
    %v4384 = vadd.f32 %v3804, %v4321
    %v4385 = vadd.f32 %v3805, %v4325
    %v4386 = vadd.f32 %v3806, %v4324
    %v4387 = vadd.f32 %v3807, %v4328
    %v4388 = vadd.f32 %v3808, %v4327
    %v4389 = vadd.f32 %v3809, %v4331
    %v4390 = vadd.f32 %v3810, %v4330
    %v4391 = vadd.f32 %v3811, %v4334
    %v4392 = vadd.f32 %v3812, %v4333
    %v4393 = vadd.f32 %v3813, %v4337
    %v4394 = vadd.f32 %v3814, %v4336
    %v4395 = vadd.f32 %v3815, %v4340
    %v4396 = vadd.f32 %v3816, %v4339
    %v4397 = vadd.f32 %v3817, %v4343
    %v4398 = vadd.f32 %v3818, %v4342
    %v4399 = vadd.f32 %v3819, %v4346
    %v4400 = vadd.f32 %v3820, %v4345
    %v4401 = vadd.f32 %v3821, %v4349
    %v4402 = vadd.f32 %v3822, %v4348
    %v4403 = vadd.f32 %v3823, %v4352
    %v4404 = vadd.f32 %v3824, %v4351
    %s4405 = sld [smem:[#allocation2 + $0xa]]
    %v4406 = vstv %s4405
    %v4407 = vmul.f32 %v4406, %v31
    %v4408 = vmul.f32 %v4406, %v32
    %v4409 = vmul.f32 %v4406, %v33
    %v4410 = vmul.f32 %v4406, %v34
    %v4411 = vmul.f32 %v4406, %v35
    %v4412 = vmul.f32 %v4406, %v36
    %v4413 = vmul.f32 %v4406, %v37
    %v4414 = vmul.f32 %v4406, %v38
    %v4415 = vmul.f32 %v4406, %v39
    %v4416 = vmul.f32 %v4406, %v40
    %v4417 = vmul.f32 %v4406, %v41
    %v4418 = vmul.f32 %v4406, %v42
    %v4419 = vmul.f32 %v4406, %v43
    %v4420 = vmul.f32 %v4406, %v44
    %v4421 = vmul.f32 %v4406, %v45
    %v4422 = vmul.f32 %v4406, %v46
    %v4423 = vmul.f32 %v4406, %v47
    %v4424 = vmul.f32 %v4406, %v48
    %v4425 = vmul.f32 %v4406, %v49
    %v4426 = vmul.f32 %v4406, %v50
    %v4427 = vmul.f32 %v4406, %v51
    %v4428 = vmul.f32 %v4406, %v52
    %v4429 = vmul.f32 %v4406, %v53
    %v4430 = vmul.f32 %v4406, %v54
    %v4431 = vmul.f32 %v4406, %v55
    %v4432 = vmul.f32 %v4406, %v56
    %v4459 = vrot.slane %v4407, 2
    %v4460 = vrot.slane %v4408, 2
    %v4461 = vsel %vm3298, %v4459, %v4460
    %v4462 = vrot.slane %v4409, 2
    %v4463 = vrot.slane %v4410, 2
    %v4464 = vsel %vm3298, %v4462, %v4463
    %v4465 = vrot.slane %v4411, 2
    %v4466 = vrot.slane %v4412, 2
    %v4467 = vsel %vm3298, %v4465, %v4466
    %v4468 = vrot.slane %v4413, 2
    %v4469 = vrot.slane %v4414, 2
    %v4470 = vsel %vm3298, %v4468, %v4469
    %v4471 = vrot.slane %v4415, 2
    %v4472 = vrot.slane %v4416, 2
    %v4473 = vsel %vm3298, %v4471, %v4472
    %v4474 = vrot.slane %v4417, 2
    %v4475 = vrot.slane %v4418, 2
    %v4476 = vsel %vm3298, %v4474, %v4475
    %v4477 = vrot.slane %v4419, 2
    %v4478 = vrot.slane %v4420, 2
    %v4479 = vsel %vm3298, %v4477, %v4478
    %v4480 = vrot.slane %v4421, 2
    %v4481 = vrot.slane %v4422, 2
    %v4482 = vsel %vm3298, %v4480, %v4481
    %v4483 = vrot.slane %v4423, 2
    %v4484 = vrot.slane %v4424, 2
    %v4485 = vsel %vm3298, %v4483, %v4484
    %v4486 = vrot.slane %v4425, 2
    %v4487 = vrot.slane %v4426, 2
    %v4488 = vsel %vm3298, %v4486, %v4487
    %v4489 = vrot.slane %v4427, 2
    %v4490 = vrot.slane %v4428, 2
    %v4491 = vsel %vm3298, %v4489, %v4490
    %v4492 = vrot.slane %v4429, 2
    %v4493 = vrot.slane %v4430, 2
    %v4494 = vsel %vm3298, %v4492, %v4493
    %v4495 = vrot.slane %v4431, 2
    %v4496 = vrot.slane %v4432, 2
    %v4497 = vsel %vm3298, %v4495, %v4496
    %v4524 = vadd.f32 %v3944, %v4461
    %v4525 = vadd.f32 %v3945, %v4460
    %v4526 = vadd.f32 %v3946, %v4464
    %v4527 = vadd.f32 %v3947, %v4463
    %v4528 = vadd.f32 %v3948, %v4467
    %v4529 = vadd.f32 %v3949, %v4466
    %v4530 = vadd.f32 %v3950, %v4470
    %v4531 = vadd.f32 %v3951, %v4469
    %v4532 = vadd.f32 %v3952, %v4473
    %v4533 = vadd.f32 %v3953, %v4472
    %v4534 = vadd.f32 %v3954, %v4476
    %v4535 = vadd.f32 %v3955, %v4475
    %v4536 = vadd.f32 %v3956, %v4479
    %v4537 = vadd.f32 %v3957, %v4478
    %v4538 = vadd.f32 %v3958, %v4482
    %v4539 = vadd.f32 %v3959, %v4481
    %v4540 = vadd.f32 %v3960, %v4485
    %v4541 = vadd.f32 %v3961, %v4484
    %v4542 = vadd.f32 %v3962, %v4488
    %v4543 = vadd.f32 %v3963, %v4487
    %v4544 = vadd.f32 %v3964, %v4491
    %v4545 = vadd.f32 %v3965, %v4490
    %v4546 = vadd.f32 %v3966, %v4494
    %v4547 = vadd.f32 %v3967, %v4493
    %v4548 = vadd.f32 %v3968, %v4497
    %v4549 = vadd.f32 %v3969, %v4496
    %s4550 = sld [smem:[#allocation2 + $0x1a]]
    %v4551 = vstv %s4550
    %v4552 = vmul.f32 %v4551, %v31
    %v4553 = vmul.f32 %v4551, %v32
    %v4554 = vmul.f32 %v4551, %v33
    %v4555 = vmul.f32 %v4551, %v34
    %v4556 = vmul.f32 %v4551, %v35
    %v4557 = vmul.f32 %v4551, %v36
    %v4558 = vmul.f32 %v4551, %v37
    %v4559 = vmul.f32 %v4551, %v38
    %v4560 = vmul.f32 %v4551, %v39
    %v4561 = vmul.f32 %v4551, %v40
    %v4562 = vmul.f32 %v4551, %v41
    %v4563 = vmul.f32 %v4551, %v42
    %v4564 = vmul.f32 %v4551, %v43
    %v4565 = vmul.f32 %v4551, %v44
    %v4566 = vmul.f32 %v4551, %v45
    %v4567 = vmul.f32 %v4551, %v46
    %v4568 = vmul.f32 %v4551, %v47
    %v4569 = vmul.f32 %v4551, %v48
    %v4570 = vmul.f32 %v4551, %v49
    %v4571 = vmul.f32 %v4551, %v50
    %v4572 = vmul.f32 %v4551, %v51
    %v4573 = vmul.f32 %v4551, %v52
    %v4574 = vmul.f32 %v4551, %v53
    %v4575 = vmul.f32 %v4551, %v54
    %v4576 = vmul.f32 %v4551, %v55
    %v4577 = vmul.f32 %v4551, %v56
    %v4604 = vrot.slane %v4552, 2
    %v4605 = vrot.slane %v4553, 2
    %v4606 = vsel %vm3298, %v4604, %v4605
    %v4607 = vrot.slane %v4554, 2
    %v4608 = vrot.slane %v4555, 2
    %v4609 = vsel %vm3298, %v4607, %v4608
    %v4610 = vrot.slane %v4556, 2
    %v4611 = vrot.slane %v4557, 2
    %v4612 = vsel %vm3298, %v4610, %v4611
    %v4613 = vrot.slane %v4558, 2
    %v4614 = vrot.slane %v4559, 2
    %v4615 = vsel %vm3298, %v4613, %v4614
    %v4616 = vrot.slane %v4560, 2
    %v4617 = vrot.slane %v4561, 2
    %v4618 = vsel %vm3298, %v4616, %v4617
    %v4619 = vrot.slane %v4562, 2
    %v4620 = vrot.slane %v4563, 2
    %v4621 = vsel %vm3298, %v4619, %v4620
    %v4622 = vrot.slane %v4564, 2
    %v4623 = vrot.slane %v4565, 2
    %v4624 = vsel %vm3298, %v4622, %v4623
    %v4625 = vrot.slane %v4566, 2
    %v4626 = vrot.slane %v4567, 2
    %v4627 = vsel %vm3298, %v4625, %v4626
    %v4628 = vrot.slane %v4568, 2
    %v4629 = vrot.slane %v4569, 2
    %v4630 = vsel %vm3298, %v4628, %v4629
    %v4631 = vrot.slane %v4570, 2
    %v4632 = vrot.slane %v4571, 2
    %v4633 = vsel %vm3298, %v4631, %v4632
    %v4634 = vrot.slane %v4572, 2
    %v4635 = vrot.slane %v4573, 2
    %v4636 = vsel %vm3298, %v4634, %v4635
    %v4637 = vrot.slane %v4574, 2
    %v4638 = vrot.slane %v4575, 2
    %v4639 = vsel %vm3298, %v4637, %v4638
    %v4640 = vrot.slane %v4576, 2
    %v4641 = vrot.slane %v4577, 2
    %v4642 = vsel %vm3298, %v4640, %v4641
    %v4669 = vadd.f32 %v4089, %v4606
    %v4670 = vadd.f32 %v4090, %v4605
    %v4671 = vadd.f32 %v4091, %v4609
    %v4672 = vadd.f32 %v4092, %v4608
    %v4673 = vadd.f32 %v4093, %v4612
    %v4674 = vadd.f32 %v4094, %v4611
    %v4675 = vadd.f32 %v4095, %v4615
    %v4676 = vadd.f32 %v4096, %v4614
    %v4677 = vadd.f32 %v4097, %v4618
    %v4678 = vadd.f32 %v4098, %v4617
    %v4679 = vadd.f32 %v4099, %v4621
    %v4680 = vadd.f32 %v4100, %v4620
    %v4681 = vadd.f32 %v4101, %v4624
    %v4682 = vadd.f32 %v4102, %v4623
    %v4683 = vadd.f32 %v4103, %v4627
    %v4684 = vadd.f32 %v4104, %v4626
    %v4685 = vadd.f32 %v4105, %v4630
    %v4686 = vadd.f32 %v4106, %v4629
    %v4687 = vadd.f32 %v4107, %v4633
    %v4688 = vadd.f32 %v4108, %v4632
    %v4689 = vadd.f32 %v4109, %v4636
    %v4690 = vadd.f32 %v4110, %v4635
    %v4691 = vadd.f32 %v4111, %v4639
    %v4692 = vadd.f32 %v4112, %v4638
    %v4693 = vadd.f32 %v4113, %v4642
    %v4694 = vadd.f32 %v4114, %v4641
    %s4695 = sld [smem:[#allocation2 + $0x2a]]
    %v4696 = vstv %s4695
    %v4697 = vmul.f32 %v4696, %v31
    %v4698 = vmul.f32 %v4696, %v32
    %v4699 = vmul.f32 %v4696, %v33
    %v4700 = vmul.f32 %v4696, %v34
    %v4701 = vmul.f32 %v4696, %v35
    %v4702 = vmul.f32 %v4696, %v36
    %v4703 = vmul.f32 %v4696, %v37
    %v4704 = vmul.f32 %v4696, %v38
    %v4705 = vmul.f32 %v4696, %v39
    %v4706 = vmul.f32 %v4696, %v40
    %v4707 = vmul.f32 %v4696, %v41
    %v4708 = vmul.f32 %v4696, %v42
    %v4709 = vmul.f32 %v4696, %v43
    %v4710 = vmul.f32 %v4696, %v44
    %v4711 = vmul.f32 %v4696, %v45
    %v4712 = vmul.f32 %v4696, %v46
    %v4713 = vmul.f32 %v4696, %v47
    %v4714 = vmul.f32 %v4696, %v48
    %v4715 = vmul.f32 %v4696, %v49
    %v4716 = vmul.f32 %v4696, %v50
    %v4717 = vmul.f32 %v4696, %v51
    %v4718 = vmul.f32 %v4696, %v52
    %v4719 = vmul.f32 %v4696, %v53
    %v4720 = vmul.f32 %v4696, %v54
    %v4721 = vmul.f32 %v4696, %v55
    %v4722 = vmul.f32 %v4696, %v56
    %v4749 = vrot.slane %v4697, 2
    %v4750 = vrot.slane %v4698, 2
    %v4751 = vsel %vm3298, %v4749, %v4750
    %v4752 = vrot.slane %v4699, 2
    %v4753 = vrot.slane %v4700, 2
    %v4754 = vsel %vm3298, %v4752, %v4753
    %v4755 = vrot.slane %v4701, 2
    %v4756 = vrot.slane %v4702, 2
    %v4757 = vsel %vm3298, %v4755, %v4756
    %v4758 = vrot.slane %v4703, 2
    %v4759 = vrot.slane %v4704, 2
    %v4760 = vsel %vm3298, %v4758, %v4759
    %v4761 = vrot.slane %v4705, 2
    %v4762 = vrot.slane %v4706, 2
    %v4763 = vsel %vm3298, %v4761, %v4762
    %v4764 = vrot.slane %v4707, 2
    %v4765 = vrot.slane %v4708, 2
    %v4766 = vsel %vm3298, %v4764, %v4765
    %v4767 = vrot.slane %v4709, 2
    %v4768 = vrot.slane %v4710, 2
    %v4769 = vsel %vm3298, %v4767, %v4768
    %v4770 = vrot.slane %v4711, 2
    %v4771 = vrot.slane %v4712, 2
    %v4772 = vsel %vm3298, %v4770, %v4771
    %v4773 = vrot.slane %v4713, 2
    %v4774 = vrot.slane %v4714, 2
    %v4775 = vsel %vm3298, %v4773, %v4774
    %v4776 = vrot.slane %v4715, 2
    %v4777 = vrot.slane %v4716, 2
    %v4778 = vsel %vm3298, %v4776, %v4777
    %v4779 = vrot.slane %v4717, 2
    %v4780 = vrot.slane %v4718, 2
    %v4781 = vsel %vm3298, %v4779, %v4780
    %v4782 = vrot.slane %v4719, 2
    %v4783 = vrot.slane %v4720, 2
    %v4784 = vsel %vm3298, %v4782, %v4783
    %v4785 = vrot.slane %v4721, 2
    %v4786 = vrot.slane %v4722, 2
    %v4787 = vsel %vm3298, %v4785, %v4786
    %v4814 = vadd.f32 %v4234, %v4751
    %v4815 = vadd.f32 %v4235, %v4750
    %v4816 = vadd.f32 %v4236, %v4754
    %v4817 = vadd.f32 %v4237, %v4753
    %v4818 = vadd.f32 %v4238, %v4757
    %v4819 = vadd.f32 %v4239, %v4756
    %v4820 = vadd.f32 %v4240, %v4760
    %v4821 = vadd.f32 %v4241, %v4759
    %v4822 = vadd.f32 %v4242, %v4763
    %v4823 = vadd.f32 %v4243, %v4762
    %v4824 = vadd.f32 %v4244, %v4766
    %v4825 = vadd.f32 %v4245, %v4765
    %v4826 = vadd.f32 %v4246, %v4769
    %v4827 = vadd.f32 %v4247, %v4768
    %v4828 = vadd.f32 %v4248, %v4772
    %v4829 = vadd.f32 %v4249, %v4771
    %v4830 = vadd.f32 %v4250, %v4775
    %v4831 = vadd.f32 %v4251, %v4774
    %v4832 = vadd.f32 %v4252, %v4778
    %v4833 = vadd.f32 %v4253, %v4777
    %v4834 = vadd.f32 %v4254, %v4781
    %v4835 = vadd.f32 %v4255, %v4780
    %v4836 = vadd.f32 %v4256, %v4784
    %v4837 = vadd.f32 %v4257, %v4783
    %v4838 = vadd.f32 %v4258, %v4787
    %v4839 = vadd.f32 %v4259, %v4786
    %s4840 = sld [smem:[#allocation2 + $0x3a]]
    %v4841 = vstv %s4840
    %v4842 = vmul.f32 %v4841, %v31
    %v4843 = vmul.f32 %v4841, %v32
    %v4844 = vmul.f32 %v4841, %v33
    %v4845 = vmul.f32 %v4841, %v34
    %v4846 = vmul.f32 %v4841, %v35
    %v4847 = vmul.f32 %v4841, %v36
    %v4848 = vmul.f32 %v4841, %v37
    %v4849 = vmul.f32 %v4841, %v38
    %v4850 = vmul.f32 %v4841, %v39
    %v4851 = vmul.f32 %v4841, %v40
    %v4852 = vmul.f32 %v4841, %v41
    %v4853 = vmul.f32 %v4841, %v42
    %v4854 = vmul.f32 %v4841, %v43
    %v4855 = vmul.f32 %v4841, %v44
    %v4856 = vmul.f32 %v4841, %v45
    %v4857 = vmul.f32 %v4841, %v46
    %v4858 = vmul.f32 %v4841, %v47
    %v4859 = vmul.f32 %v4841, %v48
    %v4860 = vmul.f32 %v4841, %v49
    %v4861 = vmul.f32 %v4841, %v50
    %v4862 = vmul.f32 %v4841, %v51
    %v4863 = vmul.f32 %v4841, %v52
    %v4864 = vmul.f32 %v4841, %v53
    %v4865 = vmul.f32 %v4841, %v54
    %v4866 = vmul.f32 %v4841, %v55
    %v4867 = vmul.f32 %v4841, %v56
    %v4894 = vrot.slane %v4842, 2
    %v4895 = vrot.slane %v4843, 2
    %v4896 = vsel %vm3298, %v4894, %v4895
    %v4897 = vrot.slane %v4844, 2
    %v4898 = vrot.slane %v4845, 2
    %v4899 = vsel %vm3298, %v4897, %v4898
    %v4900 = vrot.slane %v4846, 2
    %v4901 = vrot.slane %v4847, 2
    %v4902 = vsel %vm3298, %v4900, %v4901
    %v4903 = vrot.slane %v4848, 2
    %v4904 = vrot.slane %v4849, 2
    %v4905 = vsel %vm3298, %v4903, %v4904
    %v4906 = vrot.slane %v4850, 2
    %v4907 = vrot.slane %v4851, 2
    %v4908 = vsel %vm3298, %v4906, %v4907
    %v4909 = vrot.slane %v4852, 2
    %v4910 = vrot.slane %v4853, 2
    %v4911 = vsel %vm3298, %v4909, %v4910
    %v4912 = vrot.slane %v4854, 2
    %v4913 = vrot.slane %v4855, 2
    %v4914 = vsel %vm3298, %v4912, %v4913
    %v4915 = vrot.slane %v4856, 2
    %v4916 = vrot.slane %v4857, 2
    %v4917 = vsel %vm3298, %v4915, %v4916
    %v4918 = vrot.slane %v4858, 2
    %v4919 = vrot.slane %v4859, 2
    %v4920 = vsel %vm3298, %v4918, %v4919
    %v4921 = vrot.slane %v4860, 2
    %v4922 = vrot.slane %v4861, 2
    %v4923 = vsel %vm3298, %v4921, %v4922
    %v4924 = vrot.slane %v4862, 2
    %v4925 = vrot.slane %v4863, 2
    %v4926 = vsel %vm3298, %v4924, %v4925
    %v4927 = vrot.slane %v4864, 2
    %v4928 = vrot.slane %v4865, 2
    %v4929 = vsel %vm3298, %v4927, %v4928
    %v4930 = vrot.slane %v4866, 2
    %v4931 = vrot.slane %v4867, 2
    %v4932 = vsel %vm3298, %v4930, %v4931
    %v4959 = vadd.f32 %v4379, %v4896
    %v4960 = vadd.f32 %v4380, %v4895
    %v4961 = vadd.f32 %v4381, %v4899
    %v4962 = vadd.f32 %v4382, %v4898
    %v4963 = vadd.f32 %v4383, %v4902
    %v4964 = vadd.f32 %v4384, %v4901
    %v4965 = vadd.f32 %v4385, %v4905
    %v4966 = vadd.f32 %v4386, %v4904
    %v4967 = vadd.f32 %v4387, %v4908
    %v4968 = vadd.f32 %v4388, %v4907
    %v4969 = vadd.f32 %v4389, %v4911
    %v4970 = vadd.f32 %v4390, %v4910
    %v4971 = vadd.f32 %v4391, %v4914
    %v4972 = vadd.f32 %v4392, %v4913
    %v4973 = vadd.f32 %v4393, %v4917
    %v4974 = vadd.f32 %v4394, %v4916
    %v4975 = vadd.f32 %v4395, %v4920
    %v4976 = vadd.f32 %v4396, %v4919
    %v4977 = vadd.f32 %v4397, %v4923
    %v4978 = vadd.f32 %v4398, %v4922
    %v4979 = vadd.f32 %v4399, %v4926
    %v4980 = vadd.f32 %v4400, %v4925
    %v4981 = vadd.f32 %v4401, %v4929
    %v4982 = vadd.f32 %v4402, %v4928
    %v4983 = vadd.f32 %v4403, %v4932
    %v4984 = vadd.f32 %v4404, %v4931
    %s4985 = sld [smem:[#allocation2 + $0xe]]
    %v4986 = vstv %s4985
    %v4987 = vmul.f32 %v4986, %v33
    %v4988 = vmul.f32 %v4986, %v34
    %v4989 = vmul.f32 %v4986, %v35
    %v4990 = vmul.f32 %v4986, %v36
    %v4991 = vmul.f32 %v4986, %v37
    %v4992 = vmul.f32 %v4986, %v38
    %v4993 = vmul.f32 %v4986, %v39
    %v4994 = vmul.f32 %v4986, %v40
    %v4995 = vmul.f32 %v4986, %v41
    %v4996 = vmul.f32 %v4986, %v42
    %v4997 = vmul.f32 %v4986, %v43
    %v4998 = vmul.f32 %v4986, %v44
    %v4999 = vmul.f32 %v4986, %v45
    %v5000 = vmul.f32 %v4986, %v46
    %v5001 = vmul.f32 %v4986, %v47
    %v5002 = vmul.f32 %v4986, %v48
    %v5003 = vmul.f32 %v4986, %v49
    %v5004 = vmul.f32 %v4986, %v50
    %v5005 = vmul.f32 %v4986, %v51
    %v5006 = vmul.f32 %v4986, %v52
    %v5007 = vmul.f32 %v4986, %v53
    %v5008 = vmul.f32 %v4986, %v54
    %v5009 = vmul.f32 %v4986, %v55
    %v5010 = vmul.f32 %v4986, %v56
    %v5011 = vmul.f32 %v4986, %v57
    %v5012 = vmul.f32 %v4986, %v58
    %v5039 = vrot.slane %v4987, 2
    %v5040 = vrot.slane %v4988, 2
    %v5041 = vsel %vm3298, %v5039, %v5040
    %v5042 = vrot.slane %v4989, 2
    %v5043 = vrot.slane %v4990, 2
    %v5044 = vsel %vm3298, %v5042, %v5043
    %v5045 = vrot.slane %v4991, 2
    %v5046 = vrot.slane %v4992, 2
    %v5047 = vsel %vm3298, %v5045, %v5046
    %v5048 = vrot.slane %v4993, 2
    %v5049 = vrot.slane %v4994, 2
    %v5050 = vsel %vm3298, %v5048, %v5049
    %v5051 = vrot.slane %v4995, 2
    %v5052 = vrot.slane %v4996, 2
    %v5053 = vsel %vm3298, %v5051, %v5052
    %v5054 = vrot.slane %v4997, 2
    %v5055 = vrot.slane %v4998, 2
    %v5056 = vsel %vm3298, %v5054, %v5055
    %v5057 = vrot.slane %v4999, 2
    %v5058 = vrot.slane %v5000, 2
    %v5059 = vsel %vm3298, %v5057, %v5058
    %v5060 = vrot.slane %v5001, 2
    %v5061 = vrot.slane %v5002, 2
    %v5062 = vsel %vm3298, %v5060, %v5061
    %v5063 = vrot.slane %v5003, 2
    %v5064 = vrot.slane %v5004, 2
    %v5065 = vsel %vm3298, %v5063, %v5064
    %v5066 = vrot.slane %v5005, 2
    %v5067 = vrot.slane %v5006, 2
    %v5068 = vsel %vm3298, %v5066, %v5067
    %v5069 = vrot.slane %v5007, 2
    %v5070 = vrot.slane %v5008, 2
    %v5071 = vsel %vm3298, %v5069, %v5070
    %v5072 = vrot.slane %v5009, 2
    %v5073 = vrot.slane %v5010, 2
    %v5074 = vsel %vm3298, %v5072, %v5073
    %v5075 = vrot.slane %v5011, 2
    %v5076 = vrot.slane %v5012, 2
    %v5077 = vsel %vm3298, %v5075, %v5076
    %v5104 = vadd.f32 %v4524, %v5041
    %v5105 = vadd.f32 %v4525, %v5040
    %v5106 = vadd.f32 %v4526, %v5044
    %v5107 = vadd.f32 %v4527, %v5043
    %v5108 = vadd.f32 %v4528, %v5047
    %v5109 = vadd.f32 %v4529, %v5046
    %v5110 = vadd.f32 %v4530, %v5050
    %v5111 = vadd.f32 %v4531, %v5049
    %v5112 = vadd.f32 %v4532, %v5053
    %v5113 = vadd.f32 %v4533, %v5052
    %v5114 = vadd.f32 %v4534, %v5056
    %v5115 = vadd.f32 %v4535, %v5055
    %v5116 = vadd.f32 %v4536, %v5059
    %v5117 = vadd.f32 %v4537, %v5058
    %v5118 = vadd.f32 %v4538, %v5062
    %v5119 = vadd.f32 %v4539, %v5061
    %v5120 = vadd.f32 %v4540, %v5065
    %v5121 = vadd.f32 %v4541, %v5064
    %v5122 = vadd.f32 %v4542, %v5068
    %v5123 = vadd.f32 %v4543, %v5067
    %v5124 = vadd.f32 %v4544, %v5071
    %v5125 = vadd.f32 %v4545, %v5070
    %v5126 = vadd.f32 %v4546, %v5074
    %v5127 = vadd.f32 %v4547, %v5073
    %v5128 = vadd.f32 %v4548, %v5077
    %v5129 = vadd.f32 %v4549, %v5076
    %s5130 = sld [smem:[#allocation2 + $0x1e]]
    %v5131 = vstv %s5130
    %v5132 = vmul.f32 %v5131, %v33
    %v5133 = vmul.f32 %v5131, %v34
    %v5134 = vmul.f32 %v5131, %v35
    %v5135 = vmul.f32 %v5131, %v36
    %v5136 = vmul.f32 %v5131, %v37
    %v5137 = vmul.f32 %v5131, %v38
    %v5138 = vmul.f32 %v5131, %v39
    %v5139 = vmul.f32 %v5131, %v40
    %v5140 = vmul.f32 %v5131, %v41
    %v5141 = vmul.f32 %v5131, %v42
    %v5142 = vmul.f32 %v5131, %v43
    %v5143 = vmul.f32 %v5131, %v44
    %v5144 = vmul.f32 %v5131, %v45
    %v5145 = vmul.f32 %v5131, %v46
    %v5146 = vmul.f32 %v5131, %v47
    %v5147 = vmul.f32 %v5131, %v48
    %v5148 = vmul.f32 %v5131, %v49
    %v5149 = vmul.f32 %v5131, %v50
    %v5150 = vmul.f32 %v5131, %v51
    %v5151 = vmul.f32 %v5131, %v52
    %v5152 = vmul.f32 %v5131, %v53
    %v5153 = vmul.f32 %v5131, %v54
    %v5154 = vmul.f32 %v5131, %v55
    %v5155 = vmul.f32 %v5131, %v56
    %v5156 = vmul.f32 %v5131, %v57
    %v5157 = vmul.f32 %v5131, %v58
    %v5184 = vrot.slane %v5132, 2
    %v5185 = vrot.slane %v5133, 2
    %v5186 = vsel %vm3298, %v5184, %v5185
    %v5187 = vrot.slane %v5134, 2
    %v5188 = vrot.slane %v5135, 2
    %v5189 = vsel %vm3298, %v5187, %v5188
    %v5190 = vrot.slane %v5136, 2
    %v5191 = vrot.slane %v5137, 2
    %v5192 = vsel %vm3298, %v5190, %v5191
    %v5193 = vrot.slane %v5138, 2
    %v5194 = vrot.slane %v5139, 2
    %v5195 = vsel %vm3298, %v5193, %v5194
    %v5196 = vrot.slane %v5140, 2
    %v5197 = vrot.slane %v5141, 2
    %v5198 = vsel %vm3298, %v5196, %v5197
    %v5199 = vrot.slane %v5142, 2
    %v5200 = vrot.slane %v5143, 2
    %v5201 = vsel %vm3298, %v5199, %v5200
    %v5202 = vrot.slane %v5144, 2
    %v5203 = vrot.slane %v5145, 2
    %v5204 = vsel %vm3298, %v5202, %v5203
    %v5205 = vrot.slane %v5146, 2
    %v5206 = vrot.slane %v5147, 2
    %v5207 = vsel %vm3298, %v5205, %v5206
    %v5208 = vrot.slane %v5148, 2
    %v5209 = vrot.slane %v5149, 2
    %v5210 = vsel %vm3298, %v5208, %v5209
    %v5211 = vrot.slane %v5150, 2
    %v5212 = vrot.slane %v5151, 2
    %v5213 = vsel %vm3298, %v5211, %v5212
    %v5214 = vrot.slane %v5152, 2
    %v5215 = vrot.slane %v5153, 2
    %v5216 = vsel %vm3298, %v5214, %v5215
    %v5217 = vrot.slane %v5154, 2
    %v5218 = vrot.slane %v5155, 2
    %v5219 = vsel %vm3298, %v5217, %v5218
    %v5220 = vrot.slane %v5156, 2
    %v5221 = vrot.slane %v5157, 2
    %v5222 = vsel %vm3298, %v5220, %v5221
    %v5249 = vadd.f32 %v4669, %v5186
    %v5250 = vadd.f32 %v4670, %v5185
    %v5251 = vadd.f32 %v4671, %v5189
    %v5252 = vadd.f32 %v4672, %v5188
    %v5253 = vadd.f32 %v4673, %v5192
    %v5254 = vadd.f32 %v4674, %v5191
    %v5255 = vadd.f32 %v4675, %v5195
    %v5256 = vadd.f32 %v4676, %v5194
    %v5257 = vadd.f32 %v4677, %v5198
    %v5258 = vadd.f32 %v4678, %v5197
    %v5259 = vadd.f32 %v4679, %v5201
    %v5260 = vadd.f32 %v4680, %v5200
    %v5261 = vadd.f32 %v4681, %v5204
    %v5262 = vadd.f32 %v4682, %v5203
    %v5263 = vadd.f32 %v4683, %v5207
    %v5264 = vadd.f32 %v4684, %v5206
    %v5265 = vadd.f32 %v4685, %v5210
    %v5266 = vadd.f32 %v4686, %v5209
    %v5267 = vadd.f32 %v4687, %v5213
    %v5268 = vadd.f32 %v4688, %v5212
    %v5269 = vadd.f32 %v4689, %v5216
    %v5270 = vadd.f32 %v4690, %v5215
    %v5271 = vadd.f32 %v4691, %v5219
    %v5272 = vadd.f32 %v4692, %v5218
    %v5273 = vadd.f32 %v4693, %v5222
    %v5274 = vadd.f32 %v4694, %v5221
    %s5275 = sld [smem:[#allocation2 + $0x2e]]
    %v5276 = vstv %s5275
    %v5277 = vmul.f32 %v5276, %v33
    %v5278 = vmul.f32 %v5276, %v34
    %v5279 = vmul.f32 %v5276, %v35
    %v5280 = vmul.f32 %v5276, %v36
    %v5281 = vmul.f32 %v5276, %v37
    %v5282 = vmul.f32 %v5276, %v38
    %v5283 = vmul.f32 %v5276, %v39
    %v5284 = vmul.f32 %v5276, %v40
    %v5285 = vmul.f32 %v5276, %v41
    %v5286 = vmul.f32 %v5276, %v42
    %v5287 = vmul.f32 %v5276, %v43
    %v5288 = vmul.f32 %v5276, %v44
    %v5289 = vmul.f32 %v5276, %v45
    %v5290 = vmul.f32 %v5276, %v46
    %v5291 = vmul.f32 %v5276, %v47
    %v5292 = vmul.f32 %v5276, %v48
    %v5293 = vmul.f32 %v5276, %v49
    %v5294 = vmul.f32 %v5276, %v50
    %v5295 = vmul.f32 %v5276, %v51
    %v5296 = vmul.f32 %v5276, %v52
    %v5297 = vmul.f32 %v5276, %v53
    %v5298 = vmul.f32 %v5276, %v54
    %v5299 = vmul.f32 %v5276, %v55
    %v5300 = vmul.f32 %v5276, %v56
    %v5301 = vmul.f32 %v5276, %v57
    %v5302 = vmul.f32 %v5276, %v58
    %v5329 = vrot.slane %v5277, 2
    %v5330 = vrot.slane %v5278, 2
    %v5331 = vsel %vm3298, %v5329, %v5330
    %v5332 = vrot.slane %v5279, 2
    %v5333 = vrot.slane %v5280, 2
    %v5334 = vsel %vm3298, %v5332, %v5333
    %v5335 = vrot.slane %v5281, 2
    %v5336 = vrot.slane %v5282, 2
    %v5337 = vsel %vm3298, %v5335, %v5336
    %v5338 = vrot.slane %v5283, 2
    %v5339 = vrot.slane %v5284, 2
    %v5340 = vsel %vm3298, %v5338, %v5339
    %v5341 = vrot.slane %v5285, 2
    %v5342 = vrot.slane %v5286, 2
    %v5343 = vsel %vm3298, %v5341, %v5342
    %v5344 = vrot.slane %v5287, 2
    %v5345 = vrot.slane %v5288, 2
    %v5346 = vsel %vm3298, %v5344, %v5345
    %v5347 = vrot.slane %v5289, 2
    %v5348 = vrot.slane %v5290, 2
    %v5349 = vsel %vm3298, %v5347, %v5348
    %v5350 = vrot.slane %v5291, 2
    %v5351 = vrot.slane %v5292, 2
    %v5352 = vsel %vm3298, %v5350, %v5351
    %v5353 = vrot.slane %v5293, 2
    %v5354 = vrot.slane %v5294, 2
    %v5355 = vsel %vm3298, %v5353, %v5354
    %v5356 = vrot.slane %v5295, 2
    %v5357 = vrot.slane %v5296, 2
    %v5358 = vsel %vm3298, %v5356, %v5357
    %v5359 = vrot.slane %v5297, 2
    %v5360 = vrot.slane %v5298, 2
    %v5361 = vsel %vm3298, %v5359, %v5360
    %v5362 = vrot.slane %v5299, 2
    %v5363 = vrot.slane %v5300, 2
    %v5364 = vsel %vm3298, %v5362, %v5363
    %v5365 = vrot.slane %v5301, 2
    %v5366 = vrot.slane %v5302, 2
    %v5367 = vsel %vm3298, %v5365, %v5366
    %v5394 = vadd.f32 %v4814, %v5331
    %v5395 = vadd.f32 %v4815, %v5330
    %v5396 = vadd.f32 %v4816, %v5334
    %v5397 = vadd.f32 %v4817, %v5333
    %v5398 = vadd.f32 %v4818, %v5337
    %v5399 = vadd.f32 %v4819, %v5336
    %v5400 = vadd.f32 %v4820, %v5340
    %v5401 = vadd.f32 %v4821, %v5339
    %v5402 = vadd.f32 %v4822, %v5343
    %v5403 = vadd.f32 %v4823, %v5342
    %v5404 = vadd.f32 %v4824, %v5346
    %v5405 = vadd.f32 %v4825, %v5345
    %v5406 = vadd.f32 %v4826, %v5349
    %v5407 = vadd.f32 %v4827, %v5348
    %v5408 = vadd.f32 %v4828, %v5352
    %v5409 = vadd.f32 %v4829, %v5351
    %v5410 = vadd.f32 %v4830, %v5355
    %v5411 = vadd.f32 %v4831, %v5354
    %v5412 = vadd.f32 %v4832, %v5358
    %v5413 = vadd.f32 %v4833, %v5357
    %v5414 = vadd.f32 %v4834, %v5361
    %v5415 = vadd.f32 %v4835, %v5360
    %v5416 = vadd.f32 %v4836, %v5364
    %v5417 = vadd.f32 %v4837, %v5363
    %v5418 = vadd.f32 %v4838, %v5367
    %v5419 = vadd.f32 %v4839, %v5366
    %s5420 = sld [smem:[#allocation2 + $0x3e]]
    %v5421 = vstv %s5420
    %v5422 = vmul.f32 %v5421, %v33
    %v5423 = vmul.f32 %v5421, %v34
    %v5424 = vmul.f32 %v5421, %v35
    %v5425 = vmul.f32 %v5421, %v36
    %v5426 = vmul.f32 %v5421, %v37
    %v5427 = vmul.f32 %v5421, %v38
    %v5428 = vmul.f32 %v5421, %v39
    %v5429 = vmul.f32 %v5421, %v40
    %v5430 = vmul.f32 %v5421, %v41
    %v5431 = vmul.f32 %v5421, %v42
    %v5432 = vmul.f32 %v5421, %v43
    %v5433 = vmul.f32 %v5421, %v44
    %v5434 = vmul.f32 %v5421, %v45
    %v5435 = vmul.f32 %v5421, %v46
    %v5436 = vmul.f32 %v5421, %v47
    %v5437 = vmul.f32 %v5421, %v48
    %v5438 = vmul.f32 %v5421, %v49
    %v5439 = vmul.f32 %v5421, %v50
    %v5440 = vmul.f32 %v5421, %v51
    %v5441 = vmul.f32 %v5421, %v52
    %v5442 = vmul.f32 %v5421, %v53
    %v5443 = vmul.f32 %v5421, %v54
    %v5444 = vmul.f32 %v5421, %v55
    %v5445 = vmul.f32 %v5421, %v56
    %v5446 = vmul.f32 %v5421, %v57
    %v5447 = vmul.f32 %v5421, %v58
    %v5474 = vrot.slane %v5422, 2
    %v5475 = vrot.slane %v5423, 2
    %v5476 = vsel %vm3298, %v5474, %v5475
    %v5477 = vrot.slane %v5424, 2
    %v5478 = vrot.slane %v5425, 2
    %v5479 = vsel %vm3298, %v5477, %v5478
    %v5480 = vrot.slane %v5426, 2
    %v5481 = vrot.slane %v5427, 2
    %v5482 = vsel %vm3298, %v5480, %v5481
    %v5483 = vrot.slane %v5428, 2
    %v5484 = vrot.slane %v5429, 2
    %v5485 = vsel %vm3298, %v5483, %v5484
    %v5486 = vrot.slane %v5430, 2
    %v5487 = vrot.slane %v5431, 2
    %v5488 = vsel %vm3298, %v5486, %v5487
    %v5489 = vrot.slane %v5432, 2
    %v5490 = vrot.slane %v5433, 2
    %v5491 = vsel %vm3298, %v5489, %v5490
    %v5492 = vrot.slane %v5434, 2
    %v5493 = vrot.slane %v5435, 2
    %v5494 = vsel %vm3298, %v5492, %v5493
    %v5495 = vrot.slane %v5436, 2
    %v5496 = vrot.slane %v5437, 2
    %v5497 = vsel %vm3298, %v5495, %v5496
    %v5498 = vrot.slane %v5438, 2
    %v5499 = vrot.slane %v5439, 2
    %v5500 = vsel %vm3298, %v5498, %v5499
    %v5501 = vrot.slane %v5440, 2
    %v5502 = vrot.slane %v5441, 2
    %v5503 = vsel %vm3298, %v5501, %v5502
    %v5504 = vrot.slane %v5442, 2
    %v5505 = vrot.slane %v5443, 2
    %v5506 = vsel %vm3298, %v5504, %v5505
    %v5507 = vrot.slane %v5444, 2
    %v5508 = vrot.slane %v5445, 2
    %v5509 = vsel %vm3298, %v5507, %v5508
    %v5510 = vrot.slane %v5446, 2
    %v5511 = vrot.slane %v5447, 2
    %v5512 = vsel %vm3298, %v5510, %v5511
    %v5539 = vadd.f32 %v4959, %v5476
    %v5540 = vadd.f32 %v4960, %v5475
    %v5541 = vadd.f32 %v4961, %v5479
    %v5542 = vadd.f32 %v4962, %v5478
    %v5543 = vadd.f32 %v4963, %v5482
    %v5544 = vadd.f32 %v4964, %v5481
    %v5545 = vadd.f32 %v4965, %v5485
    %v5546 = vadd.f32 %v4966, %v5484
    %v5547 = vadd.f32 %v4967, %v5488
    %v5548 = vadd.f32 %v4968, %v5487
    %v5549 = vadd.f32 %v4969, %v5491
    %v5550 = vadd.f32 %v4970, %v5490
    %v5551 = vadd.f32 %v4971, %v5494
    %v5552 = vadd.f32 %v4972, %v5493
    %v5553 = vadd.f32 %v4973, %v5497
    %v5554 = vadd.f32 %v4974, %v5496
    %v5555 = vadd.f32 %v4975, %v5500
    %v5556 = vadd.f32 %v4976, %v5499
    %v5557 = vadd.f32 %v4977, %v5503
    %v5558 = vadd.f32 %v4978, %v5502
    %v5559 = vadd.f32 %v4979, %v5506
    %v5560 = vadd.f32 %v4980, %v5505
    %v5561 = vadd.f32 %v4981, %v5509
    %v5562 = vadd.f32 %v4982, %v5508
    %v5563 = vadd.f32 %v4983, %v5512
    %v5564 = vadd.f32 %v4984, %v5511
    %s5565 = sld [smem:[#allocation2 + $0x3]]
    %v5566 = vstv %s5565
    %v5567 = vmul.f32 %v5566, %v27
    %v5568 = vmul.f32 %v5566, %v28
    %v5569 = vmul.f32 %v5566, %v29
    %v5570 = vmul.f32 %v5566, %v30
    %v5571 = vmul.f32 %v5566, %v31
    %v5572 = vmul.f32 %v5566, %v32
    %v5573 = vmul.f32 %v5566, %v33
    %v5574 = vmul.f32 %v5566, %v34
    %v5575 = vmul.f32 %v5566, %v35
    %v5576 = vmul.f32 %v5566, %v36
    %v5577 = vmul.f32 %v5566, %v37
    %v5578 = vmul.f32 %v5566, %v38
    %v5579 = vmul.f32 %v5566, %v39
    %v5580 = vmul.f32 %v5566, %v40
    %v5581 = vmul.f32 %v5566, %v41
    %v5582 = vmul.f32 %v5566, %v42
    %v5583 = vmul.f32 %v5566, %v43
    %v5584 = vmul.f32 %v5566, %v44
    %v5585 = vmul.f32 %v5566, %v45
    %v5586 = vmul.f32 %v5566, %v46
    %v5587 = vmul.f32 %v5566, %v47
    %v5588 = vmul.f32 %v5566, %v48
    %v5589 = vmul.f32 %v5566, %v49
    %v5590 = vmul.f32 %v5566, %v50
    %v5591 = vmul.f32 %v5566, %v51
    %v5592 = vmul.f32 %v5566, %v52
    %vm5619 = vcmask 1044480
    %v5620 = vrot.slane %v5567, 3
    %v5621 = vrot.slane %v5568, 3
    %v5622 = vsel %vm5619, %v5620, %v5621
    %v5623 = vrot.slane %v5569, 3
    %v5624 = vrot.slane %v5570, 3
    %v5625 = vsel %vm5619, %v5623, %v5624
    %v5626 = vrot.slane %v5571, 3
    %v5627 = vrot.slane %v5572, 3
    %v5628 = vsel %vm5619, %v5626, %v5627
    %v5629 = vrot.slane %v5573, 3
    %v5630 = vrot.slane %v5574, 3
    %v5631 = vsel %vm5619, %v5629, %v5630
    %v5632 = vrot.slane %v5575, 3
    %v5633 = vrot.slane %v5576, 3
    %v5634 = vsel %vm5619, %v5632, %v5633
    %v5635 = vrot.slane %v5577, 3
    %v5636 = vrot.slane %v5578, 3
    %v5637 = vsel %vm5619, %v5635, %v5636
    %v5638 = vrot.slane %v5579, 3
    %v5639 = vrot.slane %v5580, 3
    %v5640 = vsel %vm5619, %v5638, %v5639
    %v5641 = vrot.slane %v5581, 3
    %v5642 = vrot.slane %v5582, 3
    %v5643 = vsel %vm5619, %v5641, %v5642
    %v5644 = vrot.slane %v5583, 3
    %v5645 = vrot.slane %v5584, 3
    %v5646 = vsel %vm5619, %v5644, %v5645
    %v5647 = vrot.slane %v5585, 3
    %v5648 = vrot.slane %v5586, 3
    %v5649 = vsel %vm5619, %v5647, %v5648
    %v5650 = vrot.slane %v5587, 3
    %v5651 = vrot.slane %v5588, 3
    %v5652 = vsel %vm5619, %v5650, %v5651
    %v5653 = vrot.slane %v5589, 3
    %v5654 = vrot.slane %v5590, 3
    %v5655 = vsel %vm5619, %v5653, %v5654
    %v5656 = vrot.slane %v5591, 3
    %v5657 = vrot.slane %v5592, 3
    %v5658 = vsel %vm5619, %v5656, %v5657
    %v5685 = vadd.f32 %v5104, %v5622
    %v5686 = vadd.f32 %v5105, %v5621
    %v5687 = vadd.f32 %v5106, %v5625
    %v5688 = vadd.f32 %v5107, %v5624
    %v5689 = vadd.f32 %v5108, %v5628
    %v5690 = vadd.f32 %v5109, %v5627
    %v5691 = vadd.f32 %v5110, %v5631
    %v5692 = vadd.f32 %v5111, %v5630
    %v5693 = vadd.f32 %v5112, %v5634
    %v5694 = vadd.f32 %v5113, %v5633
    %v5695 = vadd.f32 %v5114, %v5637
    %v5696 = vadd.f32 %v5115, %v5636
    %v5697 = vadd.f32 %v5116, %v5640
    %v5698 = vadd.f32 %v5117, %v5639
    %v5699 = vadd.f32 %v5118, %v5643
    %v5700 = vadd.f32 %v5119, %v5642
    %v5701 = vadd.f32 %v5120, %v5646
    %v5702 = vadd.f32 %v5121, %v5645
    %v5703 = vadd.f32 %v5122, %v5649
    %v5704 = vadd.f32 %v5123, %v5648
    %v5705 = vadd.f32 %v5124, %v5652
    %v5706 = vadd.f32 %v5125, %v5651
    %v5707 = vadd.f32 %v5126, %v5655
    %v5708 = vadd.f32 %v5127, %v5654
    %v5709 = vadd.f32 %v5128, %v5658
    %v5710 = vadd.f32 %v5129, %v5657
    %s5711 = sld [smem:[#allocation2 + $0x13]]
    %v5712 = vstv %s5711
    %v5713 = vmul.f32 %v5712, %v27
    %v5714 = vmul.f32 %v5712, %v28
    %v5715 = vmul.f32 %v5712, %v29
    %v5716 = vmul.f32 %v5712, %v30
    %v5717 = vmul.f32 %v5712, %v31
    %v5718 = vmul.f32 %v5712, %v32
    %v5719 = vmul.f32 %v5712, %v33
    %v5720 = vmul.f32 %v5712, %v34
    %v5721 = vmul.f32 %v5712, %v35
    %v5722 = vmul.f32 %v5712, %v36
    %v5723 = vmul.f32 %v5712, %v37
    %v5724 = vmul.f32 %v5712, %v38
    %v5725 = vmul.f32 %v5712, %v39
    %v5726 = vmul.f32 %v5712, %v40
    %v5727 = vmul.f32 %v5712, %v41
    %v5728 = vmul.f32 %v5712, %v42
    %v5729 = vmul.f32 %v5712, %v43
    %v5730 = vmul.f32 %v5712, %v44
    %v5731 = vmul.f32 %v5712, %v45
    %v5732 = vmul.f32 %v5712, %v46
    %v5733 = vmul.f32 %v5712, %v47
    %v5734 = vmul.f32 %v5712, %v48
    %v5735 = vmul.f32 %v5712, %v49
    %v5736 = vmul.f32 %v5712, %v50
    %v5737 = vmul.f32 %v5712, %v51
    %v5738 = vmul.f32 %v5712, %v52
    %v5765 = vrot.slane %v5713, 3
    %v5766 = vrot.slane %v5714, 3
    %v5767 = vsel %vm5619, %v5765, %v5766
    %v5768 = vrot.slane %v5715, 3
    %v5769 = vrot.slane %v5716, 3
    %v5770 = vsel %vm5619, %v5768, %v5769
    %v5771 = vrot.slane %v5717, 3
    %v5772 = vrot.slane %v5718, 3
    %v5773 = vsel %vm5619, %v5771, %v5772
    %v5774 = vrot.slane %v5719, 3
    %v5775 = vrot.slane %v5720, 3
    %v5776 = vsel %vm5619, %v5774, %v5775
    %v5777 = vrot.slane %v5721, 3
    %v5778 = vrot.slane %v5722, 3
    %v5779 = vsel %vm5619, %v5777, %v5778
    %v5780 = vrot.slane %v5723, 3
    %v5781 = vrot.slane %v5724, 3
    %v5782 = vsel %vm5619, %v5780, %v5781
    %v5783 = vrot.slane %v5725, 3
    %v5784 = vrot.slane %v5726, 3
    %v5785 = vsel %vm5619, %v5783, %v5784
    %v5786 = vrot.slane %v5727, 3
    %v5787 = vrot.slane %v5728, 3
    %v5788 = vsel %vm5619, %v5786, %v5787
    %v5789 = vrot.slane %v5729, 3
    %v5790 = vrot.slane %v5730, 3
    %v5791 = vsel %vm5619, %v5789, %v5790
    %v5792 = vrot.slane %v5731, 3
    %v5793 = vrot.slane %v5732, 3
    %v5794 = vsel %vm5619, %v5792, %v5793
    %v5795 = vrot.slane %v5733, 3
    %v5796 = vrot.slane %v5734, 3
    %v5797 = vsel %vm5619, %v5795, %v5796
    %v5798 = vrot.slane %v5735, 3
    %v5799 = vrot.slane %v5736, 3
    %v5800 = vsel %vm5619, %v5798, %v5799
    %v5801 = vrot.slane %v5737, 3
    %v5802 = vrot.slane %v5738, 3
    %v5803 = vsel %vm5619, %v5801, %v5802
    %v5830 = vadd.f32 %v5249, %v5767
    %v5831 = vadd.f32 %v5250, %v5766
    %v5832 = vadd.f32 %v5251, %v5770
    %v5833 = vadd.f32 %v5252, %v5769
    %v5834 = vadd.f32 %v5253, %v5773
    %v5835 = vadd.f32 %v5254, %v5772
    %v5836 = vadd.f32 %v5255, %v5776
    %v5837 = vadd.f32 %v5256, %v5775
    %v5838 = vadd.f32 %v5257, %v5779
    %v5839 = vadd.f32 %v5258, %v5778
    %v5840 = vadd.f32 %v5259, %v5782
    %v5841 = vadd.f32 %v5260, %v5781
    %v5842 = vadd.f32 %v5261, %v5785
    %v5843 = vadd.f32 %v5262, %v5784
    %v5844 = vadd.f32 %v5263, %v5788
    %v5845 = vadd.f32 %v5264, %v5787
    %v5846 = vadd.f32 %v5265, %v5791
    %v5847 = vadd.f32 %v5266, %v5790
    %v5848 = vadd.f32 %v5267, %v5794
    %v5849 = vadd.f32 %v5268, %v5793
    %v5850 = vadd.f32 %v5269, %v5797
    %v5851 = vadd.f32 %v5270, %v5796
    %v5852 = vadd.f32 %v5271, %v5800
    %v5853 = vadd.f32 %v5272, %v5799
    %v5854 = vadd.f32 %v5273, %v5803
    %v5855 = vadd.f32 %v5274, %v5802
    %s5856 = sld [smem:[#allocation2 + $0x23]]
    %v5857 = vstv %s5856
    %v5858 = vmul.f32 %v5857, %v27
    %v5859 = vmul.f32 %v5857, %v28
    %v5860 = vmul.f32 %v5857, %v29
    %v5861 = vmul.f32 %v5857, %v30
    %v5862 = vmul.f32 %v5857, %v31
    %v5863 = vmul.f32 %v5857, %v32
    %v5864 = vmul.f32 %v5857, %v33
    %v5865 = vmul.f32 %v5857, %v34
    %v5866 = vmul.f32 %v5857, %v35
    %v5867 = vmul.f32 %v5857, %v36
    %v5868 = vmul.f32 %v5857, %v37
    %v5869 = vmul.f32 %v5857, %v38
    %v5870 = vmul.f32 %v5857, %v39
    %v5871 = vmul.f32 %v5857, %v40
    %v5872 = vmul.f32 %v5857, %v41
    %v5873 = vmul.f32 %v5857, %v42
    %v5874 = vmul.f32 %v5857, %v43
    %v5875 = vmul.f32 %v5857, %v44
    %v5876 = vmul.f32 %v5857, %v45
    %v5877 = vmul.f32 %v5857, %v46
    %v5878 = vmul.f32 %v5857, %v47
    %v5879 = vmul.f32 %v5857, %v48
    %v5880 = vmul.f32 %v5857, %v49
    %v5881 = vmul.f32 %v5857, %v50
    %v5882 = vmul.f32 %v5857, %v51
    %v5883 = vmul.f32 %v5857, %v52
    %v5910 = vrot.slane %v5858, 3
    %v5911 = vrot.slane %v5859, 3
    %v5912 = vsel %vm5619, %v5910, %v5911
    %v5913 = vrot.slane %v5860, 3
    %v5914 = vrot.slane %v5861, 3
    %v5915 = vsel %vm5619, %v5913, %v5914
    %v5916 = vrot.slane %v5862, 3
    %v5917 = vrot.slane %v5863, 3
    %v5918 = vsel %vm5619, %v5916, %v5917
    %v5919 = vrot.slane %v5864, 3
    %v5920 = vrot.slane %v5865, 3
    %v5921 = vsel %vm5619, %v5919, %v5920
    %v5922 = vrot.slane %v5866, 3
    %v5923 = vrot.slane %v5867, 3
    %v5924 = vsel %vm5619, %v5922, %v5923
    %v5925 = vrot.slane %v5868, 3
    %v5926 = vrot.slane %v5869, 3
    %v5927 = vsel %vm5619, %v5925, %v5926
    %v5928 = vrot.slane %v5870, 3
    %v5929 = vrot.slane %v5871, 3
    %v5930 = vsel %vm5619, %v5928, %v5929
    %v5931 = vrot.slane %v5872, 3
    %v5932 = vrot.slane %v5873, 3
    %v5933 = vsel %vm5619, %v5931, %v5932
    %v5934 = vrot.slane %v5874, 3
    %v5935 = vrot.slane %v5875, 3
    %v5936 = vsel %vm5619, %v5934, %v5935
    %v5937 = vrot.slane %v5876, 3
    %v5938 = vrot.slane %v5877, 3
    %v5939 = vsel %vm5619, %v5937, %v5938
    %v5940 = vrot.slane %v5878, 3
    %v5941 = vrot.slane %v5879, 3
    %v5942 = vsel %vm5619, %v5940, %v5941
    %v5943 = vrot.slane %v5880, 3
    %v5944 = vrot.slane %v5881, 3
    %v5945 = vsel %vm5619, %v5943, %v5944
    %v5946 = vrot.slane %v5882, 3
    %v5947 = vrot.slane %v5883, 3
    %v5948 = vsel %vm5619, %v5946, %v5947
    %v5975 = vadd.f32 %v5394, %v5912
    %v5976 = vadd.f32 %v5395, %v5911
    %v5977 = vadd.f32 %v5396, %v5915
    %v5978 = vadd.f32 %v5397, %v5914
    %v5979 = vadd.f32 %v5398, %v5918
    %v5980 = vadd.f32 %v5399, %v5917
    %v5981 = vadd.f32 %v5400, %v5921
    %v5982 = vadd.f32 %v5401, %v5920
    %v5983 = vadd.f32 %v5402, %v5924
    %v5984 = vadd.f32 %v5403, %v5923
    %v5985 = vadd.f32 %v5404, %v5927
    %v5986 = vadd.f32 %v5405, %v5926
    %v5987 = vadd.f32 %v5406, %v5930
    %v5988 = vadd.f32 %v5407, %v5929
    %v5989 = vadd.f32 %v5408, %v5933
    %v5990 = vadd.f32 %v5409, %v5932
    %v5991 = vadd.f32 %v5410, %v5936
    %v5992 = vadd.f32 %v5411, %v5935
    %v5993 = vadd.f32 %v5412, %v5939
    %v5994 = vadd.f32 %v5413, %v5938
    %v5995 = vadd.f32 %v5414, %v5942
    %v5996 = vadd.f32 %v5415, %v5941
    %v5997 = vadd.f32 %v5416, %v5945
    %v5998 = vadd.f32 %v5417, %v5944
    %v5999 = vadd.f32 %v5418, %v5948
    %v6000 = vadd.f32 %v5419, %v5947
    %s6001 = sld [smem:[#allocation2 + $0x33]]
    %v6002 = vstv %s6001
    %v6003 = vmul.f32 %v6002, %v27
    %v6004 = vmul.f32 %v6002, %v28
    %v6005 = vmul.f32 %v6002, %v29
    %v6006 = vmul.f32 %v6002, %v30
    %v6007 = vmul.f32 %v6002, %v31
    %v6008 = vmul.f32 %v6002, %v32
    %v6009 = vmul.f32 %v6002, %v33
    %v6010 = vmul.f32 %v6002, %v34
    %v6011 = vmul.f32 %v6002, %v35
    %v6012 = vmul.f32 %v6002, %v36
    %v6013 = vmul.f32 %v6002, %v37
    %v6014 = vmul.f32 %v6002, %v38
    %v6015 = vmul.f32 %v6002, %v39
    %v6016 = vmul.f32 %v6002, %v40
    %v6017 = vmul.f32 %v6002, %v41
    %v6018 = vmul.f32 %v6002, %v42
    %v6019 = vmul.f32 %v6002, %v43
    %v6020 = vmul.f32 %v6002, %v44
    %v6021 = vmul.f32 %v6002, %v45
    %v6022 = vmul.f32 %v6002, %v46
    %v6023 = vmul.f32 %v6002, %v47
    %v6024 = vmul.f32 %v6002, %v48
    %v6025 = vmul.f32 %v6002, %v49
    %v6026 = vmul.f32 %v6002, %v50
    %v6027 = vmul.f32 %v6002, %v51
    %v6028 = vmul.f32 %v6002, %v52
    %v6055 = vrot.slane %v6003, 3
    %v6056 = vrot.slane %v6004, 3
    %v6057 = vsel %vm5619, %v6055, %v6056
    %v6058 = vrot.slane %v6005, 3
    %v6059 = vrot.slane %v6006, 3
    %v6060 = vsel %vm5619, %v6058, %v6059
    %v6061 = vrot.slane %v6007, 3
    %v6062 = vrot.slane %v6008, 3
    %v6063 = vsel %vm5619, %v6061, %v6062
    %v6064 = vrot.slane %v6009, 3
    %v6065 = vrot.slane %v6010, 3
    %v6066 = vsel %vm5619, %v6064, %v6065
    %v6067 = vrot.slane %v6011, 3
    %v6068 = vrot.slane %v6012, 3
    %v6069 = vsel %vm5619, %v6067, %v6068
    %v6070 = vrot.slane %v6013, 3
    %v6071 = vrot.slane %v6014, 3
    %v6072 = vsel %vm5619, %v6070, %v6071
    %v6073 = vrot.slane %v6015, 3
    %v6074 = vrot.slane %v6016, 3
    %v6075 = vsel %vm5619, %v6073, %v6074
    %v6076 = vrot.slane %v6017, 3
    %v6077 = vrot.slane %v6018, 3
    %v6078 = vsel %vm5619, %v6076, %v6077
    %v6079 = vrot.slane %v6019, 3
    %v6080 = vrot.slane %v6020, 3
    %v6081 = vsel %vm5619, %v6079, %v6080
    %v6082 = vrot.slane %v6021, 3
    %v6083 = vrot.slane %v6022, 3
    %v6084 = vsel %vm5619, %v6082, %v6083
    %v6085 = vrot.slane %v6023, 3
    %v6086 = vrot.slane %v6024, 3
    %v6087 = vsel %vm5619, %v6085, %v6086
    %v6088 = vrot.slane %v6025, 3
    %v6089 = vrot.slane %v6026, 3
    %v6090 = vsel %vm5619, %v6088, %v6089
    %v6091 = vrot.slane %v6027, 3
    %v6092 = vrot.slane %v6028, 3
    %v6093 = vsel %vm5619, %v6091, %v6092
    %v6120 = vadd.f32 %v5539, %v6057
    %v6121 = vadd.f32 %v5540, %v6056
    %v6122 = vadd.f32 %v5541, %v6060
    %v6123 = vadd.f32 %v5542, %v6059
    %v6124 = vadd.f32 %v5543, %v6063
    %v6125 = vadd.f32 %v5544, %v6062
    %v6126 = vadd.f32 %v5545, %v6066
    %v6127 = vadd.f32 %v5546, %v6065
    %v6128 = vadd.f32 %v5547, %v6069
    %v6129 = vadd.f32 %v5548, %v6068
    %v6130 = vadd.f32 %v5549, %v6072
    %v6131 = vadd.f32 %v5550, %v6071
    %v6132 = vadd.f32 %v5551, %v6075
    %v6133 = vadd.f32 %v5552, %v6074
    %v6134 = vadd.f32 %v5553, %v6078
    %v6135 = vadd.f32 %v5554, %v6077
    %v6136 = vadd.f32 %v5555, %v6081
    %v6137 = vadd.f32 %v5556, %v6080
    %v6138 = vadd.f32 %v5557, %v6084
    %v6139 = vadd.f32 %v5558, %v6083
    %v6140 = vadd.f32 %v5559, %v6087
    %v6141 = vadd.f32 %v5560, %v6086
    %v6142 = vadd.f32 %v5561, %v6090
    %v6143 = vadd.f32 %v5562, %v6089
    %v6144 = vadd.f32 %v5563, %v6093
    %v6145 = vadd.f32 %v5564, %v6092
    %s6146 = sld [smem:[#allocation2 + $0x7]]
    %v6147 = vstv %s6146
    %v6148 = vmul.f32 %v6147, %v29
    %v6149 = vmul.f32 %v6147, %v30
    %v6150 = vmul.f32 %v6147, %v31
    %v6151 = vmul.f32 %v6147, %v32
    %v6152 = vmul.f32 %v6147, %v33
    %v6153 = vmul.f32 %v6147, %v34
    %v6154 = vmul.f32 %v6147, %v35
    %v6155 = vmul.f32 %v6147, %v36
    %v6156 = vmul.f32 %v6147, %v37
    %v6157 = vmul.f32 %v6147, %v38
    %v6158 = vmul.f32 %v6147, %v39
    %v6159 = vmul.f32 %v6147, %v40
    %v6160 = vmul.f32 %v6147, %v41
    %v6161 = vmul.f32 %v6147, %v42
    %v6162 = vmul.f32 %v6147, %v43
    %v6163 = vmul.f32 %v6147, %v44
    %v6164 = vmul.f32 %v6147, %v45
    %v6165 = vmul.f32 %v6147, %v46
    %v6166 = vmul.f32 %v6147, %v47
    %v6167 = vmul.f32 %v6147, %v48
    %v6168 = vmul.f32 %v6147, %v49
    %v6169 = vmul.f32 %v6147, %v50
    %v6170 = vmul.f32 %v6147, %v51
    %v6171 = vmul.f32 %v6147, %v52
    %v6172 = vmul.f32 %v6147, %v53
    %v6173 = vmul.f32 %v6147, %v54
    %v6200 = vrot.slane %v6148, 3
    %v6201 = vrot.slane %v6149, 3
    %v6202 = vsel %vm5619, %v6200, %v6201
    %v6203 = vrot.slane %v6150, 3
    %v6204 = vrot.slane %v6151, 3
    %v6205 = vsel %vm5619, %v6203, %v6204
    %v6206 = vrot.slane %v6152, 3
    %v6207 = vrot.slane %v6153, 3
    %v6208 = vsel %vm5619, %v6206, %v6207
    %v6209 = vrot.slane %v6154, 3
    %v6210 = vrot.slane %v6155, 3
    %v6211 = vsel %vm5619, %v6209, %v6210
    %v6212 = vrot.slane %v6156, 3
    %v6213 = vrot.slane %v6157, 3
    %v6214 = vsel %vm5619, %v6212, %v6213
    %v6215 = vrot.slane %v6158, 3
    %v6216 = vrot.slane %v6159, 3
    %v6217 = vsel %vm5619, %v6215, %v6216
    %v6218 = vrot.slane %v6160, 3
    %v6219 = vrot.slane %v6161, 3
    %v6220 = vsel %vm5619, %v6218, %v6219
    %v6221 = vrot.slane %v6162, 3
    %v6222 = vrot.slane %v6163, 3
    %v6223 = vsel %vm5619, %v6221, %v6222
    %v6224 = vrot.slane %v6164, 3
    %v6225 = vrot.slane %v6165, 3
    %v6226 = vsel %vm5619, %v6224, %v6225
    %v6227 = vrot.slane %v6166, 3
    %v6228 = vrot.slane %v6167, 3
    %v6229 = vsel %vm5619, %v6227, %v6228
    %v6230 = vrot.slane %v6168, 3
    %v6231 = vrot.slane %v6169, 3
    %v6232 = vsel %vm5619, %v6230, %v6231
    %v6233 = vrot.slane %v6170, 3
    %v6234 = vrot.slane %v6171, 3
    %v6235 = vsel %vm5619, %v6233, %v6234
    %v6236 = vrot.slane %v6172, 3
    %v6237 = vrot.slane %v6173, 3
    %v6238 = vsel %vm5619, %v6236, %v6237
    %v6265 = vadd.f32 %v5685, %v6202
    %v6266 = vadd.f32 %v5686, %v6201
    %v6267 = vadd.f32 %v5687, %v6205
    %v6268 = vadd.f32 %v5688, %v6204
    %v6269 = vadd.f32 %v5689, %v6208
    %v6270 = vadd.f32 %v5690, %v6207
    %v6271 = vadd.f32 %v5691, %v6211
    %v6272 = vadd.f32 %v5692, %v6210
    %v6273 = vadd.f32 %v5693, %v6214
    %v6274 = vadd.f32 %v5694, %v6213
    %v6275 = vadd.f32 %v5695, %v6217
    %v6276 = vadd.f32 %v5696, %v6216
    %v6277 = vadd.f32 %v5697, %v6220
    %v6278 = vadd.f32 %v5698, %v6219
    %v6279 = vadd.f32 %v5699, %v6223
    %v6280 = vadd.f32 %v5700, %v6222
    %v6281 = vadd.f32 %v5701, %v6226
    %v6282 = vadd.f32 %v5702, %v6225
    %v6283 = vadd.f32 %v5703, %v6229
    %v6284 = vadd.f32 %v5704, %v6228
    %v6285 = vadd.f32 %v5705, %v6232
    %v6286 = vadd.f32 %v5706, %v6231
    %v6287 = vadd.f32 %v5707, %v6235
    %v6288 = vadd.f32 %v5708, %v6234
    %v6289 = vadd.f32 %v5709, %v6238
    %v6290 = vadd.f32 %v5710, %v6237
    %s6291 = sld [smem:[#allocation2 + $0x17]]
    %v6292 = vstv %s6291
    %v6293 = vmul.f32 %v6292, %v29
    %v6294 = vmul.f32 %v6292, %v30
    %v6295 = vmul.f32 %v6292, %v31
    %v6296 = vmul.f32 %v6292, %v32
    %v6297 = vmul.f32 %v6292, %v33
    %v6298 = vmul.f32 %v6292, %v34
    %v6299 = vmul.f32 %v6292, %v35
    %v6300 = vmul.f32 %v6292, %v36
    %v6301 = vmul.f32 %v6292, %v37
    %v6302 = vmul.f32 %v6292, %v38
    %v6303 = vmul.f32 %v6292, %v39
    %v6304 = vmul.f32 %v6292, %v40
    %v6305 = vmul.f32 %v6292, %v41
    %v6306 = vmul.f32 %v6292, %v42
    %v6307 = vmul.f32 %v6292, %v43
    %v6308 = vmul.f32 %v6292, %v44
    %v6309 = vmul.f32 %v6292, %v45
    %v6310 = vmul.f32 %v6292, %v46
    %v6311 = vmul.f32 %v6292, %v47
    %v6312 = vmul.f32 %v6292, %v48
    %v6313 = vmul.f32 %v6292, %v49
    %v6314 = vmul.f32 %v6292, %v50
    %v6315 = vmul.f32 %v6292, %v51
    %v6316 = vmul.f32 %v6292, %v52
    %v6317 = vmul.f32 %v6292, %v53
    %v6318 = vmul.f32 %v6292, %v54
    %v6345 = vrot.slane %v6293, 3
    %v6346 = vrot.slane %v6294, 3
    %v6347 = vsel %vm5619, %v6345, %v6346
    %v6348 = vrot.slane %v6295, 3
    %v6349 = vrot.slane %v6296, 3
    %v6350 = vsel %vm5619, %v6348, %v6349
    %v6351 = vrot.slane %v6297, 3
    %v6352 = vrot.slane %v6298, 3
    %v6353 = vsel %vm5619, %v6351, %v6352
    %v6354 = vrot.slane %v6299, 3
    %v6355 = vrot.slane %v6300, 3
    %v6356 = vsel %vm5619, %v6354, %v6355
    %v6357 = vrot.slane %v6301, 3
    %v6358 = vrot.slane %v6302, 3
    %v6359 = vsel %vm5619, %v6357, %v6358
    %v6360 = vrot.slane %v6303, 3
    %v6361 = vrot.slane %v6304, 3
    %v6362 = vsel %vm5619, %v6360, %v6361
    %v6363 = vrot.slane %v6305, 3
    %v6364 = vrot.slane %v6306, 3
    %v6365 = vsel %vm5619, %v6363, %v6364
    %v6366 = vrot.slane %v6307, 3
    %v6367 = vrot.slane %v6308, 3
    %v6368 = vsel %vm5619, %v6366, %v6367
    %v6369 = vrot.slane %v6309, 3
    %v6370 = vrot.slane %v6310, 3
    %v6371 = vsel %vm5619, %v6369, %v6370
    %v6372 = vrot.slane %v6311, 3
    %v6373 = vrot.slane %v6312, 3
    %v6374 = vsel %vm5619, %v6372, %v6373
    %v6375 = vrot.slane %v6313, 3
    %v6376 = vrot.slane %v6314, 3
    %v6377 = vsel %vm5619, %v6375, %v6376
    %v6378 = vrot.slane %v6315, 3
    %v6379 = vrot.slane %v6316, 3
    %v6380 = vsel %vm5619, %v6378, %v6379
    %v6381 = vrot.slane %v6317, 3
    %v6382 = vrot.slane %v6318, 3
    %v6383 = vsel %vm5619, %v6381, %v6382
    %v6410 = vadd.f32 %v5830, %v6347
    %v6411 = vadd.f32 %v5831, %v6346
    %v6412 = vadd.f32 %v5832, %v6350
    %v6413 = vadd.f32 %v5833, %v6349
    %v6414 = vadd.f32 %v5834, %v6353
    %v6415 = vadd.f32 %v5835, %v6352
    %v6416 = vadd.f32 %v5836, %v6356
    %v6417 = vadd.f32 %v5837, %v6355
    %v6418 = vadd.f32 %v5838, %v6359
    %v6419 = vadd.f32 %v5839, %v6358
    %v6420 = vadd.f32 %v5840, %v6362
    %v6421 = vadd.f32 %v5841, %v6361
    %v6422 = vadd.f32 %v5842, %v6365
    %v6423 = vadd.f32 %v5843, %v6364
    %v6424 = vadd.f32 %v5844, %v6368
    %v6425 = vadd.f32 %v5845, %v6367
    %v6426 = vadd.f32 %v5846, %v6371
    %v6427 = vadd.f32 %v5847, %v6370
    %v6428 = vadd.f32 %v5848, %v6374
    %v6429 = vadd.f32 %v5849, %v6373
    %v6430 = vadd.f32 %v5850, %v6377
    %v6431 = vadd.f32 %v5851, %v6376
    %v6432 = vadd.f32 %v5852, %v6380
    %v6433 = vadd.f32 %v5853, %v6379
    %v6434 = vadd.f32 %v5854, %v6383
    %v6435 = vadd.f32 %v5855, %v6382
    %s6436 = sld [smem:[#allocation2 + $0x27]]
    %v6437 = vstv %s6436
    %v6438 = vmul.f32 %v6437, %v29
    %v6439 = vmul.f32 %v6437, %v30
    %v6440 = vmul.f32 %v6437, %v31
    %v6441 = vmul.f32 %v6437, %v32
    %v6442 = vmul.f32 %v6437, %v33
    %v6443 = vmul.f32 %v6437, %v34
    %v6444 = vmul.f32 %v6437, %v35
    %v6445 = vmul.f32 %v6437, %v36
    %v6446 = vmul.f32 %v6437, %v37
    %v6447 = vmul.f32 %v6437, %v38
    %v6448 = vmul.f32 %v6437, %v39
    %v6449 = vmul.f32 %v6437, %v40
    %v6450 = vmul.f32 %v6437, %v41
    %v6451 = vmul.f32 %v6437, %v42
    %v6452 = vmul.f32 %v6437, %v43
    %v6453 = vmul.f32 %v6437, %v44
    %v6454 = vmul.f32 %v6437, %v45
    %v6455 = vmul.f32 %v6437, %v46
    %v6456 = vmul.f32 %v6437, %v47
    %v6457 = vmul.f32 %v6437, %v48
    %v6458 = vmul.f32 %v6437, %v49
    %v6459 = vmul.f32 %v6437, %v50
    %v6460 = vmul.f32 %v6437, %v51
    %v6461 = vmul.f32 %v6437, %v52
    %v6462 = vmul.f32 %v6437, %v53
    %v6463 = vmul.f32 %v6437, %v54
    %v6490 = vrot.slane %v6438, 3
    %v6491 = vrot.slane %v6439, 3
    %v6492 = vsel %vm5619, %v6490, %v6491
    %v6493 = vrot.slane %v6440, 3
    %v6494 = vrot.slane %v6441, 3
    %v6495 = vsel %vm5619, %v6493, %v6494
    %v6496 = vrot.slane %v6442, 3
    %v6497 = vrot.slane %v6443, 3
    %v6498 = vsel %vm5619, %v6496, %v6497
    %v6499 = vrot.slane %v6444, 3
    %v6500 = vrot.slane %v6445, 3
    %v6501 = vsel %vm5619, %v6499, %v6500
    %v6502 = vrot.slane %v6446, 3
    %v6503 = vrot.slane %v6447, 3
    %v6504 = vsel %vm5619, %v6502, %v6503
    %v6505 = vrot.slane %v6448, 3
    %v6506 = vrot.slane %v6449, 3
    %v6507 = vsel %vm5619, %v6505, %v6506
    %v6508 = vrot.slane %v6450, 3
    %v6509 = vrot.slane %v6451, 3
    %v6510 = vsel %vm5619, %v6508, %v6509
    %v6511 = vrot.slane %v6452, 3
    %v6512 = vrot.slane %v6453, 3
    %v6513 = vsel %vm5619, %v6511, %v6512
    %v6514 = vrot.slane %v6454, 3
    %v6515 = vrot.slane %v6455, 3
    %v6516 = vsel %vm5619, %v6514, %v6515
    %v6517 = vrot.slane %v6456, 3
    %v6518 = vrot.slane %v6457, 3
    %v6519 = vsel %vm5619, %v6517, %v6518
    %v6520 = vrot.slane %v6458, 3
    %v6521 = vrot.slane %v6459, 3
    %v6522 = vsel %vm5619, %v6520, %v6521
    %v6523 = vrot.slane %v6460, 3
    %v6524 = vrot.slane %v6461, 3
    %v6525 = vsel %vm5619, %v6523, %v6524
    %v6526 = vrot.slane %v6462, 3
    %v6527 = vrot.slane %v6463, 3
    %v6528 = vsel %vm5619, %v6526, %v6527
    %v6555 = vadd.f32 %v5975, %v6492
    %v6556 = vadd.f32 %v5976, %v6491
    %v6557 = vadd.f32 %v5977, %v6495
    %v6558 = vadd.f32 %v5978, %v6494
    %v6559 = vadd.f32 %v5979, %v6498
    %v6560 = vadd.f32 %v5980, %v6497
    %v6561 = vadd.f32 %v5981, %v6501
    %v6562 = vadd.f32 %v5982, %v6500
    %v6563 = vadd.f32 %v5983, %v6504
    %v6564 = vadd.f32 %v5984, %v6503
    %v6565 = vadd.f32 %v5985, %v6507
    %v6566 = vadd.f32 %v5986, %v6506
    %v6567 = vadd.f32 %v5987, %v6510
    %v6568 = vadd.f32 %v5988, %v6509
    %v6569 = vadd.f32 %v5989, %v6513
    %v6570 = vadd.f32 %v5990, %v6512
    %v6571 = vadd.f32 %v5991, %v6516
    %v6572 = vadd.f32 %v5992, %v6515
    %v6573 = vadd.f32 %v5993, %v6519
    %v6574 = vadd.f32 %v5994, %v6518
    %v6575 = vadd.f32 %v5995, %v6522
    %v6576 = vadd.f32 %v5996, %v6521
    %v6577 = vadd.f32 %v5997, %v6525
    %v6578 = vadd.f32 %v5998, %v6524
    %v6579 = vadd.f32 %v5999, %v6528
    %v6580 = vadd.f32 %v6000, %v6527
    %s6581 = sld [smem:[#allocation2 + $0x37]]
    %v6582 = vstv %s6581
    %v6583 = vmul.f32 %v6582, %v29
    %v6584 = vmul.f32 %v6582, %v30
    %v6585 = vmul.f32 %v6582, %v31
    %v6586 = vmul.f32 %v6582, %v32
    %v6587 = vmul.f32 %v6582, %v33
    %v6588 = vmul.f32 %v6582, %v34
    %v6589 = vmul.f32 %v6582, %v35
    %v6590 = vmul.f32 %v6582, %v36
    %v6591 = vmul.f32 %v6582, %v37
    %v6592 = vmul.f32 %v6582, %v38
    %v6593 = vmul.f32 %v6582, %v39
    %v6594 = vmul.f32 %v6582, %v40
    %v6595 = vmul.f32 %v6582, %v41
    %v6596 = vmul.f32 %v6582, %v42
    %v6597 = vmul.f32 %v6582, %v43
    %v6598 = vmul.f32 %v6582, %v44
    %v6599 = vmul.f32 %v6582, %v45
    %v6600 = vmul.f32 %v6582, %v46
    %v6601 = vmul.f32 %v6582, %v47
    %v6602 = vmul.f32 %v6582, %v48
    %v6603 = vmul.f32 %v6582, %v49
    %v6604 = vmul.f32 %v6582, %v50
    %v6605 = vmul.f32 %v6582, %v51
    %v6606 = vmul.f32 %v6582, %v52
    %v6607 = vmul.f32 %v6582, %v53
    %v6608 = vmul.f32 %v6582, %v54
    %v6635 = vrot.slane %v6583, 3
    %v6636 = vrot.slane %v6584, 3
    %v6637 = vsel %vm5619, %v6635, %v6636
    %v6638 = vrot.slane %v6585, 3
    %v6639 = vrot.slane %v6586, 3
    %v6640 = vsel %vm5619, %v6638, %v6639
    %v6641 = vrot.slane %v6587, 3
    %v6642 = vrot.slane %v6588, 3
    %v6643 = vsel %vm5619, %v6641, %v6642
    %v6644 = vrot.slane %v6589, 3
    %v6645 = vrot.slane %v6590, 3
    %v6646 = vsel %vm5619, %v6644, %v6645
    %v6647 = vrot.slane %v6591, 3
    %v6648 = vrot.slane %v6592, 3
    %v6649 = vsel %vm5619, %v6647, %v6648
    %v6650 = vrot.slane %v6593, 3
    %v6651 = vrot.slane %v6594, 3
    %v6652 = vsel %vm5619, %v6650, %v6651
    %v6653 = vrot.slane %v6595, 3
    %v6654 = vrot.slane %v6596, 3
    %v6655 = vsel %vm5619, %v6653, %v6654
    %v6656 = vrot.slane %v6597, 3
    %v6657 = vrot.slane %v6598, 3
    %v6658 = vsel %vm5619, %v6656, %v6657
    %v6659 = vrot.slane %v6599, 3
    %v6660 = vrot.slane %v6600, 3
    %v6661 = vsel %vm5619, %v6659, %v6660
    %v6662 = vrot.slane %v6601, 3
    %v6663 = vrot.slane %v6602, 3
    %v6664 = vsel %vm5619, %v6662, %v6663
    %v6665 = vrot.slane %v6603, 3
    %v6666 = vrot.slane %v6604, 3
    %v6667 = vsel %vm5619, %v6665, %v6666
    %v6668 = vrot.slane %v6605, 3
    %v6669 = vrot.slane %v6606, 3
    %v6670 = vsel %vm5619, %v6668, %v6669
    %v6671 = vrot.slane %v6607, 3
    %v6672 = vrot.slane %v6608, 3
    %v6673 = vsel %vm5619, %v6671, %v6672
    %v6700 = vadd.f32 %v6120, %v6637
    %v6701 = vadd.f32 %v6121, %v6636
    %v6702 = vadd.f32 %v6122, %v6640
    %v6703 = vadd.f32 %v6123, %v6639
    %v6704 = vadd.f32 %v6124, %v6643
    %v6705 = vadd.f32 %v6125, %v6642
    %v6706 = vadd.f32 %v6126, %v6646
    %v6707 = vadd.f32 %v6127, %v6645
    %v6708 = vadd.f32 %v6128, %v6649
    %v6709 = vadd.f32 %v6129, %v6648
    %v6710 = vadd.f32 %v6130, %v6652
    %v6711 = vadd.f32 %v6131, %v6651
    %v6712 = vadd.f32 %v6132, %v6655
    %v6713 = vadd.f32 %v6133, %v6654
    %v6714 = vadd.f32 %v6134, %v6658
    %v6715 = vadd.f32 %v6135, %v6657
    %v6716 = vadd.f32 %v6136, %v6661
    %v6717 = vadd.f32 %v6137, %v6660
    %v6718 = vadd.f32 %v6138, %v6664
    %v6719 = vadd.f32 %v6139, %v6663
    %v6720 = vadd.f32 %v6140, %v6667
    %v6721 = vadd.f32 %v6141, %v6666
    %v6722 = vadd.f32 %v6142, %v6670
    %v6723 = vadd.f32 %v6143, %v6669
    %v6724 = vadd.f32 %v6144, %v6673
    %v6725 = vadd.f32 %v6145, %v6672
    %s6726 = sld [smem:[#allocation2 + $0xb]]
    %v6727 = vstv %s6726
    %v6728 = vmul.f32 %v6727, %v31
    %v6729 = vmul.f32 %v6727, %v32
    %v6730 = vmul.f32 %v6727, %v33
    %v6731 = vmul.f32 %v6727, %v34
    %v6732 = vmul.f32 %v6727, %v35
    %v6733 = vmul.f32 %v6727, %v36
    %v6734 = vmul.f32 %v6727, %v37
    %v6735 = vmul.f32 %v6727, %v38
    %v6736 = vmul.f32 %v6727, %v39
    %v6737 = vmul.f32 %v6727, %v40
    %v6738 = vmul.f32 %v6727, %v41
    %v6739 = vmul.f32 %v6727, %v42
    %v6740 = vmul.f32 %v6727, %v43
    %v6741 = vmul.f32 %v6727, %v44
    %v6742 = vmul.f32 %v6727, %v45
    %v6743 = vmul.f32 %v6727, %v46
    %v6744 = vmul.f32 %v6727, %v47
    %v6745 = vmul.f32 %v6727, %v48
    %v6746 = vmul.f32 %v6727, %v49
    %v6747 = vmul.f32 %v6727, %v50
    %v6748 = vmul.f32 %v6727, %v51
    %v6749 = vmul.f32 %v6727, %v52
    %v6750 = vmul.f32 %v6727, %v53
    %v6751 = vmul.f32 %v6727, %v54
    %v6752 = vmul.f32 %v6727, %v55
    %v6753 = vmul.f32 %v6727, %v56
    %v6780 = vrot.slane %v6728, 3
    %v6781 = vrot.slane %v6729, 3
    %v6782 = vsel %vm5619, %v6780, %v6781
    %v6783 = vrot.slane %v6730, 3
    %v6784 = vrot.slane %v6731, 3
    %v6785 = vsel %vm5619, %v6783, %v6784
    %v6786 = vrot.slane %v6732, 3
    %v6787 = vrot.slane %v6733, 3
    %v6788 = vsel %vm5619, %v6786, %v6787
    %v6789 = vrot.slane %v6734, 3
    %v6790 = vrot.slane %v6735, 3
    %v6791 = vsel %vm5619, %v6789, %v6790
    %v6792 = vrot.slane %v6736, 3
    %v6793 = vrot.slane %v6737, 3
    %v6794 = vsel %vm5619, %v6792, %v6793
    %v6795 = vrot.slane %v6738, 3
    %v6796 = vrot.slane %v6739, 3
    %v6797 = vsel %vm5619, %v6795, %v6796
    %v6798 = vrot.slane %v6740, 3
    %v6799 = vrot.slane %v6741, 3
    %v6800 = vsel %vm5619, %v6798, %v6799
    %v6801 = vrot.slane %v6742, 3
    %v6802 = vrot.slane %v6743, 3
    %v6803 = vsel %vm5619, %v6801, %v6802
    %v6804 = vrot.slane %v6744, 3
    %v6805 = vrot.slane %v6745, 3
    %v6806 = vsel %vm5619, %v6804, %v6805
    %v6807 = vrot.slane %v6746, 3
    %v6808 = vrot.slane %v6747, 3
    %v6809 = vsel %vm5619, %v6807, %v6808
    %v6810 = vrot.slane %v6748, 3
    %v6811 = vrot.slane %v6749, 3
    %v6812 = vsel %vm5619, %v6810, %v6811
    %v6813 = vrot.slane %v6750, 3
    %v6814 = vrot.slane %v6751, 3
    %v6815 = vsel %vm5619, %v6813, %v6814
    %v6816 = vrot.slane %v6752, 3
    %v6817 = vrot.slane %v6753, 3
    %v6818 = vsel %vm5619, %v6816, %v6817
    %v6845 = vadd.f32 %v6265, %v6782
    %v6846 = vadd.f32 %v6266, %v6781
    %v6847 = vadd.f32 %v6267, %v6785
    %v6848 = vadd.f32 %v6268, %v6784
    %v6849 = vadd.f32 %v6269, %v6788
    %v6850 = vadd.f32 %v6270, %v6787
    %v6851 = vadd.f32 %v6271, %v6791
    %v6852 = vadd.f32 %v6272, %v6790
    %v6853 = vadd.f32 %v6273, %v6794
    %v6854 = vadd.f32 %v6274, %v6793
    %v6855 = vadd.f32 %v6275, %v6797
    %v6856 = vadd.f32 %v6276, %v6796
    %v6857 = vadd.f32 %v6277, %v6800
    %v6858 = vadd.f32 %v6278, %v6799
    %v6859 = vadd.f32 %v6279, %v6803
    %v6860 = vadd.f32 %v6280, %v6802
    %v6861 = vadd.f32 %v6281, %v6806
    %v6862 = vadd.f32 %v6282, %v6805
    %v6863 = vadd.f32 %v6283, %v6809
    %v6864 = vadd.f32 %v6284, %v6808
    %v6865 = vadd.f32 %v6285, %v6812
    %v6866 = vadd.f32 %v6286, %v6811
    %v6867 = vadd.f32 %v6287, %v6815
    %v6868 = vadd.f32 %v6288, %v6814
    %v6869 = vadd.f32 %v6289, %v6818
    %v6870 = vadd.f32 %v6290, %v6817
    %s6871 = sld [smem:[#allocation2 + $0x1b]]
    %v6872 = vstv %s6871
    %v6873 = vmul.f32 %v6872, %v31
    %v6874 = vmul.f32 %v6872, %v32
    %v6875 = vmul.f32 %v6872, %v33
    %v6876 = vmul.f32 %v6872, %v34
    %v6877 = vmul.f32 %v6872, %v35
    %v6878 = vmul.f32 %v6872, %v36
    %v6879 = vmul.f32 %v6872, %v37
    %v6880 = vmul.f32 %v6872, %v38
    %v6881 = vmul.f32 %v6872, %v39
    %v6882 = vmul.f32 %v6872, %v40
    %v6883 = vmul.f32 %v6872, %v41
    %v6884 = vmul.f32 %v6872, %v42
    %v6885 = vmul.f32 %v6872, %v43
    %v6886 = vmul.f32 %v6872, %v44
    %v6887 = vmul.f32 %v6872, %v45
    %v6888 = vmul.f32 %v6872, %v46
    %v6889 = vmul.f32 %v6872, %v47
    %v6890 = vmul.f32 %v6872, %v48
    %v6891 = vmul.f32 %v6872, %v49
    %v6892 = vmul.f32 %v6872, %v50
    %v6893 = vmul.f32 %v6872, %v51
    %v6894 = vmul.f32 %v6872, %v52
    %v6895 = vmul.f32 %v6872, %v53
    %v6896 = vmul.f32 %v6872, %v54
    %v6897 = vmul.f32 %v6872, %v55
    %v6898 = vmul.f32 %v6872, %v56
    %v6925 = vrot.slane %v6873, 3
    %v6926 = vrot.slane %v6874, 3
    %v6927 = vsel %vm5619, %v6925, %v6926
    %v6928 = vrot.slane %v6875, 3
    %v6929 = vrot.slane %v6876, 3
    %v6930 = vsel %vm5619, %v6928, %v6929
    %v6931 = vrot.slane %v6877, 3
    %v6932 = vrot.slane %v6878, 3
    %v6933 = vsel %vm5619, %v6931, %v6932
    %v6934 = vrot.slane %v6879, 3
    %v6935 = vrot.slane %v6880, 3
    %v6936 = vsel %vm5619, %v6934, %v6935
    %v6937 = vrot.slane %v6881, 3
    %v6938 = vrot.slane %v6882, 3
    %v6939 = vsel %vm5619, %v6937, %v6938
    %v6940 = vrot.slane %v6883, 3
    %v6941 = vrot.slane %v6884, 3
    %v6942 = vsel %vm5619, %v6940, %v6941
    %v6943 = vrot.slane %v6885, 3
    %v6944 = vrot.slane %v6886, 3
    %v6945 = vsel %vm5619, %v6943, %v6944
    %v6946 = vrot.slane %v6887, 3
    %v6947 = vrot.slane %v6888, 3
    %v6948 = vsel %vm5619, %v6946, %v6947
    %v6949 = vrot.slane %v6889, 3
    %v6950 = vrot.slane %v6890, 3
    %v6951 = vsel %vm5619, %v6949, %v6950
    %v6952 = vrot.slane %v6891, 3
    %v6953 = vrot.slane %v6892, 3
    %v6954 = vsel %vm5619, %v6952, %v6953
    %v6955 = vrot.slane %v6893, 3
    %v6956 = vrot.slane %v6894, 3
    %v6957 = vsel %vm5619, %v6955, %v6956
    %v6958 = vrot.slane %v6895, 3
    %v6959 = vrot.slane %v6896, 3
    %v6960 = vsel %vm5619, %v6958, %v6959
    %v6961 = vrot.slane %v6897, 3
    %v6962 = vrot.slane %v6898, 3
    %v6963 = vsel %vm5619, %v6961, %v6962
    %v6990 = vadd.f32 %v6410, %v6927
    %v6991 = vadd.f32 %v6411, %v6926
    %v6992 = vadd.f32 %v6412, %v6930
    %v6993 = vadd.f32 %v6413, %v6929
    %v6994 = vadd.f32 %v6414, %v6933
    %v6995 = vadd.f32 %v6415, %v6932
    %v6996 = vadd.f32 %v6416, %v6936
    %v6997 = vadd.f32 %v6417, %v6935
    %v6998 = vadd.f32 %v6418, %v6939
    %v6999 = vadd.f32 %v6419, %v6938
    %v7000 = vadd.f32 %v6420, %v6942
    %v7001 = vadd.f32 %v6421, %v6941
    %v7002 = vadd.f32 %v6422, %v6945
    %v7003 = vadd.f32 %v6423, %v6944
    %v7004 = vadd.f32 %v6424, %v6948
    %v7005 = vadd.f32 %v6425, %v6947
    %v7006 = vadd.f32 %v6426, %v6951
    %v7007 = vadd.f32 %v6427, %v6950
    %v7008 = vadd.f32 %v6428, %v6954
    %v7009 = vadd.f32 %v6429, %v6953
    %v7010 = vadd.f32 %v6430, %v6957
    %v7011 = vadd.f32 %v6431, %v6956
    %v7012 = vadd.f32 %v6432, %v6960
    %v7013 = vadd.f32 %v6433, %v6959
    %v7014 = vadd.f32 %v6434, %v6963
    %v7015 = vadd.f32 %v6435, %v6962
    %s7016 = sld [smem:[#allocation2 + $0x2b]]
    %v7017 = vstv %s7016
    %v7018 = vmul.f32 %v7017, %v31
    %v7019 = vmul.f32 %v7017, %v32
    %v7020 = vmul.f32 %v7017, %v33
    %v7021 = vmul.f32 %v7017, %v34
    %v7022 = vmul.f32 %v7017, %v35
    %v7023 = vmul.f32 %v7017, %v36
    %v7024 = vmul.f32 %v7017, %v37
    %v7025 = vmul.f32 %v7017, %v38
    %v7026 = vmul.f32 %v7017, %v39
    %v7027 = vmul.f32 %v7017, %v40
    %v7028 = vmul.f32 %v7017, %v41
    %v7029 = vmul.f32 %v7017, %v42
    %v7030 = vmul.f32 %v7017, %v43
    %v7031 = vmul.f32 %v7017, %v44
    %v7032 = vmul.f32 %v7017, %v45
    %v7033 = vmul.f32 %v7017, %v46
    %v7034 = vmul.f32 %v7017, %v47
    %v7035 = vmul.f32 %v7017, %v48
    %v7036 = vmul.f32 %v7017, %v49
    %v7037 = vmul.f32 %v7017, %v50
    %v7038 = vmul.f32 %v7017, %v51
    %v7039 = vmul.f32 %v7017, %v52
    %v7040 = vmul.f32 %v7017, %v53
    %v7041 = vmul.f32 %v7017, %v54
    %v7042 = vmul.f32 %v7017, %v55
    %v7043 = vmul.f32 %v7017, %v56
    %v7070 = vrot.slane %v7018, 3
    %v7071 = vrot.slane %v7019, 3
    %v7072 = vsel %vm5619, %v7070, %v7071
    %v7073 = vrot.slane %v7020, 3
    %v7074 = vrot.slane %v7021, 3
    %v7075 = vsel %vm5619, %v7073, %v7074
    %v7076 = vrot.slane %v7022, 3
    %v7077 = vrot.slane %v7023, 3
    %v7078 = vsel %vm5619, %v7076, %v7077
    %v7079 = vrot.slane %v7024, 3
    %v7080 = vrot.slane %v7025, 3
    %v7081 = vsel %vm5619, %v7079, %v7080
    %v7082 = vrot.slane %v7026, 3
    %v7083 = vrot.slane %v7027, 3
    %v7084 = vsel %vm5619, %v7082, %v7083
    %v7085 = vrot.slane %v7028, 3
    %v7086 = vrot.slane %v7029, 3
    %v7087 = vsel %vm5619, %v7085, %v7086
    %v7088 = vrot.slane %v7030, 3
    %v7089 = vrot.slane %v7031, 3
    %v7090 = vsel %vm5619, %v7088, %v7089
    %v7091 = vrot.slane %v7032, 3
    %v7092 = vrot.slane %v7033, 3
    %v7093 = vsel %vm5619, %v7091, %v7092
    %v7094 = vrot.slane %v7034, 3
    %v7095 = vrot.slane %v7035, 3
    %v7096 = vsel %vm5619, %v7094, %v7095
    %v7097 = vrot.slane %v7036, 3
    %v7098 = vrot.slane %v7037, 3
    %v7099 = vsel %vm5619, %v7097, %v7098
    %v7100 = vrot.slane %v7038, 3
    %v7101 = vrot.slane %v7039, 3
    %v7102 = vsel %vm5619, %v7100, %v7101
    %v7103 = vrot.slane %v7040, 3
    %v7104 = vrot.slane %v7041, 3
    %v7105 = vsel %vm5619, %v7103, %v7104
    %v7106 = vrot.slane %v7042, 3
    %v7107 = vrot.slane %v7043, 3
    %v7108 = vsel %vm5619, %v7106, %v7107
    %v7135 = vadd.f32 %v6555, %v7072
    %v7136 = vadd.f32 %v6556, %v7071
    %v7137 = vadd.f32 %v6557, %v7075
    %v7138 = vadd.f32 %v6558, %v7074
    %v7139 = vadd.f32 %v6559, %v7078
    %v7140 = vadd.f32 %v6560, %v7077
    %v7141 = vadd.f32 %v6561, %v7081
    %v7142 = vadd.f32 %v6562, %v7080
    %v7143 = vadd.f32 %v6563, %v7084
    %v7144 = vadd.f32 %v6564, %v7083
    %v7145 = vadd.f32 %v6565, %v7087
    %v7146 = vadd.f32 %v6566, %v7086
    %v7147 = vadd.f32 %v6567, %v7090
    %v7148 = vadd.f32 %v6568, %v7089
    %v7149 = vadd.f32 %v6569, %v7093
    %v7150 = vadd.f32 %v6570, %v7092
    %v7151 = vadd.f32 %v6571, %v7096
    %v7152 = vadd.f32 %v6572, %v7095
    %v7153 = vadd.f32 %v6573, %v7099
    %v7154 = vadd.f32 %v6574, %v7098
    %v7155 = vadd.f32 %v6575, %v7102
    %v7156 = vadd.f32 %v6576, %v7101
    %v7157 = vadd.f32 %v6577, %v7105
    %v7158 = vadd.f32 %v6578, %v7104
    %v7159 = vadd.f32 %v6579, %v7108
    %v7160 = vadd.f32 %v6580, %v7107
    %s7161 = sld [smem:[#allocation2 + $0x3b]]
    %v7162 = vstv %s7161
    %v7163 = vmul.f32 %v7162, %v31
    %v7164 = vmul.f32 %v7162, %v32
    %v7165 = vmul.f32 %v7162, %v33
    %v7166 = vmul.f32 %v7162, %v34
    %v7167 = vmul.f32 %v7162, %v35
    %v7168 = vmul.f32 %v7162, %v36
    %v7169 = vmul.f32 %v7162, %v37
    %v7170 = vmul.f32 %v7162, %v38
    %v7171 = vmul.f32 %v7162, %v39
    %v7172 = vmul.f32 %v7162, %v40
    %v7173 = vmul.f32 %v7162, %v41
    %v7174 = vmul.f32 %v7162, %v42
    %v7175 = vmul.f32 %v7162, %v43
    %v7176 = vmul.f32 %v7162, %v44
    %v7177 = vmul.f32 %v7162, %v45
    %v7178 = vmul.f32 %v7162, %v46
    %v7179 = vmul.f32 %v7162, %v47
    %v7180 = vmul.f32 %v7162, %v48
    %v7181 = vmul.f32 %v7162, %v49
    %v7182 = vmul.f32 %v7162, %v50
    %v7183 = vmul.f32 %v7162, %v51
    %v7184 = vmul.f32 %v7162, %v52
    %v7185 = vmul.f32 %v7162, %v53
    %v7186 = vmul.f32 %v7162, %v54
    %v7187 = vmul.f32 %v7162, %v55
    %v7188 = vmul.f32 %v7162, %v56
    %v7215 = vrot.slane %v7163, 3
    %v7216 = vrot.slane %v7164, 3
    %v7217 = vsel %vm5619, %v7215, %v7216
    %v7218 = vrot.slane %v7165, 3
    %v7219 = vrot.slane %v7166, 3
    %v7220 = vsel %vm5619, %v7218, %v7219
    %v7221 = vrot.slane %v7167, 3
    %v7222 = vrot.slane %v7168, 3
    %v7223 = vsel %vm5619, %v7221, %v7222
    %v7224 = vrot.slane %v7169, 3
    %v7225 = vrot.slane %v7170, 3
    %v7226 = vsel %vm5619, %v7224, %v7225
    %v7227 = vrot.slane %v7171, 3
    %v7228 = vrot.slane %v7172, 3
    %v7229 = vsel %vm5619, %v7227, %v7228
    %v7230 = vrot.slane %v7173, 3
    %v7231 = vrot.slane %v7174, 3
    %v7232 = vsel %vm5619, %v7230, %v7231
    %v7233 = vrot.slane %v7175, 3
    %v7234 = vrot.slane %v7176, 3
    %v7235 = vsel %vm5619, %v7233, %v7234
    %v7236 = vrot.slane %v7177, 3
    %v7237 = vrot.slane %v7178, 3
    %v7238 = vsel %vm5619, %v7236, %v7237
    %v7239 = vrot.slane %v7179, 3
    %v7240 = vrot.slane %v7180, 3
    %v7241 = vsel %vm5619, %v7239, %v7240
    %v7242 = vrot.slane %v7181, 3
    %v7243 = vrot.slane %v7182, 3
    %v7244 = vsel %vm5619, %v7242, %v7243
    %v7245 = vrot.slane %v7183, 3
    %v7246 = vrot.slane %v7184, 3
    %v7247 = vsel %vm5619, %v7245, %v7246
    %v7248 = vrot.slane %v7185, 3
    %v7249 = vrot.slane %v7186, 3
    %v7250 = vsel %vm5619, %v7248, %v7249
    %v7251 = vrot.slane %v7187, 3
    %v7252 = vrot.slane %v7188, 3
    %v7253 = vsel %vm5619, %v7251, %v7252
    %v7280 = vadd.f32 %v6700, %v7217
    %v7281 = vadd.f32 %v6701, %v7216
    %v7282 = vadd.f32 %v6702, %v7220
    %v7283 = vadd.f32 %v6703, %v7219
    %v7284 = vadd.f32 %v6704, %v7223
    %v7285 = vadd.f32 %v6705, %v7222
    %v7286 = vadd.f32 %v6706, %v7226
    %v7287 = vadd.f32 %v6707, %v7225
    %v7288 = vadd.f32 %v6708, %v7229
    %v7289 = vadd.f32 %v6709, %v7228
    %v7290 = vadd.f32 %v6710, %v7232
    %v7291 = vadd.f32 %v6711, %v7231
    %v7292 = vadd.f32 %v6712, %v7235
    %v7293 = vadd.f32 %v6713, %v7234
    %v7294 = vadd.f32 %v6714, %v7238
    %v7295 = vadd.f32 %v6715, %v7237
    %v7296 = vadd.f32 %v6716, %v7241
    %v7297 = vadd.f32 %v6717, %v7240
    %v7298 = vadd.f32 %v6718, %v7244
    %v7299 = vadd.f32 %v6719, %v7243
    %v7300 = vadd.f32 %v6720, %v7247
    %v7301 = vadd.f32 %v6721, %v7246
    %v7302 = vadd.f32 %v6722, %v7250
    %v7303 = vadd.f32 %v6723, %v7249
    %v7304 = vadd.f32 %v6724, %v7253
    %v7305 = vadd.f32 %v6725, %v7252
    %s7306 = sld [smem:[#allocation2 + $0xf]]
    %v7307 = vstv %s7306
    %v7308 = vmul.f32 %v7307, %v33
    %v7309 = vmul.f32 %v7307, %v34
    %v7310 = vmul.f32 %v7307, %v35
    %v7311 = vmul.f32 %v7307, %v36
    %v7312 = vmul.f32 %v7307, %v37
    %v7313 = vmul.f32 %v7307, %v38
    %v7314 = vmul.f32 %v7307, %v39
    %v7315 = vmul.f32 %v7307, %v40
    %v7316 = vmul.f32 %v7307, %v41
    %v7317 = vmul.f32 %v7307, %v42
    %v7318 = vmul.f32 %v7307, %v43
    %v7319 = vmul.f32 %v7307, %v44
    %v7320 = vmul.f32 %v7307, %v45
    %v7321 = vmul.f32 %v7307, %v46
    %v7322 = vmul.f32 %v7307, %v47
    %v7323 = vmul.f32 %v7307, %v48
    %v7324 = vmul.f32 %v7307, %v49
    %v7325 = vmul.f32 %v7307, %v50
    %v7326 = vmul.f32 %v7307, %v51
    %v7327 = vmul.f32 %v7307, %v52
    %v7328 = vmul.f32 %v7307, %v53
    %v7329 = vmul.f32 %v7307, %v54
    %v7330 = vmul.f32 %v7307, %v55
    %v7331 = vmul.f32 %v7307, %v56
    %v7332 = vmul.f32 %v7307, %v57
    %v7333 = vmul.f32 %v7307, %v58
    %v7360 = vrot.slane %v7308, 3
    %v7361 = vrot.slane %v7309, 3
    %v7362 = vsel %vm5619, %v7360, %v7361
    %v7363 = vrot.slane %v7310, 3
    %v7364 = vrot.slane %v7311, 3
    %v7365 = vsel %vm5619, %v7363, %v7364
    %v7366 = vrot.slane %v7312, 3
    %v7367 = vrot.slane %v7313, 3
    %v7368 = vsel %vm5619, %v7366, %v7367
    %v7369 = vrot.slane %v7314, 3
    %v7370 = vrot.slane %v7315, 3
    %v7371 = vsel %vm5619, %v7369, %v7370
    %v7372 = vrot.slane %v7316, 3
    %v7373 = vrot.slane %v7317, 3
    %v7374 = vsel %vm5619, %v7372, %v7373
    %v7375 = vrot.slane %v7318, 3
    %v7376 = vrot.slane %v7319, 3
    %v7377 = vsel %vm5619, %v7375, %v7376
    %v7378 = vrot.slane %v7320, 3
    %v7379 = vrot.slane %v7321, 3
    %v7380 = vsel %vm5619, %v7378, %v7379
    %v7381 = vrot.slane %v7322, 3
    %v7382 = vrot.slane %v7323, 3
    %v7383 = vsel %vm5619, %v7381, %v7382
    %v7384 = vrot.slane %v7324, 3
    %v7385 = vrot.slane %v7325, 3
    %v7386 = vsel %vm5619, %v7384, %v7385
    %v7387 = vrot.slane %v7326, 3
    %v7388 = vrot.slane %v7327, 3
    %v7389 = vsel %vm5619, %v7387, %v7388
    %v7390 = vrot.slane %v7328, 3
    %v7391 = vrot.slane %v7329, 3
    %v7392 = vsel %vm5619, %v7390, %v7391
    %v7393 = vrot.slane %v7330, 3
    %v7394 = vrot.slane %v7331, 3
    %v7395 = vsel %vm5619, %v7393, %v7394
    %v7396 = vrot.slane %v7332, 3
    %v7397 = vrot.slane %v7333, 3
    %v7398 = vsel %vm5619, %v7396, %v7397
    %v7425 = vadd.f32 %v6845, %v7362
    %v7426 = vadd.f32 %v6846, %v7361
    %v7427 = vadd.f32 %v6847, %v7365
    %v7428 = vadd.f32 %v6848, %v7364
    %v7429 = vadd.f32 %v6849, %v7368
    %v7430 = vadd.f32 %v6850, %v7367
    %v7431 = vadd.f32 %v6851, %v7371
    %v7432 = vadd.f32 %v6852, %v7370
    %v7433 = vadd.f32 %v6853, %v7374
    %v7434 = vadd.f32 %v6854, %v7373
    %v7435 = vadd.f32 %v6855, %v7377
    %v7436 = vadd.f32 %v6856, %v7376
    %v7437 = vadd.f32 %v6857, %v7380
    %v7438 = vadd.f32 %v6858, %v7379
    %v7439 = vadd.f32 %v6859, %v7383
    %v7440 = vadd.f32 %v6860, %v7382
    %v7441 = vadd.f32 %v6861, %v7386
    %v7442 = vadd.f32 %v6862, %v7385
    %v7443 = vadd.f32 %v6863, %v7389
    %v7444 = vadd.f32 %v6864, %v7388
    %v7445 = vadd.f32 %v6865, %v7392
    %v7446 = vadd.f32 %v6866, %v7391
    %v7447 = vadd.f32 %v6867, %v7395
    %v7448 = vadd.f32 %v6868, %v7394
    %v7449 = vadd.f32 %v6869, %v7398
    %v7450 = vadd.f32 %v6870, %v7397
    %s7451 = sld [smem:[#allocation2 + $0x1f]]
    %v7452 = vstv %s7451
    %v7453 = vmul.f32 %v7452, %v33
    %v7454 = vmul.f32 %v7452, %v34
    %v7455 = vmul.f32 %v7452, %v35
    %v7456 = vmul.f32 %v7452, %v36
    %v7457 = vmul.f32 %v7452, %v37
    %v7458 = vmul.f32 %v7452, %v38
    %v7459 = vmul.f32 %v7452, %v39
    %v7460 = vmul.f32 %v7452, %v40
    %v7461 = vmul.f32 %v7452, %v41
    %v7462 = vmul.f32 %v7452, %v42
    %v7463 = vmul.f32 %v7452, %v43
    %v7464 = vmul.f32 %v7452, %v44
    %v7465 = vmul.f32 %v7452, %v45
    %v7466 = vmul.f32 %v7452, %v46
    %v7467 = vmul.f32 %v7452, %v47
    %v7468 = vmul.f32 %v7452, %v48
    %v7469 = vmul.f32 %v7452, %v49
    %v7470 = vmul.f32 %v7452, %v50
    %v7471 = vmul.f32 %v7452, %v51
    %v7472 = vmul.f32 %v7452, %v52
    %v7473 = vmul.f32 %v7452, %v53
    %v7474 = vmul.f32 %v7452, %v54
    %v7475 = vmul.f32 %v7452, %v55
    %v7476 = vmul.f32 %v7452, %v56
    %v7477 = vmul.f32 %v7452, %v57
    %v7478 = vmul.f32 %v7452, %v58
    %v7505 = vrot.slane %v7453, 3
    %v7506 = vrot.slane %v7454, 3
    %v7507 = vsel %vm5619, %v7505, %v7506
    %v7508 = vrot.slane %v7455, 3
    %v7509 = vrot.slane %v7456, 3
    %v7510 = vsel %vm5619, %v7508, %v7509
    %v7511 = vrot.slane %v7457, 3
    %v7512 = vrot.slane %v7458, 3
    %v7513 = vsel %vm5619, %v7511, %v7512
    %v7514 = vrot.slane %v7459, 3
    %v7515 = vrot.slane %v7460, 3
    %v7516 = vsel %vm5619, %v7514, %v7515
    %v7517 = vrot.slane %v7461, 3
    %v7518 = vrot.slane %v7462, 3
    %v7519 = vsel %vm5619, %v7517, %v7518
    %v7520 = vrot.slane %v7463, 3
    %v7521 = vrot.slane %v7464, 3
    %v7522 = vsel %vm5619, %v7520, %v7521
    %v7523 = vrot.slane %v7465, 3
    %v7524 = vrot.slane %v7466, 3
    %v7525 = vsel %vm5619, %v7523, %v7524
    %v7526 = vrot.slane %v7467, 3
    %v7527 = vrot.slane %v7468, 3
    %v7528 = vsel %vm5619, %v7526, %v7527
    %v7529 = vrot.slane %v7469, 3
    %v7530 = vrot.slane %v7470, 3
    %v7531 = vsel %vm5619, %v7529, %v7530
    %v7532 = vrot.slane %v7471, 3
    %v7533 = vrot.slane %v7472, 3
    %v7534 = vsel %vm5619, %v7532, %v7533
    %v7535 = vrot.slane %v7473, 3
    %v7536 = vrot.slane %v7474, 3
    %v7537 = vsel %vm5619, %v7535, %v7536
    %v7538 = vrot.slane %v7475, 3
    %v7539 = vrot.slane %v7476, 3
    %v7540 = vsel %vm5619, %v7538, %v7539
    %v7541 = vrot.slane %v7477, 3
    %v7542 = vrot.slane %v7478, 3
    %v7543 = vsel %vm5619, %v7541, %v7542
    %v7570 = vadd.f32 %v6990, %v7507
    %v7571 = vadd.f32 %v6991, %v7506
    %v7572 = vadd.f32 %v6992, %v7510
    %v7573 = vadd.f32 %v6993, %v7509
    %v7574 = vadd.f32 %v6994, %v7513
    %v7575 = vadd.f32 %v6995, %v7512
    %v7576 = vadd.f32 %v6996, %v7516
    %v7577 = vadd.f32 %v6997, %v7515
    %v7578 = vadd.f32 %v6998, %v7519
    %v7579 = vadd.f32 %v6999, %v7518
    %v7580 = vadd.f32 %v7000, %v7522
    %v7581 = vadd.f32 %v7001, %v7521
    %v7582 = vadd.f32 %v7002, %v7525
    %v7583 = vadd.f32 %v7003, %v7524
    %v7584 = vadd.f32 %v7004, %v7528
    %v7585 = vadd.f32 %v7005, %v7527
    %v7586 = vadd.f32 %v7006, %v7531
    %v7587 = vadd.f32 %v7007, %v7530
    %v7588 = vadd.f32 %v7008, %v7534
    %v7589 = vadd.f32 %v7009, %v7533
    %v7590 = vadd.f32 %v7010, %v7537
    %v7591 = vadd.f32 %v7011, %v7536
    %v7592 = vadd.f32 %v7012, %v7540
    %v7593 = vadd.f32 %v7013, %v7539
    %v7594 = vadd.f32 %v7014, %v7543
    %v7595 = vadd.f32 %v7015, %v7542
    %s7596 = sld [smem:[#allocation2 + $0x2f]]
    %v7597 = vstv %s7596
    %v7598 = vmul.f32 %v7597, %v33
    %v7599 = vmul.f32 %v7597, %v34
    %v7600 = vmul.f32 %v7597, %v35
    %v7601 = vmul.f32 %v7597, %v36
    %v7602 = vmul.f32 %v7597, %v37
    %v7603 = vmul.f32 %v7597, %v38
    %v7604 = vmul.f32 %v7597, %v39
    %v7605 = vmul.f32 %v7597, %v40
    %v7606 = vmul.f32 %v7597, %v41
    %v7607 = vmul.f32 %v7597, %v42
    %v7608 = vmul.f32 %v7597, %v43
    %v7609 = vmul.f32 %v7597, %v44
    %v7610 = vmul.f32 %v7597, %v45
    %v7611 = vmul.f32 %v7597, %v46
    %v7612 = vmul.f32 %v7597, %v47
    %v7613 = vmul.f32 %v7597, %v48
    %v7614 = vmul.f32 %v7597, %v49
    %v7615 = vmul.f32 %v7597, %v50
    %v7616 = vmul.f32 %v7597, %v51
    %v7617 = vmul.f32 %v7597, %v52
    %v7618 = vmul.f32 %v7597, %v53
    %v7619 = vmul.f32 %v7597, %v54
    %v7620 = vmul.f32 %v7597, %v55
    %v7621 = vmul.f32 %v7597, %v56
    %v7622 = vmul.f32 %v7597, %v57
    %v7623 = vmul.f32 %v7597, %v58
    %v7650 = vrot.slane %v7598, 3
    %v7651 = vrot.slane %v7599, 3
    %v7652 = vsel %vm5619, %v7650, %v7651
    %v7653 = vrot.slane %v7600, 3
    %v7654 = vrot.slane %v7601, 3
    %v7655 = vsel %vm5619, %v7653, %v7654
    %v7656 = vrot.slane %v7602, 3
    %v7657 = vrot.slane %v7603, 3
    %v7658 = vsel %vm5619, %v7656, %v7657
    %v7659 = vrot.slane %v7604, 3
    %v7660 = vrot.slane %v7605, 3
    %v7661 = vsel %vm5619, %v7659, %v7660
    %v7662 = vrot.slane %v7606, 3
    %v7663 = vrot.slane %v7607, 3
    %v7664 = vsel %vm5619, %v7662, %v7663
    %v7665 = vrot.slane %v7608, 3
    %v7666 = vrot.slane %v7609, 3
    %v7667 = vsel %vm5619, %v7665, %v7666
    %v7668 = vrot.slane %v7610, 3
    %v7669 = vrot.slane %v7611, 3
    %v7670 = vsel %vm5619, %v7668, %v7669
    %v7671 = vrot.slane %v7612, 3
    %v7672 = vrot.slane %v7613, 3
    %v7673 = vsel %vm5619, %v7671, %v7672
    %v7674 = vrot.slane %v7614, 3
    %v7675 = vrot.slane %v7615, 3
    %v7676 = vsel %vm5619, %v7674, %v7675
    %v7677 = vrot.slane %v7616, 3
    %v7678 = vrot.slane %v7617, 3
    %v7679 = vsel %vm5619, %v7677, %v7678
    %v7680 = vrot.slane %v7618, 3
    %v7681 = vrot.slane %v7619, 3
    %v7682 = vsel %vm5619, %v7680, %v7681
    %v7683 = vrot.slane %v7620, 3
    %v7684 = vrot.slane %v7621, 3
    %v7685 = vsel %vm5619, %v7683, %v7684
    %v7686 = vrot.slane %v7622, 3
    %v7687 = vrot.slane %v7623, 3
    %v7688 = vsel %vm5619, %v7686, %v7687
    %v7715 = vadd.f32 %v7135, %v7652
    %v7716 = vadd.f32 %v7136, %v7651
    %v7717 = vadd.f32 %v7137, %v7655
    %v7718 = vadd.f32 %v7138, %v7654
    %v7719 = vadd.f32 %v7139, %v7658
    %v7720 = vadd.f32 %v7140, %v7657
    %v7721 = vadd.f32 %v7141, %v7661
    %v7722 = vadd.f32 %v7142, %v7660
    %v7723 = vadd.f32 %v7143, %v7664
    %v7724 = vadd.f32 %v7144, %v7663
    %v7725 = vadd.f32 %v7145, %v7667
    %v7726 = vadd.f32 %v7146, %v7666
    %v7727 = vadd.f32 %v7147, %v7670
    %v7728 = vadd.f32 %v7148, %v7669
    %v7729 = vadd.f32 %v7149, %v7673
    %v7730 = vadd.f32 %v7150, %v7672
    %v7731 = vadd.f32 %v7151, %v7676
    %v7732 = vadd.f32 %v7152, %v7675
    %v7733 = vadd.f32 %v7153, %v7679
    %v7734 = vadd.f32 %v7154, %v7678
    %v7735 = vadd.f32 %v7155, %v7682
    %v7736 = vadd.f32 %v7156, %v7681
    %v7737 = vadd.f32 %v7157, %v7685
    %v7738 = vadd.f32 %v7158, %v7684
    %v7739 = vadd.f32 %v7159, %v7688
    %v7740 = vadd.f32 %v7160, %v7687
    %s7741 = sld [smem:[#allocation2 + $0x3f]]
    %v7742 = vstv %s7741
    %v7743 = vmul.f32 %v7742, %v33
    %v7744 = vmul.f32 %v7742, %v34
    %v7745 = vmul.f32 %v7742, %v35
    %v7746 = vmul.f32 %v7742, %v36
    %v7747 = vmul.f32 %v7742, %v37
    %v7748 = vmul.f32 %v7742, %v38
    %v7749 = vmul.f32 %v7742, %v39
    %v7750 = vmul.f32 %v7742, %v40
    %v7751 = vmul.f32 %v7742, %v41
    %v7752 = vmul.f32 %v7742, %v42
    %v7753 = vmul.f32 %v7742, %v43
    %v7754 = vmul.f32 %v7742, %v44
    %v7755 = vmul.f32 %v7742, %v45
    %v7756 = vmul.f32 %v7742, %v46
    %v7757 = vmul.f32 %v7742, %v47
    %v7758 = vmul.f32 %v7742, %v48
    %v7759 = vmul.f32 %v7742, %v49
    %v7760 = vmul.f32 %v7742, %v50
    %v7761 = vmul.f32 %v7742, %v51
    %v7762 = vmul.f32 %v7742, %v52
    %v7763 = vmul.f32 %v7742, %v53
    %v7764 = vmul.f32 %v7742, %v54
    %v7765 = vmul.f32 %v7742, %v55
    %v7766 = vmul.f32 %v7742, %v56
    %v7767 = vmul.f32 %v7742, %v57
    %v7768 = vmul.f32 %v7742, %v58
    %v7795 = vrot.slane %v7743, 3
    %v7796 = vrot.slane %v7744, 3
    %v7797 = vsel %vm5619, %v7795, %v7796
    %v7798 = vrot.slane %v7745, 3
    %v7799 = vrot.slane %v7746, 3
    %v7800 = vsel %vm5619, %v7798, %v7799
    %v7801 = vrot.slane %v7747, 3
    %v7802 = vrot.slane %v7748, 3
    %v7803 = vsel %vm5619, %v7801, %v7802
    %v7804 = vrot.slane %v7749, 3
    %v7805 = vrot.slane %v7750, 3
    %v7806 = vsel %vm5619, %v7804, %v7805
    %v7807 = vrot.slane %v7751, 3
    %v7808 = vrot.slane %v7752, 3
    %v7809 = vsel %vm5619, %v7807, %v7808
    %v7810 = vrot.slane %v7753, 3
    %v7811 = vrot.slane %v7754, 3
    %v7812 = vsel %vm5619, %v7810, %v7811
    %v7813 = vrot.slane %v7755, 3
    %v7814 = vrot.slane %v7756, 3
    %v7815 = vsel %vm5619, %v7813, %v7814
    %v7816 = vrot.slane %v7757, 3
    %v7817 = vrot.slane %v7758, 3
    %v7818 = vsel %vm5619, %v7816, %v7817
    %v7819 = vrot.slane %v7759, 3
    %v7820 = vrot.slane %v7760, 3
    %v7821 = vsel %vm5619, %v7819, %v7820
    %v7822 = vrot.slane %v7761, 3
    %v7823 = vrot.slane %v7762, 3
    %v7824 = vsel %vm5619, %v7822, %v7823
    %v7825 = vrot.slane %v7763, 3
    %v7826 = vrot.slane %v7764, 3
    %v7827 = vsel %vm5619, %v7825, %v7826
    %v7828 = vrot.slane %v7765, 3
    %v7829 = vrot.slane %v7766, 3
    %v7830 = vsel %vm5619, %v7828, %v7829
    %v7831 = vrot.slane %v7767, 3
    %v7832 = vrot.slane %v7768, 3
    %v7833 = vsel %vm5619, %v7831, %v7832
    %v7860 = vadd.f32 %v7280, %v7797
    %v7861 = vadd.f32 %v7281, %v7796
    %v7862 = vadd.f32 %v7282, %v7800
    %v7863 = vadd.f32 %v7283, %v7799
    %v7864 = vadd.f32 %v7284, %v7803
    %v7865 = vadd.f32 %v7285, %v7802
    %v7866 = vadd.f32 %v7286, %v7806
    %v7867 = vadd.f32 %v7287, %v7805
    %v7868 = vadd.f32 %v7288, %v7809
    %v7869 = vadd.f32 %v7289, %v7808
    %v7870 = vadd.f32 %v7290, %v7812
    %v7871 = vadd.f32 %v7291, %v7811
    %v7872 = vadd.f32 %v7292, %v7815
    %v7873 = vadd.f32 %v7293, %v7814
    %v7874 = vadd.f32 %v7294, %v7818
    %v7875 = vadd.f32 %v7295, %v7817
    %v7876 = vadd.f32 %v7296, %v7821
    %v7877 = vadd.f32 %v7297, %v7820
    %v7878 = vadd.f32 %v7298, %v7824
    %v7879 = vadd.f32 %v7299, %v7823
    %v7880 = vadd.f32 %v7300, %v7827
    %v7881 = vadd.f32 %v7301, %v7826
    %v7882 = vadd.f32 %v7302, %v7830
    %v7883 = vadd.f32 %v7303, %v7829
    %v7884 = vadd.f32 %v7304, %v7833
    %v7885 = vadd.f32 %v7305, %v7832
    %vm7886 = vcmask 15360
    %7887 = vst.msk [vmem:[%s2] sm:$0xff] %vm7886, %v7425
    %vm7888 = vcmask 12288
    %7889 = vst.msk [vmem:[%s2 + $0x8] sm:$0x1f] %vm7888, %v7426
    %7890 = vst.msk [vmem:[%s2 + $0x10] sm:$0xff] %vm7886, %v7427
    %7891 = vst.msk [vmem:[%s2 + $0x18] sm:$0x1f] %vm7888, %v7428
    %7892 = vst.msk [vmem:[%s2 + $0x20] sm:$0xff] %vm7886, %v7429
    %7893 = vst.msk [vmem:[%s2 + $0x28] sm:$0x1f] %vm7888, %v7430
    %7894 = vst.msk [vmem:[%s2 + $0x30] sm:$0xff] %vm7886, %v7431
    %7895 = vst.msk [vmem:[%s2 + $0x38] sm:$0x1f] %vm7888, %v7432
    %7896 = vst.msk [vmem:[%s2 + $0x40] sm:$0xff] %vm7886, %v7433
    %7897 = vst.msk [vmem:[%s2 + $0x48] sm:$0x1f] %vm7888, %v7434
    %7898 = vst.msk [vmem:[%s2 + $0x50] sm:$0xff] %vm7886, %v7435
    %7899 = vst.msk [vmem:[%s2 + $0x58] sm:$0x1f] %vm7888, %v7436
    %7900 = vst.msk [vmem:[%s2 + $0x60] sm:$0xff] %vm7886, %v7437
    %7901 = vst.msk [vmem:[%s2 + $0x68] sm:$0x1f] %vm7888, %v7438
    %7902 = vst.msk [vmem:[%s2 + $0x70] sm:$0xff] %vm7886, %v7439
    %7903 = vst.msk [vmem:[%s2 + $0x78] sm:$0x1f] %vm7888, %v7440
    %7904 = vst.msk [vmem:[%s2 + $0x80] sm:$0xff] %vm7886, %v7441
    %7905 = vst.msk [vmem:[%s2 + $0x88] sm:$0x1f] %vm7888, %v7442
    %7906 = vst.msk [vmem:[%s2 + $0x90] sm:$0xff] %vm7886, %v7443
    %7907 = vst.msk [vmem:[%s2 + $0x98] sm:$0x1f] %vm7888, %v7444
    %7908 = vst.msk [vmem:[%s2 + $0xa0] sm:$0xff] %vm7886, %v7445
    %7909 = vst.msk [vmem:[%s2 + $0xa8] sm:$0x1f] %vm7888, %v7446
    %7910 = vst.msk [vmem:[%s2 + $0xb0] sm:$0xff] %vm7886, %v7447
    %7911 = vst.msk [vmem:[%s2 + $0xb8] sm:$0x1f] %vm7888, %v7448
    %7912 = vst.msk [vmem:[%s2 + $0xc0] sm:$0xff] %vm7886, %v7449
    %7913 = vst.msk [vmem:[%s2 + $0xc8] sm:$0x1f] %vm7888, %v7450
    %7914 = vst.msk [vmem:[%s2 + $0xd0] sm:$0xff] %vm7886, %v7570
    %7915 = vst.msk [vmem:[%s2 + $0xd8] sm:$0x1f] %vm7888, %v7571
    %7916 = vst.msk [vmem:[%s2 + $0xe0] sm:$0xff] %vm7886, %v7572
    %7917 = vst.msk [vmem:[%s2 + $0xe8] sm:$0x1f] %vm7888, %v7573
    %7918 = vst.msk [vmem:[%s2 + $0xf0] sm:$0xff] %vm7886, %v7574
    %7919 = vst.msk [vmem:[%s2 + $0xf8] sm:$0x1f] %vm7888, %v7575
    %7920 = vst.msk [vmem:[%s2 + $0x100] sm:$0xff] %vm7886, %v7576
    %7921 = vst.msk [vmem:[%s2 + $0x108] sm:$0x1f] %vm7888, %v7577
    %7922 = vst.msk [vmem:[%s2 + $0x110] sm:$0xff] %vm7886, %v7578
    %7923 = vst.msk [vmem:[%s2 + $0x118] sm:$0x1f] %vm7888, %v7579
    %7924 = vst.msk [vmem:[%s2 + $0x120] sm:$0xff] %vm7886, %v7580
    %7925 = vst.msk [vmem:[%s2 + $0x128] sm:$0x1f] %vm7888, %v7581
    %7926 = vst.msk [vmem:[%s2 + $0x130] sm:$0xff] %vm7886, %v7582
    %7927 = vst.msk [vmem:[%s2 + $0x138] sm:$0x1f] %vm7888, %v7583
    %7928 = vst.msk [vmem:[%s2 + $0x140] sm:$0xff] %vm7886, %v7584
    %7929 = vst.msk [vmem:[%s2 + $0x148] sm:$0x1f] %vm7888, %v7585
    %7930 = vst.msk [vmem:[%s2 + $0x150] sm:$0xff] %vm7886, %v7586
    %7931 = vst.msk [vmem:[%s2 + $0x158] sm:$0x1f] %vm7888, %v7587
    %7932 = vst.msk [vmem:[%s2 + $0x160] sm:$0xff] %vm7886, %v7588
    %7933 = vst.msk [vmem:[%s2 + $0x168] sm:$0x1f] %vm7888, %v7589
    %7934 = vst.msk [vmem:[%s2 + $0x170] sm:$0xff] %vm7886, %v7590
    %7935 = vst.msk [vmem:[%s2 + $0x178] sm:$0x1f] %vm7888, %v7591
    %7936 = vst.msk [vmem:[%s2 + $0x180] sm:$0xff] %vm7886, %v7592
    %7937 = vst.msk [vmem:[%s2 + $0x188] sm:$0x1f] %vm7888, %v7593
    %7938 = vst.msk [vmem:[%s2 + $0x190] sm:$0xff] %vm7886, %v7594
    %7939 = vst.msk [vmem:[%s2 + $0x198] sm:$0x1f] %vm7888, %v7595
    %7940 = vst.msk [vmem:[%s2 + $0x1a0] sm:$0xff] %vm7886, %v7715
    %7941 = vst.msk [vmem:[%s2 + $0x1a8] sm:$0x1f] %vm7888, %v7716
    %7942 = vst.msk [vmem:[%s2 + $0x1b0] sm:$0xff] %vm7886, %v7717
    %7943 = vst.msk [vmem:[%s2 + $0x1b8] sm:$0x1f] %vm7888, %v7718
    %7944 = vst.msk [vmem:[%s2 + $0x1c0] sm:$0xff] %vm7886, %v7719
    %7945 = vst.msk [vmem:[%s2 + $0x1c8] sm:$0x1f] %vm7888, %v7720
    %7946 = vst.msk [vmem:[%s2 + $0x1d0] sm:$0xff] %vm7886, %v7721
    %7947 = vst.msk [vmem:[%s2 + $0x1d8] sm:$0x1f] %vm7888, %v7722
    %7948 = vst.msk [vmem:[%s2 + $0x1e0] sm:$0xff] %vm7886, %v7723
    %7949 = vst.msk [vmem:[%s2 + $0x1e8] sm:$0x1f] %vm7888, %v7724
    %7950 = vst.msk [vmem:[%s2 + $0x1f0] sm:$0xff] %vm7886, %v7725
    %7951 = vst.msk [vmem:[%s2 + $0x1f8] sm:$0x1f] %vm7888, %v7726
    %7952 = vst.msk [vmem:[%s2 + $0x200] sm:$0xff] %vm7886, %v7727
    %7953 = vst.msk [vmem:[%s2 + $0x208] sm:$0x1f] %vm7888, %v7728
    %7954 = vst.msk [vmem:[%s2 + $0x210] sm:$0xff] %vm7886, %v7729
    %7955 = vst.msk [vmem:[%s2 + $0x218] sm:$0x1f] %vm7888, %v7730
    %7956 = vst.msk [vmem:[%s2 + $0x220] sm:$0xff] %vm7886, %v7731
    %7957 = vst.msk [vmem:[%s2 + $0x228] sm:$0x1f] %vm7888, %v7732
    %7958 = vst.msk [vmem:[%s2 + $0x230] sm:$0xff] %vm7886, %v7733
    %7959 = vst.msk [vmem:[%s2 + $0x238] sm:$0x1f] %vm7888, %v7734
    %7960 = vst.msk [vmem:[%s2 + $0x240] sm:$0xff] %vm7886, %v7735
    %7961 = vst.msk [vmem:[%s2 + $0x248] sm:$0x1f] %vm7888, %v7736
    %7962 = vst.msk [vmem:[%s2 + $0x250] sm:$0xff] %vm7886, %v7737
    %7963 = vst.msk [vmem:[%s2 + $0x258] sm:$0x1f] %vm7888, %v7738
    %7964 = vst.msk [vmem:[%s2 + $0x260] sm:$0xff] %vm7886, %v7739
    %7965 = vst.msk [vmem:[%s2 + $0x268] sm:$0x1f] %vm7888, %v7740
    %7966 = vst.msk [vmem:[%s2 + $0x270] sm:$0xff] %vm7886, %v7860
    %7967 = vst.msk [vmem:[%s2 + $0x278] sm:$0x1f] %vm7888, %v7861
    %7968 = vst.msk [vmem:[%s2 + $0x280] sm:$0xff] %vm7886, %v7862
    %7969 = vst.msk [vmem:[%s2 + $0x288] sm:$0x1f] %vm7888, %v7863
    %7970 = vst.msk [vmem:[%s2 + $0x290] sm:$0xff] %vm7886, %v7864
    %7971 = vst.msk [vmem:[%s2 + $0x298] sm:$0x1f] %vm7888, %v7865
    %7972 = vst.msk [vmem:[%s2 + $0x2a0] sm:$0xff] %vm7886, %v7866
    %7973 = vst.msk [vmem:[%s2 + $0x2a8] sm:$0x1f] %vm7888, %v7867
    %7974 = vst.msk [vmem:[%s2 + $0x2b0] sm:$0xff] %vm7886, %v7868
    %7975 = vst.msk [vmem:[%s2 + $0x2b8] sm:$0x1f] %vm7888, %v7869
    %7976 = vst.msk [vmem:[%s2 + $0x2c0] sm:$0xff] %vm7886, %v7870
    %7977 = vst.msk [vmem:[%s2 + $0x2c8] sm:$0x1f] %vm7888, %v7871
    %7978 = vst.msk [vmem:[%s2 + $0x2d0] sm:$0xff] %vm7886, %v7872
    %7979 = vst.msk [vmem:[%s2 + $0x2d8] sm:$0x1f] %vm7888, %v7873
    %7980 = vst.msk [vmem:[%s2 + $0x2e0] sm:$0xff] %vm7886, %v7874
    %7981 = vst.msk [vmem:[%s2 + $0x2e8] sm:$0x1f] %vm7888, %v7875
    %7982 = vst.msk [vmem:[%s2 + $0x2f0] sm:$0xff] %vm7886, %v7876
    %7983 = vst.msk [vmem:[%s2 + $0x2f8] sm:$0x1f] %vm7888, %v7877
    %7984 = vst.msk [vmem:[%s2 + $0x300] sm:$0xff] %vm7886, %v7878
    %7985 = vst.msk [vmem:[%s2 + $0x308] sm:$0x1f] %vm7888, %v7879
    %7986 = vst.msk [vmem:[%s2 + $0x310] sm:$0xff] %vm7886, %v7880
    %7987 = vst.msk [vmem:[%s2 + $0x318] sm:$0x1f] %vm7888, %v7881
    %7988 = vst.msk [vmem:[%s2 + $0x320] sm:$0xff] %vm7886, %v7882
    %7989 = vst.msk [vmem:[%s2 + $0x328] sm:$0x1f] %vm7888, %v7883
    %7990 = vst.msk [vmem:[%s2 + $0x330] sm:$0xff] %vm7886, %v7884
    %7991 = vst.msk [vmem:[%s2 + $0x338] sm:$0x1f] %vm7888, %v7885
    %v7992 = vmax.f32 %v7425, 0.0
    %v7993 = vmax.f32 %v7426, 0.0
    %v7994 = vmax.f32 %v7427, 0.0
    %v7995 = vmax.f32 %v7428, 0.0
    %v7996 = vmax.f32 %v7429, 0.0
    %v7997 = vmax.f32 %v7430, 0.0
    %v7998 = vmax.f32 %v7431, 0.0
    %v7999 = vmax.f32 %v7432, 0.0
    %v8000 = vmax.f32 %v7433, 0.0
    %v8001 = vmax.f32 %v7434, 0.0
    %v8002 = vmax.f32 %v7435, 0.0
    %v8003 = vmax.f32 %v7436, 0.0
    %v8004 = vmax.f32 %v7437, 0.0
    %v8005 = vmax.f32 %v7438, 0.0
    %v8006 = vmax.f32 %v7439, 0.0
    %v8007 = vmax.f32 %v7440, 0.0
    %v8008 = vmax.f32 %v7441, 0.0
    %v8009 = vmax.f32 %v7442, 0.0
    %v8010 = vmax.f32 %v7443, 0.0
    %v8011 = vmax.f32 %v7444, 0.0
    %v8012 = vmax.f32 %v7445, 0.0
    %v8013 = vmax.f32 %v7446, 0.0
    %v8014 = vmax.f32 %v7447, 0.0
    %v8015 = vmax.f32 %v7448, 0.0
    %v8016 = vmax.f32 %v7449, 0.0
    %v8017 = vmax.f32 %v7450, 0.0
    %v8018 = vmax.f32 %v7570, 0.0
    %v8019 = vmax.f32 %v7571, 0.0
    %v8020 = vmax.f32 %v7572, 0.0
    %v8021 = vmax.f32 %v7573, 0.0
    %v8022 = vmax.f32 %v7574, 0.0
    %v8023 = vmax.f32 %v7575, 0.0
    %v8024 = vmax.f32 %v7576, 0.0
    %v8025 = vmax.f32 %v7577, 0.0
    %v8026 = vmax.f32 %v7578, 0.0
    %v8027 = vmax.f32 %v7579, 0.0
    %v8028 = vmax.f32 %v7580, 0.0
    %v8029 = vmax.f32 %v7581, 0.0
    %v8030 = vmax.f32 %v7582, 0.0
    %v8031 = vmax.f32 %v7583, 0.0
    %v8032 = vmax.f32 %v7584, 0.0
    %v8033 = vmax.f32 %v7585, 0.0
    %v8034 = vmax.f32 %v7586, 0.0
    %v8035 = vmax.f32 %v7587, 0.0
    %v8036 = vmax.f32 %v7588, 0.0
    %v8037 = vmax.f32 %v7589, 0.0
    %v8038 = vmax.f32 %v7590, 0.0
    %v8039 = vmax.f32 %v7591, 0.0
    %v8040 = vmax.f32 %v7592, 0.0
    %v8041 = vmax.f32 %v7593, 0.0
    %v8042 = vmax.f32 %v7594, 0.0
    %v8043 = vmax.f32 %v7595, 0.0
    %v8044 = vmax.f32 %v7715, 0.0
    %v8045 = vmax.f32 %v7716, 0.0
    %v8046 = vmax.f32 %v7717, 0.0
    %v8047 = vmax.f32 %v7718, 0.0
    %v8048 = vmax.f32 %v7719, 0.0
    %v8049 = vmax.f32 %v7720, 0.0
    %v8050 = vmax.f32 %v7721, 0.0
    %v8051 = vmax.f32 %v7722, 0.0
    %v8052 = vmax.f32 %v7723, 0.0
    %v8053 = vmax.f32 %v7724, 0.0
    %v8054 = vmax.f32 %v7725, 0.0
    %v8055 = vmax.f32 %v7726, 0.0
    %v8056 = vmax.f32 %v7727, 0.0
    %v8057 = vmax.f32 %v7728, 0.0
    %v8058 = vmax.f32 %v7729, 0.0
    %v8059 = vmax.f32 %v7730, 0.0
    %v8060 = vmax.f32 %v7731, 0.0
    %v8061 = vmax.f32 %v7732, 0.0
    %v8062 = vmax.f32 %v7733, 0.0
    %v8063 = vmax.f32 %v7734, 0.0
    %v8064 = vmax.f32 %v7735, 0.0
    %v8065 = vmax.f32 %v7736, 0.0
    %v8066 = vmax.f32 %v7737, 0.0
    %v8067 = vmax.f32 %v7738, 0.0
    %v8068 = vmax.f32 %v7739, 0.0
    %v8069 = vmax.f32 %v7740, 0.0
    %v8070 = vmax.f32 %v7860, 0.0
    %v8071 = vmax.f32 %v7861, 0.0
    %v8072 = vmax.f32 %v7862, 0.0
    %v8073 = vmax.f32 %v7863, 0.0
    %v8074 = vmax.f32 %v7864, 0.0
    %v8075 = vmax.f32 %v7865, 0.0
    %v8076 = vmax.f32 %v7866, 0.0
    %v8077 = vmax.f32 %v7867, 0.0
    %v8078 = vmax.f32 %v7868, 0.0
    %v8079 = vmax.f32 %v7869, 0.0
    %v8080 = vmax.f32 %v7870, 0.0
    %v8081 = vmax.f32 %v7871, 0.0
    %v8082 = vmax.f32 %v7872, 0.0
    %v8083 = vmax.f32 %v7873, 0.0
    %v8084 = vmax.f32 %v7874, 0.0
    %v8085 = vmax.f32 %v7875, 0.0
    %v8086 = vmax.f32 %v7876, 0.0
    %v8087 = vmax.f32 %v7877, 0.0
    %v8088 = vmax.f32 %v7878, 0.0
    %v8089 = vmax.f32 %v7879, 0.0
    %v8090 = vmax.f32 %v7880, 0.0
    %v8091 = vmax.f32 %v7881, 0.0
    %v8092 = vmax.f32 %v7882, 0.0
    %v8093 = vmax.f32 %v7883, 0.0
    %v8094 = vmax.f32 %v7884, 0.0
    %v8095 = vmax.f32 %v7885, 0.0
    %8096 = vst.msk [vmem:[%s3] sm:$0xff] %vm7886, %v7992
    %8097 = vst.msk [vmem:[%s3 + $0x8] sm:$0x1f] %vm7888, %v7993
    %8098 = vst.msk [vmem:[%s3 + $0x10] sm:$0xff] %vm7886, %v7994
    %8099 = vst.msk [vmem:[%s3 + $0x18] sm:$0x1f] %vm7888, %v7995
    %8100 = vst.msk [vmem:[%s3 + $0x20] sm:$0xff] %vm7886, %v7996
    %8101 = vst.msk [vmem:[%s3 + $0x28] sm:$0x1f] %vm7888, %v7997
    %8102 = vst.msk [vmem:[%s3 + $0x30] sm:$0xff] %vm7886, %v7998
    %8103 = vst.msk [vmem:[%s3 + $0x38] sm:$0x1f] %vm7888, %v7999
    %8104 = vst.msk [vmem:[%s3 + $0x40] sm:$0xff] %vm7886, %v8000
    %8105 = vst.msk [vmem:[%s3 + $0x48] sm:$0x1f] %vm7888, %v8001
    %8106 = vst.msk [vmem:[%s3 + $0x50] sm:$0xff] %vm7886, %v8002
    %8107 = vst.msk [vmem:[%s3 + $0x58] sm:$0x1f] %vm7888, %v8003
    %8108 = vst.msk [vmem:[%s3 + $0x60] sm:$0xff] %vm7886, %v8004
    %8109 = vst.msk [vmem:[%s3 + $0x68] sm:$0x1f] %vm7888, %v8005
    %8110 = vst.msk [vmem:[%s3 + $0x70] sm:$0xff] %vm7886, %v8006
    %8111 = vst.msk [vmem:[%s3 + $0x78] sm:$0x1f] %vm7888, %v8007
    %8112 = vst.msk [vmem:[%s3 + $0x80] sm:$0xff] %vm7886, %v8008
    %8113 = vst.msk [vmem:[%s3 + $0x88] sm:$0x1f] %vm7888, %v8009
    %8114 = vst.msk [vmem:[%s3 + $0x90] sm:$0xff] %vm7886, %v8010
    %8115 = vst.msk [vmem:[%s3 + $0x98] sm:$0x1f] %vm7888, %v8011
    %8116 = vst.msk [vmem:[%s3 + $0xa0] sm:$0xff] %vm7886, %v8012
    %8117 = vst.msk [vmem:[%s3 + $0xa8] sm:$0x1f] %vm7888, %v8013
    %8118 = vst.msk [vmem:[%s3 + $0xb0] sm:$0xff] %vm7886, %v8014
    %8119 = vst.msk [vmem:[%s3 + $0xb8] sm:$0x1f] %vm7888, %v8015
    %8120 = vst.msk [vmem:[%s3 + $0xc0] sm:$0xff] %vm7886, %v8016
    %8121 = vst.msk [vmem:[%s3 + $0xc8] sm:$0x1f] %vm7888, %v8017
    %8122 = vst.msk [vmem:[%s3 + $0xd0] sm:$0xff] %vm7886, %v8018
    %8123 = vst.msk [vmem:[%s3 + $0xd8] sm:$0x1f] %vm7888, %v8019
    %8124 = vst.msk [vmem:[%s3 + $0xe0] sm:$0xff] %vm7886, %v8020
    %8125 = vst.msk [vmem:[%s3 + $0xe8] sm:$0x1f] %vm7888, %v8021
    %8126 = vst.msk [vmem:[%s3 + $0xf0] sm:$0xff] %vm7886, %v8022
    %8127 = vst.msk [vmem:[%s3 + $0xf8] sm:$0x1f] %vm7888, %v8023
    %8128 = vst.msk [vmem:[%s3 + $0x100] sm:$0xff] %vm7886, %v8024
    %8129 = vst.msk [vmem:[%s3 + $0x108] sm:$0x1f] %vm7888, %v8025
    %8130 = vst.msk [vmem:[%s3 + $0x110] sm:$0xff] %vm7886, %v8026
    %8131 = vst.msk [vmem:[%s3 + $0x118] sm:$0x1f] %vm7888, %v8027
    %8132 = vst.msk [vmem:[%s3 + $0x120] sm:$0xff] %vm7886, %v8028
    %8133 = vst.msk [vmem:[%s3 + $0x128] sm:$0x1f] %vm7888, %v8029
    %8134 = vst.msk [vmem:[%s3 + $0x130] sm:$0xff] %vm7886, %v8030
    %8135 = vst.msk [vmem:[%s3 + $0x138] sm:$0x1f] %vm7888, %v8031
    %8136 = vst.msk [vmem:[%s3 + $0x140] sm:$0xff] %vm7886, %v8032
    %8137 = vst.msk [vmem:[%s3 + $0x148] sm:$0x1f] %vm7888, %v8033
    %8138 = vst.msk [vmem:[%s3 + $0x150] sm:$0xff] %vm7886, %v8034
    %8139 = vst.msk [vmem:[%s3 + $0x158] sm:$0x1f] %vm7888, %v8035
    %8140 = vst.msk [vmem:[%s3 + $0x160] sm:$0xff] %vm7886, %v8036
    %8141 = vst.msk [vmem:[%s3 + $0x168] sm:$0x1f] %vm7888, %v8037
    %8142 = vst.msk [vmem:[%s3 + $0x170] sm:$0xff] %vm7886, %v8038
    %8143 = vst.msk [vmem:[%s3 + $0x178] sm:$0x1f] %vm7888, %v8039
    %8144 = vst.msk [vmem:[%s3 + $0x180] sm:$0xff] %vm7886, %v8040
    %8145 = vst.msk [vmem:[%s3 + $0x188] sm:$0x1f] %vm7888, %v8041
    %8146 = vst.msk [vmem:[%s3 + $0x190] sm:$0xff] %vm7886, %v8042
    %8147 = vst.msk [vmem:[%s3 + $0x198] sm:$0x1f] %vm7888, %v8043
    %8148 = vst.msk [vmem:[%s3 + $0x1a0] sm:$0xff] %vm7886, %v8044
    %8149 = vst.msk [vmem:[%s3 + $0x1a8] sm:$0x1f] %vm7888, %v8045
    %8150 = vst.msk [vmem:[%s3 + $0x1b0] sm:$0xff] %vm7886, %v8046
    %8151 = vst.msk [vmem:[%s3 + $0x1b8] sm:$0x1f] %vm7888, %v8047
    %8152 = vst.msk [vmem:[%s3 + $0x1c0] sm:$0xff] %vm7886, %v8048
    %8153 = vst.msk [vmem:[%s3 + $0x1c8] sm:$0x1f] %vm7888, %v8049
    %8154 = vst.msk [vmem:[%s3 + $0x1d0] sm:$0xff] %vm7886, %v8050
    %8155 = vst.msk [vmem:[%s3 + $0x1d8] sm:$0x1f] %vm7888, %v8051
    %8156 = vst.msk [vmem:[%s3 + $0x1e0] sm:$0xff] %vm7886, %v8052
    %8157 = vst.msk [vmem:[%s3 + $0x1e8] sm:$0x1f] %vm7888, %v8053
    %8158 = vst.msk [vmem:[%s3 + $0x1f0] sm:$0xff] %vm7886, %v8054
    %8159 = vst.msk [vmem:[%s3 + $0x1f8] sm:$0x1f] %vm7888, %v8055
    %8160 = vst.msk [vmem:[%s3 + $0x200] sm:$0xff] %vm7886, %v8056
    %8161 = vst.msk [vmem:[%s3 + $0x208] sm:$0x1f] %vm7888, %v8057
    %8162 = vst.msk [vmem:[%s3 + $0x210] sm:$0xff] %vm7886, %v8058
    %8163 = vst.msk [vmem:[%s3 + $0x218] sm:$0x1f] %vm7888, %v8059
    %8164 = vst.msk [vmem:[%s3 + $0x220] sm:$0xff] %vm7886, %v8060
    %8165 = vst.msk [vmem:[%s3 + $0x228] sm:$0x1f] %vm7888, %v8061
    %8166 = vst.msk [vmem:[%s3 + $0x230] sm:$0xff] %vm7886, %v8062
    %8167 = vst.msk [vmem:[%s3 + $0x238] sm:$0x1f] %vm7888, %v8063
    %8168 = vst.msk [vmem:[%s3 + $0x240] sm:$0xff] %vm7886, %v8064
    %8169 = vst.msk [vmem:[%s3 + $0x248] sm:$0x1f] %vm7888, %v8065
    %8170 = vst.msk [vmem:[%s3 + $0x250] sm:$0xff] %vm7886, %v8066
    %8171 = vst.msk [vmem:[%s3 + $0x258] sm:$0x1f] %vm7888, %v8067
    %8172 = vst.msk [vmem:[%s3 + $0x260] sm:$0xff] %vm7886, %v8068
    %8173 = vst.msk [vmem:[%s3 + $0x268] sm:$0x1f] %vm7888, %v8069
    %8174 = vst.msk [vmem:[%s3 + $0x270] sm:$0xff] %vm7886, %v8070
    %8175 = vst.msk [vmem:[%s3 + $0x278] sm:$0x1f] %vm7888, %v8071
    %8176 = vst.msk [vmem:[%s3 + $0x280] sm:$0xff] %vm7886, %v8072
    %8177 = vst.msk [vmem:[%s3 + $0x288] sm:$0x1f] %vm7888, %v8073
    %8178 = vst.msk [vmem:[%s3 + $0x290] sm:$0xff] %vm7886, %v8074
    %8179 = vst.msk [vmem:[%s3 + $0x298] sm:$0x1f] %vm7888, %v8075
    %8180 = vst.msk [vmem:[%s3 + $0x2a0] sm:$0xff] %vm7886, %v8076
    %8181 = vst.msk [vmem:[%s3 + $0x2a8] sm:$0x1f] %vm7888, %v8077
    %8182 = vst.msk [vmem:[%s3 + $0x2b0] sm:$0xff] %vm7886, %v8078
    %8183 = vst.msk [vmem:[%s3 + $0x2b8] sm:$0x1f] %vm7888, %v8079
    %8184 = vst.msk [vmem:[%s3 + $0x2c0] sm:$0xff] %vm7886, %v8080
    %8185 = vst.msk [vmem:[%s3 + $0x2c8] sm:$0x1f] %vm7888, %v8081
    %8186 = vst.msk [vmem:[%s3 + $0x2d0] sm:$0xff] %vm7886, %v8082
    %8187 = vst.msk [vmem:[%s3 + $0x2d8] sm:$0x1f] %vm7888, %v8083
    %8188 = vst.msk [vmem:[%s3 + $0x2e0] sm:$0xff] %vm7886, %v8084
    %8189 = vst.msk [vmem:[%s3 + $0x2e8] sm:$0x1f] %vm7888, %v8085
    %8190 = vst.msk [vmem:[%s3 + $0x2f0] sm:$0xff] %vm7886, %v8086
    %8191 = vst.msk [vmem:[%s3 + $0x2f8] sm:$0x1f] %vm7888, %v8087
    %8192 = vst.msk [vmem:[%s3 + $0x300] sm:$0xff] %vm7886, %v8088
    %8193 = vst.msk [vmem:[%s3 + $0x308] sm:$0x1f] %vm7888, %v8089
    %8194 = vst.msk [vmem:[%s3 + $0x310] sm:$0xff] %vm7886, %v8090
    %8195 = vst.msk [vmem:[%s3 + $0x318] sm:$0x1f] %vm7888, %v8091
    %8196 = vst.msk [vmem:[%s3 + $0x320] sm:$0xff] %vm7886, %v8092
    %8197 = vst.msk [vmem:[%s3 + $0x328] sm:$0x1f] %vm7888, %v8093
    %8198 = vst.msk [vmem:[%s3 + $0x330] sm:$0xff] %vm7886, %v8094
    %8199 = vst.msk [vmem:[%s3 + $0x338] sm:$0x1f] %vm7888, %v8095
    %v8200 = vmax.f32 %v7992, %v7994
    %v8201 = vmax.f32 %v7993, %v7995
    %v8202 = vmax.f32 %v8018, %v8020
    %v8203 = vmax.f32 %v8019, %v8021
    %v8204 = vmax.f32 %v8044, %v8046
    %v8205 = vmax.f32 %v8045, %v8047
    %v8206 = vmax.f32 %v8070, %v8072
    %v8207 = vmax.f32 %v8071, %v8073
    %v8208 = vmax.f32 %v8200, %v7996
    %v8209 = vmax.f32 %v8201, %v7997
    %v8210 = vmax.f32 %v8202, %v8022
    %v8211 = vmax.f32 %v8203, %v8023
    %v8212 = vmax.f32 %v8204, %v8048
    %v8213 = vmax.f32 %v8205, %v8049
    %v8214 = vmax.f32 %v8206, %v8074
    %v8215 = vmax.f32 %v8207, %v8075
    %v8216 = vmax.f32 %v8208, %v7998
    %v8217 = vmax.f32 %v8209, %v7999
    %v8218 = vmax.f32 %v8210, %v8024
    %v8219 = vmax.f32 %v8211, %v8025
    %v8220 = vmax.f32 %v8212, %v8050
    %v8221 = vmax.f32 %v8213, %v8051
    %v8222 = vmax.f32 %v8214, %v8076
    %v8223 = vmax.f32 %v8215, %v8077
    %v8224 = vmax.f32 %v8000, %v8002
    %v8225 = vmax.f32 %v8001, %v8003
    %v8226 = vmax.f32 %v8026, %v8028
    %v8227 = vmax.f32 %v8027, %v8029
    %v8228 = vmax.f32 %v8052, %v8054
    %v8229 = vmax.f32 %v8053, %v8055
    %v8230 = vmax.f32 %v8078, %v8080
    %v8231 = vmax.f32 %v8079, %v8081
    %v8232 = vmax.f32 %v8224, %v8004
    %v8233 = vmax.f32 %v8225, %v8005
    %v8234 = vmax.f32 %v8226, %v8030
    %v8235 = vmax.f32 %v8227, %v8031
    %v8236 = vmax.f32 %v8228, %v8056
    %v8237 = vmax.f32 %v8229, %v8057
    %v8238 = vmax.f32 %v8230, %v8082
    %v8239 = vmax.f32 %v8231, %v8083
    %v8240 = vmax.f32 %v8232, %v8006
    %v8241 = vmax.f32 %v8233, %v8007
    %v8242 = vmax.f32 %v8234, %v8032
    %v8243 = vmax.f32 %v8235, %v8033
    %v8244 = vmax.f32 %v8236, %v8058
    %v8245 = vmax.f32 %v8237, %v8059
    %v8246 = vmax.f32 %v8238, %v8084
    %v8247 = vmax.f32 %v8239, %v8085
    %v8248 = vmax.f32 %v8008, %v8010
    %v8249 = vmax.f32 %v8009, %v8011
    %v8250 = vmax.f32 %v8034, %v8036
    %v8251 = vmax.f32 %v8035, %v8037
    %v8252 = vmax.f32 %v8060, %v8062
    %v8253 = vmax.f32 %v8061, %v8063
    %v8254 = vmax.f32 %v8086, %v8088
    %v8255 = vmax.f32 %v8087, %v8089
    %v8256 = vmax.f32 %v8248, %v8012
    %v8257 = vmax.f32 %v8249, %v8013
    %v8258 = vmax.f32 %v8250, %v8038
    %v8259 = vmax.f32 %v8251, %v8039
    %v8260 = vmax.f32 %v8252, %v8064
    %v8261 = vmax.f32 %v8253, %v8065
    %v8262 = vmax.f32 %v8254, %v8090
    %v8263 = vmax.f32 %v8255, %v8091
    %v8264 = vmax.f32 %v8256, %v8014
    %v8265 = vmax.f32 %v8257, %v8015
    %v8266 = vmax.f32 %v8258, %v8040
    %v8267 = vmax.f32 %v8259, %v8041
    %v8268 = vmax.f32 %v8260, %v8066
    %v8269 = vmax.f32 %v8261, %v8067
    %v8270 = vmax.f32 %v8262, %v8092
    %v8271 = vmax.f32 %v8263, %v8093
    %vm8272 = vcmask 11264
    %v8273 = vsel %vm8272, %v8216, -inf
    %v8274 = vrot.slane %v8273, 4
    %v8275 = vmax.f32 %v8273, %v8274
    %v8276 = vrot.slane %v8275, 2
    %v8277 = vmax.f32 %v8275, %v8276
    %v8278 = vrot.slane %v8277, 1
    %v8279 = vmax.f32 %v8277, %v8278
    %v8280 = vsel %vm8272, %v8240, -inf
    %v8281 = vrot.slane %v8280, 4
    %v8282 = vmax.f32 %v8280, %v8281
    %v8283 = vrot.slane %v8282, 2
    %v8284 = vmax.f32 %v8282, %v8283
    %v8285 = vrot.slane %v8284, 1
    %v8286 = vmax.f32 %v8284, %v8285
    %v8287 = vsel %vm8272, %v8264, -inf
    %v8288 = vrot.slane %v8287, 4
    %v8289 = vmax.f32 %v8287, %v8288
    %v8290 = vrot.slane %v8289, 2
    %v8291 = vmax.f32 %v8289, %v8290
    %v8292 = vrot.slane %v8291, 1
    %v8293 = vmax.f32 %v8291, %v8292
    %v8294 = vsel %vm8272, %v8218, -inf
    %v8295 = vrot.slane %v8294, 4
    %v8296 = vmax.f32 %v8294, %v8295
    %v8297 = vrot.slane %v8296, 2
    %v8298 = vmax.f32 %v8296, %v8297
    %v8299 = vrot.slane %v8298, 1
    %v8300 = vmax.f32 %v8298, %v8299
    %v8301 = vsel %vm8272, %v8242, -inf
    %v8302 = vrot.slane %v8301, 4
    %v8303 = vmax.f32 %v8301, %v8302
    %v8304 = vrot.slane %v8303, 2
    %v8305 = vmax.f32 %v8303, %v8304
    %v8306 = vrot.slane %v8305, 1
    %v8307 = vmax.f32 %v8305, %v8306
    %v8308 = vsel %vm8272, %v8266, -inf
    %v8309 = vrot.slane %v8308, 4
    %v8310 = vmax.f32 %v8308, %v8309
    %v8311 = vrot.slane %v8310, 2
    %v8312 = vmax.f32 %v8310, %v8311
    %v8313 = vrot.slane %v8312, 1
    %v8314 = vmax.f32 %v8312, %v8313
    %v8315 = vsel %vm8272, %v8220, -inf
    %v8316 = vrot.slane %v8315, 4
    %v8317 = vmax.f32 %v8315, %v8316
    %v8318 = vrot.slane %v8317, 2
    %v8319 = vmax.f32 %v8317, %v8318
    %v8320 = vrot.slane %v8319, 1
    %v8321 = vmax.f32 %v8319, %v8320
    %v8322 = vsel %vm8272, %v8244, -inf
    %v8323 = vrot.slane %v8322, 4
    %v8324 = vmax.f32 %v8322, %v8323
    %v8325 = vrot.slane %v8324, 2
    %v8326 = vmax.f32 %v8324, %v8325
    %v8327 = vrot.slane %v8326, 1
    %v8328 = vmax.f32 %v8326, %v8327
    %v8329 = vsel %vm8272, %v8268, -inf
    %v8330 = vrot.slane %v8329, 4
    %v8331 = vmax.f32 %v8329, %v8330
    %v8332 = vrot.slane %v8331, 2
    %v8333 = vmax.f32 %v8331, %v8332
    %v8334 = vrot.slane %v8333, 1
    %v8335 = vmax.f32 %v8333, %v8334
    %v8336 = vsel %vm8272, %v8222, -inf
    %v8337 = vrot.slane %v8336, 4
    %v8338 = vmax.f32 %v8336, %v8337
    %v8339 = vrot.slane %v8338, 2
    %v8340 = vmax.f32 %v8338, %v8339
    %v8341 = vrot.slane %v8340, 1
    %v8342 = vmax.f32 %v8340, %v8341
    %v8343 = vsel %vm8272, %v8246, -inf
    %v8344 = vrot.slane %v8343, 4
    %v8345 = vmax.f32 %v8343, %v8344
    %v8346 = vrot.slane %v8345, 2
    %v8347 = vmax.f32 %v8345, %v8346
    %v8348 = vrot.slane %v8347, 1
    %v8349 = vmax.f32 %v8347, %v8348
    %v8350 = vsel %vm8272, %v8270, -inf
    %v8351 = vrot.slane %v8350, 4
    %v8352 = vmax.f32 %v8350, %v8351
    %v8353 = vrot.slane %v8352, 2
    %v8354 = vmax.f32 %v8352, %v8353
    %v8355 = vrot.slane %v8354, 1
    %v8356 = vmax.f32 %v8354, %v8355
    %vm8357 = vcmask 8192
    %8358 = vst.msk [vmem:[%s4] sm:$0x1] %vm8357, %v8279
    %8359 = vst.msk [vmem:[%s4 + $0x4] sm:$0x1] %vm8357, %v8286
    %8360 = vst.msk [vmem:[%s4 + $0x8] sm:$0x1] %vm8357, %v8293
    %8361 = vst.msk [vmem:[%s4 + $0xc] sm:$0x1] %vm8357, %v8300
    %8362 = vst.msk [vmem:[%s4 + $0x10] sm:$0x1] %vm8357, %v8307
    %8363 = vst.msk [vmem:[%s4 + $0x14] sm:$0x1] %vm8357, %v8314
    %8364 = vst.msk [vmem:[%s4 + $0x18] sm:$0x1] %vm8357, %v8321
    %8365 = vst.msk [vmem:[%s4 + $0x1c] sm:$0x1] %vm8357, %v8328
    %8366 = vst.msk [vmem:[%s4 + $0x20] sm:$0x1] %vm8357, %v8335
    %8367 = vst.msk [vmem:[%s4 + $0x24] sm:$0x1] %vm8357, %v8342
    %8368 = vst.msk [vmem:[%s4 + $0x28] sm:$0x1] %vm8357, %v8349
    %8369 = vst.msk [vmem:[%s4 + $0x2c] sm:$0x1] %vm8357, %v8356
    %vm8370 = vcmask 15364
    %v8371 = vsel %vm8370, %v8216, -inf
    %v8372 = vrot.slane %v8371, 4
    %v8373 = vmax.f32 %v8371, %v8372
    %v8374 = vrot.slane %v8373, 2
    %v8375 = vmax.f32 %v8373, %v8374
    %v8376 = vrot.slane %v8375, 1
    %v8377 = vmax.f32 %v8375, %v8376
    %v8378 = vsel %vm8370, %v8240, -inf
    %v8379 = vrot.slane %v8378, 4
    %v8380 = vmax.f32 %v8378, %v8379
    %v8381 = vrot.slane %v8380, 2
    %v8382 = vmax.f32 %v8380, %v8381
    %v8383 = vrot.slane %v8382, 1
    %v8384 = vmax.f32 %v8382, %v8383
    %v8385 = vsel %vm8370, %v8264, -inf
    %v8386 = vrot.slane %v8385, 4
    %v8387 = vmax.f32 %v8385, %v8386
    %v8388 = vrot.slane %v8387, 2
    %v8389 = vmax.f32 %v8387, %v8388
    %v8390 = vrot.slane %v8389, 1
    %v8391 = vmax.f32 %v8389, %v8390
    %v8392 = vsel %vm8370, %v8218, -inf
    %v8393 = vrot.slane %v8392, 4
    %v8394 = vmax.f32 %v8392, %v8393
    %v8395 = vrot.slane %v8394, 2
    %v8396 = vmax.f32 %v8394, %v8395
    %v8397 = vrot.slane %v8396, 1
    %v8398 = vmax.f32 %v8396, %v8397
    %v8399 = vsel %vm8370, %v8242, -inf
    %v8400 = vrot.slane %v8399, 4
    %v8401 = vmax.f32 %v8399, %v8400
    %v8402 = vrot.slane %v8401, 2
    %v8403 = vmax.f32 %v8401, %v8402
    %v8404 = vrot.slane %v8403, 1
    %v8405 = vmax.f32 %v8403, %v8404
    %v8406 = vsel %vm8370, %v8266, -inf
    %v8407 = vrot.slane %v8406, 4
    %v8408 = vmax.f32 %v8406, %v8407
    %v8409 = vrot.slane %v8408, 2
    %v8410 = vmax.f32 %v8408, %v8409
    %v8411 = vrot.slane %v8410, 1
    %v8412 = vmax.f32 %v8410, %v8411
    %v8413 = vsel %vm8370, %v8220, -inf
    %v8414 = vrot.slane %v8413, 4
    %v8415 = vmax.f32 %v8413, %v8414
    %v8416 = vrot.slane %v8415, 2
    %v8417 = vmax.f32 %v8415, %v8416
    %v8418 = vrot.slane %v8417, 1
    %v8419 = vmax.f32 %v8417, %v8418
    %v8420 = vsel %vm8370, %v8244, -inf
    %v8421 = vrot.slane %v8420, 4
    %v8422 = vmax.f32 %v8420, %v8421
    %v8423 = vrot.slane %v8422, 2
    %v8424 = vmax.f32 %v8422, %v8423
    %v8425 = vrot.slane %v8424, 1
    %v8426 = vmax.f32 %v8424, %v8425
    %v8427 = vsel %vm8370, %v8268, -inf
    %v8428 = vrot.slane %v8427, 4
    %v8429 = vmax.f32 %v8427, %v8428
    %v8430 = vrot.slane %v8429, 2
    %v8431 = vmax.f32 %v8429, %v8430
    %v8432 = vrot.slane %v8431, 1
    %v8433 = vmax.f32 %v8431, %v8432
    %v8434 = vsel %vm8370, %v8222, -inf
    %v8435 = vrot.slane %v8434, 4
    %v8436 = vmax.f32 %v8434, %v8435
    %v8437 = vrot.slane %v8436, 2
    %v8438 = vmax.f32 %v8436, %v8437
    %v8439 = vrot.slane %v8438, 1
    %v8440 = vmax.f32 %v8438, %v8439
    %v8441 = vsel %vm8370, %v8246, -inf
    %v8442 = vrot.slane %v8441, 4
    %v8443 = vmax.f32 %v8441, %v8442
    %v8444 = vrot.slane %v8443, 2
    %v8445 = vmax.f32 %v8443, %v8444
    %v8446 = vrot.slane %v8445, 1
    %v8447 = vmax.f32 %v8445, %v8446
    %v8448 = vsel %vm8370, %v8270, -inf
    %v8449 = vrot.slane %v8448, 4
    %v8450 = vmax.f32 %v8448, %v8449
    %v8451 = vrot.slane %v8450, 2
    %v8452 = vmax.f32 %v8450, %v8451
    %v8453 = vrot.slane %v8452, 1
    %v8454 = vmax.f32 %v8452, %v8453
    %8455 = vst.msk [vmem:[%s4 + $0x1] sm:$0x1] %vm8357, %v8377
    %8456 = vst.msk [vmem:[%s4 + $0x5] sm:$0x1] %vm8357, %v8384
    %8457 = vst.msk [vmem:[%s4 + $0x9] sm:$0x1] %vm8357, %v8391
    %8458 = vst.msk [vmem:[%s4 + $0xd] sm:$0x1] %vm8357, %v8398
    %8459 = vst.msk [vmem:[%s4 + $0x11] sm:$0x1] %vm8357, %v8405
    %8460 = vst.msk [vmem:[%s4 + $0x15] sm:$0x1] %vm8357, %v8412
    %8461 = vst.msk [vmem:[%s4 + $0x19] sm:$0x1] %vm8357, %v8419
    %8462 = vst.msk [vmem:[%s4 + $0x1d] sm:$0x1] %vm8357, %v8426
    %8463 = vst.msk [vmem:[%s4 + $0x21] sm:$0x1] %vm8357, %v8433
    %8464 = vst.msk [vmem:[%s4 + $0x25] sm:$0x1] %vm8357, %v8440
    %8465 = vst.msk [vmem:[%s4 + $0x29] sm:$0x1] %vm8357, %v8447
    %8466 = vst.msk [vmem:[%s4 + $0x2d] sm:$0x1] %vm8357, %v8454
    %v8467 = vsel %vm8272, %v8217, -inf
    %v8468 = vrot.slane %v8467, 4
    %v8469 = vmax.f32 %v8467, %v8468
    %v8470 = vrot.slane %v8469, 2
    %v8471 = vmax.f32 %v8469, %v8470
    %v8472 = vrot.slane %v8471, 1
    %v8473 = vmax.f32 %v8471, %v8472
    %v8474 = vsel %vm8272, %v8241, -inf
    %v8475 = vrot.slane %v8474, 4
    %v8476 = vmax.f32 %v8474, %v8475
    %v8477 = vrot.slane %v8476, 2
    %v8478 = vmax.f32 %v8476, %v8477
    %v8479 = vrot.slane %v8478, 1
    %v8480 = vmax.f32 %v8478, %v8479
    %v8481 = vsel %vm8272, %v8265, -inf
    %v8482 = vrot.slane %v8481, 4
    %v8483 = vmax.f32 %v8481, %v8482
    %v8484 = vrot.slane %v8483, 2
    %v8485 = vmax.f32 %v8483, %v8484
    %v8486 = vrot.slane %v8485, 1
    %v8487 = vmax.f32 %v8485, %v8486
    %v8488 = vsel %vm8272, %v8219, -inf
    %v8489 = vrot.slane %v8488, 4
    %v8490 = vmax.f32 %v8488, %v8489
    %v8491 = vrot.slane %v8490, 2
    %v8492 = vmax.f32 %v8490, %v8491
    %v8493 = vrot.slane %v8492, 1
    %v8494 = vmax.f32 %v8492, %v8493
    %v8495 = vsel %vm8272, %v8243, -inf
    %v8496 = vrot.slane %v8495, 4
    %v8497 = vmax.f32 %v8495, %v8496
    %v8498 = vrot.slane %v8497, 2
    %v8499 = vmax.f32 %v8497, %v8498
    %v8500 = vrot.slane %v8499, 1
    %v8501 = vmax.f32 %v8499, %v8500
    %v8502 = vsel %vm8272, %v8267, -inf
    %v8503 = vrot.slane %v8502, 4
    %v8504 = vmax.f32 %v8502, %v8503
    %v8505 = vrot.slane %v8504, 2
    %v8506 = vmax.f32 %v8504, %v8505
    %v8507 = vrot.slane %v8506, 1
    %v8508 = vmax.f32 %v8506, %v8507
    %v8509 = vsel %vm8272, %v8221, -inf
    %v8510 = vrot.slane %v8509, 4
    %v8511 = vmax.f32 %v8509, %v8510
    %v8512 = vrot.slane %v8511, 2
    %v8513 = vmax.f32 %v8511, %v8512
    %v8514 = vrot.slane %v8513, 1
    %v8515 = vmax.f32 %v8513, %v8514
    %v8516 = vsel %vm8272, %v8245, -inf
    %v8517 = vrot.slane %v8516, 4
    %v8518 = vmax.f32 %v8516, %v8517
    %v8519 = vrot.slane %v8518, 2
    %v8520 = vmax.f32 %v8518, %v8519
    %v8521 = vrot.slane %v8520, 1
    %v8522 = vmax.f32 %v8520, %v8521
    %v8523 = vsel %vm8272, %v8269, -inf
    %v8524 = vrot.slane %v8523, 4
    %v8525 = vmax.f32 %v8523, %v8524
    %v8526 = vrot.slane %v8525, 2
    %v8527 = vmax.f32 %v8525, %v8526
    %v8528 = vrot.slane %v8527, 1
    %v8529 = vmax.f32 %v8527, %v8528
    %v8530 = vsel %vm8272, %v8223, -inf
    %v8531 = vrot.slane %v8530, 4
    %v8532 = vmax.f32 %v8530, %v8531
    %v8533 = vrot.slane %v8532, 2
    %v8534 = vmax.f32 %v8532, %v8533
    %v8535 = vrot.slane %v8534, 1
    %v8536 = vmax.f32 %v8534, %v8535
    %v8537 = vsel %vm8272, %v8247, -inf
    %v8538 = vrot.slane %v8537, 4
    %v8539 = vmax.f32 %v8537, %v8538
    %v8540 = vrot.slane %v8539, 2
    %v8541 = vmax.f32 %v8539, %v8540
    %v8542 = vrot.slane %v8541, 1
    %v8543 = vmax.f32 %v8541, %v8542
    %v8544 = vsel %vm8272, %v8271, -inf
    %v8545 = vrot.slane %v8544, 4
    %v8546 = vmax.f32 %v8544, %v8545
    %v8547 = vrot.slane %v8546, 2
    %v8548 = vmax.f32 %v8546, %v8547
    %v8549 = vrot.slane %v8548, 1
    %v8550 = vmax.f32 %v8548, %v8549
    %8551 = vst.msk [vmem:[%s4 + $0x2] sm:$0x1] %vm8357, %v8473
    %8552 = vst.msk [vmem:[%s4 + $0x6] sm:$0x1] %vm8357, %v8480
    %8553 = vst.msk [vmem:[%s4 + $0xa] sm:$0x1] %vm8357, %v8487
    %8554 = vst.msk [vmem:[%s4 + $0xe] sm:$0x1] %vm8357, %v8494
    %8555 = vst.msk [vmem:[%s4 + $0x12] sm:$0x1] %vm8357, %v8501
    %8556 = vst.msk [vmem:[%s4 + $0x16] sm:$0x1] %vm8357, %v8508
    %8557 = vst.msk [vmem:[%s4 + $0x1a] sm:$0x1] %vm8357, %v8515
    %8558 = vst.msk [vmem:[%s4 + $0x1e] sm:$0x1] %vm8357, %v8522
    %8559 = vst.msk [vmem:[%s4 + $0x22] sm:$0x1] %vm8357, %v8529
    %8560 = vst.msk [vmem:[%s4 + $0x26] sm:$0x1] %vm8357, %v8536
    %8561 = vst.msk [vmem:[%s4 + $0x2a] sm:$0x1] %vm8357, %v8543
    %8562 = vst.msk [vmem:[%s4 + $0x2e] sm:$0x1] %vm8357, %v8550
    // Predicated region
    $region14: #{tpu_custom_call.1} parent=1 // pred_check
      _
    $region15: #{tpu_custom_call.1} parent=1 // pred_check_branch
      %8564 = sbr.rel (0) target = $region17
    $region16: #{tpu_custom_call.1} parent=1 // pred_region
      _
    $region17: #{tpu_custom_call.1} parent=1 // pred_fallthru
      _
    // Predicated region
    $region18: #{tpu_custom_call.1} parent=1 // pred_check
      _
    $region19: #{tpu_custom_call.1} parent=1 // pred_check_branch
      %8566 = sbr.rel (0) target = $region21
    $region20: #{tpu_custom_call.1} parent=1 // pred_region
      _
    $region21: #{tpu_custom_call.1} parent=1 // pred_fallthru
      _
    // Predicated region
    $region22: #{tpu_custom_call.1} parent=1 // pred_check
      _
    $region23: #{tpu_custom_call.1} parent=1 // pred_check_branch
      %8568 = sbr.rel (0) target = $region25
    $region24: #{tpu_custom_call.1} parent=1 // pred_region
      _
    $region25: #{tpu_custom_call.1} parent=1 // pred_fallthru
      _
    // Predicated region
    $region26: #{tpu_custom_call.1} parent=1 // pred_check
      _
    $region27: #{tpu_custom_call.1} parent=1 // pred_check_branch
      %8570 = sbr.rel (0) target = $region29
    $region28: #{tpu_custom_call.1} parent=1 // pred_region
      _
    $region29: #{tpu_custom_call.1} parent=1 // pred_fallthru
      _
    // Predicated region
    $region30: #{tpu_custom_call.1} parent=1 // pred_check
      _
    $region31: #{tpu_custom_call.1} parent=1 // pred_check_branch
      %8572 = sbr.rel (0) target = $region33
    $region32: #{tpu_custom_call.1} parent=1 // pred_region
      _
    $region33: #{tpu_custom_call.1} parent=1 // pred_fallthru
      _
    // Predicated region
    $region34: #{tpu_custom_call.1} parent=1 // pred_check
      _
    $region35: #{tpu_custom_call.1} parent=1 // pred_check_branch
      %8574 = sbr.rel (0) target = $region37
    $region36: #{tpu_custom_call.1} parent=1 // pred_region
      _
    $region37: #{tpu_custom_call.1} parent=1 // pred_fallthru
      _
    %8575 = vsyncpa [#allocation3], 1

</llo_original>
